<compile_context>
chip_gen: v7x
topology: tpu7x:2x2x1
jax: 0.10.0
libtpu: 0.0.40
codegen_flags: <defaults>
</compile_context>

<pallas_src>
import jax
import jax.numpy as jnp
from jax.experimental import pallas as pl
from jax.experimental.pallas import tpu as pltpu


def _cdiv(a, b):
    return -(-a // b)


def _round_up(n, m):
    return ((n + m - 1) // m) * m


def gene_distr_kernel(xy_ref, w1_ref, b1_ref, w2_ref, b2_ref, o_ref):
    # xy_ref : (TM, d_in)       bf16   (d_in = hidden + num_labels)
    # w1     : (d_in, L)        bf16
    # b1     : (1, L)           f32
    # w2     : (L, hidden_out)  bf16
    # b2     : (1, hidden_out)  f32
    # o_ref  : (TM, hidden_out) bf16
    # Layer 1: single fused matmul replaces torch.cat([x, y]) @ W1^T.
    h = jnp.dot(xy_ref[...], w1_ref[...], preferred_element_type=jnp.float32)
    h = h + b1_ref[...]
    # LeakyReLU (PyTorch default negative_slope = 0.01); max form saves a
    # VPU pass vs. where(h > 0, h, 0.01*h).
    h = jnp.maximum(h, 0.01 * h)
    # Layer 2 (bf16 MXU inputs, f32 accumulate) + ReLU.
    out = jnp.dot(h.astype(jnp.bfloat16), w2_ref[...],
                  preferred_element_type=jnp.float32)
    out = out + b2_ref[...]
    o_ref[...] = jnp.maximum(out, 0.0).astype(o_ref.dtype)


def fedadg_gene_distr_net(x, y, params, *, block_m=256, out_dtype=jnp.bfloat16,
                          vmem_limit_bytes=32 * 1024 * 1024):
    """x: (B, hidden_size), y: (B, num_labels) -> (B, hidden_size) in out_dtype."""
    w1, b1, w2, b2 = params["w1"], params["b1"], params["w2"], params["b2"]
    B = x.shape[0]
    d_in = w1.shape[0]
    latent = w1.shape[1]
    hidden_out = w2.shape[1]
    assert x.shape[1] + y.shape[1] == d_in

    # Cheap wrapper-side concat of the (B, 36)-ish conditioning input -> one
    # fused layer-1 dot inside the kernel.
    xy = jnp.concatenate([x, y], axis=1).astype(jnp.bfloat16)

    # Tile policy:
    #  * >= 2 grid steps once B >= 32 so v7x's two TensorCores both get work,
    #  * balance the tile to the batch so last-tile padding waste is < 16 rows,
    #  * cap at block_m rows so the (TM, 4096) f32 intermediate stays a few MB
    #    (256 rows -> ~4 MiB), comfortably inside v7x's 64 MiB VMEM.
    #    (On v6e/v5e with their 128 MiB VMEM, block_m=512 + a larger
    #     vmem_limit_bytes is a reasonable override for large batches.)
    n_tiles = max(_cdiv(B, block_m), 2 if B >= 32 else 1)
    tm = _round_up(_cdiv(B, n_tiles), 16)      # bf16 sublane packing
    Bp = tm * n_tiles
    xyp = jnp.pad(xy, ((0, Bp - B), (0, 0)))

    flops = 2 * Bp * (d_in * latent + latent * hidden_out)
    bytes_accessed = (
        2 * (d_in * latent + latent * hidden_out)          # bf16 weights
        + 4 * (latent + hidden_out)                        # f32 biases
        + 2 * Bp * d_in                                    # bf16 activations in
        + jnp.dtype(out_dtype).itemsize * Bp * hidden_out  # output writeback
    )

    out = pl.pallas_call(
        gene_distr_kernel,
        out_shape=jax.ShapeDtypeStruct((Bp, hidden_out), out_dtype),
        grid_spec=pltpu.PrefetchScalarGridSpec(
            num_scalar_prefetch=0,
            grid=(n_tiles,),
            in_specs=[
                # Activation tile: streamed / double-buffered over the batch.
                pl.BlockSpec((tm, d_in), lambda i: (i, 0)),
                # Weights + biases: constant index_map -> VMEM resident;
                # single-buffered so they aren't allocated twice.
                pl.BlockSpec((d_in, latent), lambda i: (0, 0),
                             pipeline_mode=pl.Buffered(1)),
                pl.BlockSpec((1, latent), lambda i: (0, 0),
                             pipeline_mode=pl.Buffered(1)),
                pl.BlockSpec((latent, hidden_out), lambda i: (0, 0),
                             pipeline_mode=pl.Buffered(1)),
                pl.BlockSpec((1, hidden_out), lambda i: (0, 0),
                             pipeline_mode=pl.Buffered(1)),
            ],
            out_specs=pl.BlockSpec((tm, hidden_out), lambda i: (i, 0)),
        ),
        compiler_params=pltpu.CompilerParams(
            dimension_semantics=("parallel",),      # megacore / v7x dual-TC
            vmem_limit_bytes=vmem_limit_bytes,
        ),
        cost_estimate=pl.CostEstimate(flops=flops, transcendentals=0,
                                      bytes_accessed=bytes_accessed),
    )(xyp, w1, b1, w2, b2)

    # Padded rows carry bias+activation garbage; slice them off here.
    return out[:B]


def init_params(key, num_labels, hidden_size, latent_size=4096):
    """Matches the module's init: xavier_uniform_(gain=0.5) on weights,
    PyTorch-default uniform biases. Weights stored as (fan_in, fan_out) == W^T
    in bf16; biases f32 (added post-accumulation)."""
    d_in = hidden_size + num_labels
    k1, k2, k3, k4 = jax.random.split(key, 4)

    def xavier_t(k, fan_in, fan_out, gain):
        bound = gain * (6.0 / (fan_in + fan_out)) ** 0.5
        return jax.random.uniform(k, (fan_in, fan_out), jnp.float32, -bound, bound)

    def bias(k, fan_in, fan_out):
        bound = 1.0 / (fan_in ** 0.5)
        return jax.random.uniform(k, (1, fan_out), jnp.float32, -bound, bound)

    return {
        "w1": xavier_t(k1, d_in, latent_size, 0.5).astype(jnp.bfloat16),
        "b1": bias(k2, d_in, latent_size),
        "w2": xavier_t(k3, latent_size, hidden_size, 0.5).astype(jnp.bfloat16),
        "b2": bias(k4, latent_size, hidden_size),
    }


if __name__ == "__main__":
    num_labels = 4
    hidden_size = 32
    batch = 2

    key = jax.random.PRNGKey(0)
    kp, kx, ky = jax.random.split(key, 3)

    params = init_params(kp, num_labels, hidden_size)
    x = jax.random.normal(kx, (batch, hidden_size), jnp.float32)
    # y: one-hot label conditioning vector, as in FedADG usage.
    y = jax.nn.one_hot(
        jax.random.randint(ky, (batch,), 0, num_labels), num_labels
    ).astype(jnp.float32)

    out = fedadg_gene_distr_net(x, y, params)
    jax.block_until_ready(out)

    # Pure-JAX reference with the same bf16-weight / f32-accumulate recipe.
    xy = jnp.concatenate([x, y], axis=1).astype(jnp.bfloat16)
    h = (jnp.dot(xy, params["w1"], preferred_element_type=jnp.float32)
         + params["b1"])
    h = jnp.maximum(h, 0.01 * h)
    ref = jnp.maximum(
        jnp.dot(h.astype(jnp.bfloat16), params["w2"],
                preferred_element_type=jnp.float32) + params["b2"],
        0.0,
    )

    assert out.shape == (batch, hidden_size)
    assert out.dtype == jnp.bfloat16
    err = float(jnp.max(jnp.abs(out.astype(jnp.float32) - ref)))
    assert jnp.allclose(out.astype(jnp.float32), ref, atol=2e-2, rtol=2e-2), err

    print("KERNEL_OK")
</pallas_src>

<mosaic_0001>
module attributes {stable_mosaic.version = 11 : i64} {
  func.func @gene_distr_kernel(%arg0: i32, %arg1: memref<16x36xbf16, #tpu.memory_space<vmem>>, %arg2: memref<36x4096xbf16, #tpu.memory_space<vmem>>, %arg3: memref<1x4096xf32, #tpu.memory_space<vmem>>, %arg4: memref<4096x32xbf16, #tpu.memory_space<vmem>>, %arg5: memref<1x32xf32, #tpu.memory_space<vmem>>, %arg6: memref<16x32xbf16, #tpu.memory_space<vmem>>) attributes {dimension_semantics = [#tpu.dimension_semantics<parallel>], iteration_bounds = array<i64: 1>, scalar_prefetch = 0 : i64, scratch_operands = 0 : i64, tpu.core_type = #tpu.core_type<tc>, window_params = [{transform_indices = @transform_0, window_bounds = array<i64: 16, 36>}, {pipeline_mode = #tpu.pipeline_mode<synchronous>, transform_indices = @transform_1, window_bounds = array<i64: 36, 4096>}, {pipeline_mode = #tpu.pipeline_mode<synchronous>, transform_indices = @transform_2, window_bounds = array<i64: 1, 4096>}, {pipeline_mode = #tpu.pipeline_mode<synchronous>, transform_indices = @transform_3, window_bounds = array<i64: 4096, 32>}, {pipeline_mode = #tpu.pipeline_mode<synchronous>, transform_indices = @transform_4, window_bounds = array<i64: 1, 32>}, {transform_indices = @transform_5, window_bounds = array<i64: 16, 32>}]} {
    %c0 = arith.constant 0 : index
    %c0_0 = arith.constant 0 : index
    %0 = vector.load %arg1[%c0, %c0_0] : memref<16x36xbf16, #tpu.memory_space<vmem>>, vector<16x36xbf16>
    %c0_1 = arith.constant 0 : index
    %c0_2 = arith.constant 0 : index
    %1 = vector.load %arg2[%c0_1, %c0_2] : memref<36x4096xbf16, #tpu.memory_space<vmem>>, vector<36x4096xbf16>
    %cst = arith.constant dense<0.000000e+00> : vector<16x4096xf32>
    %2 = tpu.matmul %0, %1, %cst {dimension_numbers = #tpu.dot_dimension_numbers<[1], [0], [0], [1], [0, 0, 1, 1], [], []>} : vector<16x36xbf16>, vector<36x4096xbf16>, vector<16x4096xf32> -> vector<16x4096xf32>
    %c0_3 = arith.constant 0 : index
    %c0_4 = arith.constant 0 : index
    %3 = vector.load %arg3[%c0_3, %c0_4] : memref<1x4096xf32, #tpu.memory_space<vmem>>, vector<1x4096xf32>
    %4 = vector.broadcast %3 : vector<1x4096xf32> to vector<16x4096xf32>
    %5 = arith.addf %2, %4 : vector<16x4096xf32>
    %cst_5 = arith.constant 0.00999999977 : f32
    %6 = vector.broadcast %cst_5 : f32 to vector<16x4096xf32>
    %7 = arith.mulf %6, %5 : vector<16x4096xf32>
    %8 = arith.maximumf %5, %7 : vector<16x4096xf32>
    %9 = arith.truncf %8 : vector<16x4096xf32> to vector<16x4096xbf16>
    %c0_6 = arith.constant 0 : index
    %c0_7 = arith.constant 0 : index
    %10 = vector.load %arg4[%c0_6, %c0_7] : memref<4096x32xbf16, #tpu.memory_space<vmem>>, vector<4096x32xbf16>
    %cst_8 = arith.constant dense<0.000000e+00> : vector<16x32xf32>
    %11 = tpu.matmul %9, %10, %cst_8 {dimension_numbers = #tpu.dot_dimension_numbers<[1], [0], [0], [1], [0, 0, 1, 1], [], []>} : vector<16x4096xbf16>, vector<4096x32xbf16>, vector<16x32xf32> -> vector<16x32xf32>
    %c0_9 = arith.constant 0 : index
    %c0_10 = arith.constant 0 : index
    %12 = vector.load %arg5[%c0_9, %c0_10] : memref<1x32xf32, #tpu.memory_space<vmem>>, vector<1x32xf32>
    %13 = vector.broadcast %12 : vector<1x32xf32> to vector<16x32xf32>
    %14 = arith.addf %11, %13 : vector<16x32xf32>
    %cst_11 = arith.constant 0.000000e+00 : f32
    %15 = vector.broadcast %cst_11 : f32 to vector<16x32xf32>
    %16 = arith.maximumf %14, %15 : vector<16x32xf32>
    %17 = arith.truncf %16 : vector<16x32xf32> to vector<16x32xbf16>
    %c0_12 = arith.constant 0 : index
    %c0_13 = arith.constant 0 : index
    %18 = vector.load %arg6[%c0_12, %c0_13] : memref<16x32xbf16, #tpu.memory_space<vmem>>, vector<16x32xbf16>
    tpu.vector_store %arg6[%c0_12, %c0_13], %17 {strides = array<i32>} : memref<16x32xbf16, #tpu.memory_space<vmem>>, vector<16x32xbf16>,
    return
  }
  func.func @transform_0(%arg0: i32) -> (i32, i32) {
    %c0_i32 = arith.constant 0 : i32
    %c0_i32_0 = arith.constant 0 : i32
    return %arg0, %c0_i32 : i32, i32
  }
  func.func @transform_1(%arg0: i32) -> (i32, i32) {
    %c0_i32 = arith.constant 0 : i32
    %c0_i32_0 = arith.constant 0 : i32
    %c0_i32_1 = arith.constant 0 : i32
    return %c0_i32, %c0_i32_0 : i32, i32
  }
  func.func @transform_2(%arg0: i32) -> (i32, i32) {
    %c0_i32 = arith.constant 0 : i32
    %c0_i32_0 = arith.constant 0 : i32
    %c0_i32_1 = arith.constant 0 : i32
    return %c0_i32, %c0_i32_0 : i32, i32
  }
  func.func @transform_3(%arg0: i32) -> (i32, i32) {
    %c0_i32 = arith.constant 0 : i32
    %c0_i32_0 = arith.constant 0 : i32
    %c0_i32_1 = arith.constant 0 : i32
    return %c0_i32, %c0_i32_0 : i32, i32
  }
  func.func @transform_4(%arg0: i32) -> (i32, i32) {
    %c0_i32 = arith.constant 0 : i32
    %c0_i32_0 = arith.constant 0 : i32
    %c0_i32_1 = arith.constant 0 : i32
    return %c0_i32, %c0_i32_0 : i32, i32
  }
  func.func @transform_5(%arg0: i32) -> (i32, i32) {
    %c0_i32 = arith.constant 0 : i32
    %c0_i32_0 = arith.constant 0 : i32
    return %arg0, %c0_i32 : i32, i32
  }
}

</mosaic_0001>

<llo_original>
// kernel: tpu_custom_call.1
$region0: #{tpu_custom_call.1}
  #allocation0 [shape = 'u32[]', space=smem, size = 0x4, offset = 0x4, fixed_abs, tag = 'smem constant byte address 0x4 - core index']
  #allocation1 [shape = 'u32[144,128]{1,0:T(1,128)}', space=vmem, size = 0x12000, scoped, tag = 'internal scratch']
  %s0 = inlined_call_operand.vmem [shape: bf16[16,36], index: 0, kind: input, shape index: {}]
  %s1 = inlined_call_operand.vmem [shape: bf16[36,4096], index: 1, kind: input, shape index: {}]
  %s2 = inlined_call_operand.vmem [shape: f32[1,4096], index: 2, kind: input, shape index: {}]
  %s3 = inlined_call_operand.vmem [shape: bf16[4096,32], index: 3, kind: input, shape index: {}]
  %s4 = inlined_call_operand.vmem [shape: f32[1,32], index: 4, kind: input, shape index: {}]
  %s5 = inlined_call_operand.hbm [shape: bf16[16,32], index: 5, kind: output, shape index: {}]
  %s6 = sld [smem:[#allocation0]]
  $region30: #{tpu_custom_call.1} parent=0
    _
  %s8 = ssub.s32 1, %s6
  %s9 = scalar_select 0, %s8, %s6
  $region1: #{tpu_custom_call.1} parent=0
    #allocation2 [shape = 'u8[4096]{0}', space=vmem, size = 0x1000, scoped, tag = 'output window, operand 0, single buffered']
    #allocation3 [shape = 's32[1]{0}', space=sflag, size = 0x4, scoped, tag = 'scoped memory for tpu_custom_call.1']
    %10 = vsyncpa [#allocation3], 0
    // Predicated region
    $region2: #{tpu_custom_call.1} parent=1 // pred_check
      _
    $region3: #{tpu_custom_call.1} parent=1 // pred_check_branch
      %12 = sbr.rel (0) target = $region5
    $region4: #{tpu_custom_call.1} parent=1 // pred_region
      _
    $region5: #{tpu_custom_call.1} parent=1 // pred_fallthru
      _
    // Predicated region
    $region6: #{tpu_custom_call.1} parent=1 // pred_check
      _
    $region7: #{tpu_custom_call.1} parent=1 // pred_check_branch
      %14 = sbr.rel (0) target = $region9
    $region8: #{tpu_custom_call.1} parent=1 // pred_region
      _
    $region9: #{tpu_custom_call.1} parent=1 // pred_fallthru
      _
    // Predicated region
    $region10: #{tpu_custom_call.1} parent=1 // pred_check
      _
    $region11: #{tpu_custom_call.1} parent=1 // pred_check_branch
      %16 = sbr.rel (0) target = $region13
    $region12: #{tpu_custom_call.1} parent=1 // pred_region
      _
    $region13: #{tpu_custom_call.1} parent=1 // pred_fallthru
      _
    // Predicated region
    $region14: #{tpu_custom_call.1} parent=1 // pred_check
      _
    $region15: #{tpu_custom_call.1} parent=1 // pred_check_branch
      %18 = sbr.rel (0) target = $region17
    $region16: #{tpu_custom_call.1} parent=1 // pred_region
      _
    $region17: #{tpu_custom_call.1} parent=1 // pred_fallthru
      _
    // Predicated region
    $region18: #{tpu_custom_call.1} parent=1 // pred_check
      _
    $region19: #{tpu_custom_call.1} parent=1 // pred_check_branch
      %20 = sbr.rel (0) target = $region21
    $region20: #{tpu_custom_call.1} parent=1 // pred_region
      _
    $region21: #{tpu_custom_call.1} parent=1 // pred_fallthru
      _
    %v22 = vld [vmem:[%s0] sm:$0xf]
    %v23 = vld [vmem:[%s0 + $0x4] sm:$0xf]
    %v24 = vld [vmem:[%s1] sm:$0xff]
    %v25 = vld [vmem:[%s1 + $0x8] sm:$0xff]
    %v26 = vld [vmem:[%s1 + $0x10] sm:$0xff]
    %v27 = vld [vmem:[%s1 + $0x18] sm:$0xff]
    %v28 = vld [vmem:[%s1 + $0x20] sm:$0xff]
    %v29 = vld [vmem:[%s1 + $0x28] sm:$0xff]
    %v30 = vld [vmem:[%s1 + $0x30] sm:$0xff]
    %v31 = vld [vmem:[%s1 + $0x38] sm:$0xff]
    %v32 = vld [vmem:[%s1 + $0x40] sm:$0xff]
    %v33 = vld [vmem:[%s1 + $0x48] sm:$0xff]
    %v34 = vld [vmem:[%s1 + $0x50] sm:$0xff]
    %v35 = vld [vmem:[%s1 + $0x58] sm:$0xff]
    %v36 = vld [vmem:[%s1 + $0x60] sm:$0xff]
    %v37 = vld [vmem:[%s1 + $0x68] sm:$0xff]
    %v38 = vld [vmem:[%s1 + $0x70] sm:$0xff]
    %v39 = vld [vmem:[%s1 + $0x78] sm:$0xff]
    %v40 = vld [vmem:[%s1 + $0x80] sm:$0xff]
    %v41 = vld [vmem:[%s1 + $0x88] sm:$0xff]
    %v42 = vld [vmem:[%s1 + $0x90] sm:$0xff]
    %v43 = vld [vmem:[%s1 + $0x98] sm:$0xff]
    %v44 = vld [vmem:[%s1 + $0xa0] sm:$0xff]
    %v45 = vld [vmem:[%s1 + $0xa8] sm:$0xff]
    %v46 = vld [vmem:[%s1 + $0xb0] sm:$0xff]
    %v47 = vld [vmem:[%s1 + $0xb8] sm:$0xff]
    %v48 = vld [vmem:[%s1 + $0xc0] sm:$0xff]
    %v49 = vld [vmem:[%s1 + $0xc8] sm:$0xff]
    %v50 = vld [vmem:[%s1 + $0xd0] sm:$0xff]
    %v51 = vld [vmem:[%s1 + $0xd8] sm:$0xff]
    %v52 = vld [vmem:[%s1 + $0xe0] sm:$0xff]
    %v53 = vld [vmem:[%s1 + $0xe8] sm:$0xff]
    %v54 = vld [vmem:[%s1 + $0xf0] sm:$0xff]
    %v55 = vld [vmem:[%s1 + $0xf8] sm:$0xff]
    %v56 = vld [vmem:[%s1 + $0x100] sm:$0xff]
    %v57 = vld [vmem:[%s1 + $0x108] sm:$0xff]
    %v58 = vld [vmem:[%s1 + $0x110] sm:$0xff]
    %v59 = vld [vmem:[%s1 + $0x118] sm:$0xff]
    %v60 = vld [vmem:[%s1 + $0x120] sm:$0xff]
    %v61 = vld [vmem:[%s1 + $0x128] sm:$0xff]
    %v62 = vld [vmem:[%s1 + $0x130] sm:$0xff]
    %v63 = vld [vmem:[%s1 + $0x138] sm:$0xff]
    %v64 = vld [vmem:[%s1 + $0x140] sm:$0xff]
    %v65 = vld [vmem:[%s1 + $0x148] sm:$0xff]
    %v66 = vld [vmem:[%s1 + $0x150] sm:$0xff]
    %v67 = vld [vmem:[%s1 + $0x158] sm:$0xff]
    %v68 = vld [vmem:[%s1 + $0x160] sm:$0xff]
    %v69 = vld [vmem:[%s1 + $0x168] sm:$0xff]
    %v70 = vld [vmem:[%s1 + $0x170] sm:$0xff]
    %v71 = vld [vmem:[%s1 + $0x178] sm:$0xff]
    %v72 = vld [vmem:[%s1 + $0x180] sm:$0xff]
    %v73 = vld [vmem:[%s1 + $0x188] sm:$0xff]
    %v74 = vld [vmem:[%s1 + $0x190] sm:$0xff]
    %v75 = vld [vmem:[%s1 + $0x198] sm:$0xff]
    %v76 = vld [vmem:[%s1 + $0x1a0] sm:$0xff]
    %v77 = vld [vmem:[%s1 + $0x1a8] sm:$0xff]
    %v78 = vld [vmem:[%s1 + $0x1b0] sm:$0xff]
    %v79 = vld [vmem:[%s1 + $0x1b8] sm:$0xff]
    %v80 = vld [vmem:[%s1 + $0x1c0] sm:$0xff]
    %v81 = vld [vmem:[%s1 + $0x1c8] sm:$0xff]
    %v82 = vld [vmem:[%s1 + $0x1d0] sm:$0xff]
    %v83 = vld [vmem:[%s1 + $0x1d8] sm:$0xff]
    %v84 = vld [vmem:[%s1 + $0x1e0] sm:$0xff]
    %v85 = vld [vmem:[%s1 + $0x1e8] sm:$0xff]
    %v86 = vld [vmem:[%s1 + $0x1f0] sm:$0xff]
    %v87 = vld [vmem:[%s1 + $0x1f8] sm:$0xff]
    %v88 = vld [vmem:[%s1 + $0x200] sm:$0x33]
    %v89 = vld [vmem:[%s1 + $0x208] sm:$0x33]
    %v90 = vld [vmem:[%s1 + $0x210] sm:$0x33]
    %v91 = vld [vmem:[%s1 + $0x218] sm:$0x33]
    %v92 = vld [vmem:[%s1 + $0x220] sm:$0x33]
    %v93 = vld [vmem:[%s1 + $0x228] sm:$0x33]
    %v94 = vld [vmem:[%s1 + $0x230] sm:$0x33]
    %v95 = vld [vmem:[%s1 + $0x238] sm:$0x33]
    %v96 = vld [vmem:[%s1 + $0x240] sm:$0x33]
    %v97 = vld [vmem:[%s1 + $0x248] sm:$0x33]
    %v98 = vld [vmem:[%s1 + $0x250] sm:$0x33]
    %v99 = vld [vmem:[%s1 + $0x258] sm:$0x33]
    %v100 = vld [vmem:[%s1 + $0x260] sm:$0x33]
    %v101 = vld [vmem:[%s1 + $0x268] sm:$0x33]
    %v102 = vld [vmem:[%s1 + $0x270] sm:$0x33]
    %v103 = vld [vmem:[%s1 + $0x278] sm:$0x33]
    %v104 = vld [vmem:[%s2] sm:$0xff]
    %v105 = vld [vmem:[%s2 + $0x8] sm:$0xff]
    %v106 = vld [vmem:[%s2 + $0x10] sm:$0xff]
    %v107 = vld [vmem:[%s2 + $0x18] sm:$0xff]
    %v112 = vlaneseq
    %v113 = vshrl.u32 %v112, 7
    %v114 = vsub.s32 0, %v113
    %v115 = vrot.slane %v104, %v114
    %v116 = vlaneseq
    %v117 = vshrl.u32 %v116, 7
    %v118 = vsub.s32 1, %v117
    %v119 = vrot.slane %v104, %v118
    %v120 = vlaneseq
    %v121 = vshrl.u32 %v120, 7
    %v122 = vsub.s32 2, %v121
    %v123 = vrot.slane %v104, %v122
    %v124 = vlaneseq
    %v125 = vshrl.u32 %v124, 7
    %v126 = vsub.s32 3, %v125
    %v127 = vrot.slane %v104, %v126
    %v128 = vlaneseq
    %v129 = vshrl.u32 %v128, 7
    %v130 = vsub.s32 4, %v129
    %v131 = vrot.slane %v104, %v130
    %v132 = vlaneseq
    %v133 = vshrl.u32 %v132, 7
    %v134 = vsub.s32 5, %v133
    %v135 = vrot.slane %v104, %v134
    %v136 = vlaneseq
    %v137 = vshrl.u32 %v136, 7
    %v138 = vsub.s32 6, %v137
    %v139 = vrot.slane %v104, %v138
    %v140 = vlaneseq
    %v141 = vshrl.u32 %v140, 7
    %v142 = vsub.s32 7, %v141
    %v143 = vrot.slane %v104, %v142
    %v144 = vlaneseq
    %v145 = vshrl.u32 %v144, 7
    %v146 = vsub.s32 0, %v145
    %v147 = vrot.slane %v105, %v146
    %v148 = vlaneseq
    %v149 = vshrl.u32 %v148, 7
    %v150 = vsub.s32 1, %v149
    %v151 = vrot.slane %v105, %v150
    %v152 = vlaneseq
    %v153 = vshrl.u32 %v152, 7
    %v154 = vsub.s32 2, %v153
    %v155 = vrot.slane %v105, %v154
    %v156 = vlaneseq
    %v157 = vshrl.u32 %v156, 7
    %v158 = vsub.s32 3, %v157
    %v159 = vrot.slane %v105, %v158
    %v160 = vlaneseq
    %v161 = vshrl.u32 %v160, 7
    %v162 = vsub.s32 4, %v161
    %v163 = vrot.slane %v105, %v162
    %v164 = vlaneseq
    %v165 = vshrl.u32 %v164, 7
    %v166 = vsub.s32 5, %v165
    %v167 = vrot.slane %v105, %v166
    %v168 = vlaneseq
    %v169 = vshrl.u32 %v168, 7
    %v170 = vsub.s32 6, %v169
    %v171 = vrot.slane %v105, %v170
    %v172 = vlaneseq
    %v173 = vshrl.u32 %v172, 7
    %v174 = vsub.s32 7, %v173
    %v175 = vrot.slane %v105, %v174
    %v176 = vlaneseq
    %v177 = vshrl.u32 %v176, 7
    %v178 = vsub.s32 0, %v177
    %v179 = vrot.slane %v106, %v178
    %v180 = vlaneseq
    %v181 = vshrl.u32 %v180, 7
    %v182 = vsub.s32 1, %v181
    %v183 = vrot.slane %v106, %v182
    %v184 = vlaneseq
    %v185 = vshrl.u32 %v184, 7
    %v186 = vsub.s32 2, %v185
    %v187 = vrot.slane %v106, %v186
    %v188 = vlaneseq
    %v189 = vshrl.u32 %v188, 7
    %v190 = vsub.s32 3, %v189
    %v191 = vrot.slane %v106, %v190
    %v192 = vlaneseq
    %v193 = vshrl.u32 %v192, 7
    %v194 = vsub.s32 4, %v193
    %v195 = vrot.slane %v106, %v194
    %v196 = vlaneseq
    %v197 = vshrl.u32 %v196, 7
    %v198 = vsub.s32 5, %v197
    %v199 = vrot.slane %v106, %v198
    %v200 = vlaneseq
    %v201 = vshrl.u32 %v200, 7
    %v202 = vsub.s32 6, %v201
    %v203 = vrot.slane %v106, %v202
    %v204 = vlaneseq
    %v205 = vshrl.u32 %v204, 7
    %v206 = vsub.s32 7, %v205
    %v207 = vrot.slane %v106, %v206
    %v208 = vlaneseq
    %v209 = vshrl.u32 %v208, 7
    %v210 = vsub.s32 0, %v209
    %v211 = vrot.slane %v107, %v210
    %v212 = vlaneseq
    %v213 = vshrl.u32 %v212, 7
    %v214 = vsub.s32 1, %v213
    %v215 = vrot.slane %v107, %v214
    %v216 = vlaneseq
    %v217 = vshrl.u32 %v216, 7
    %v218 = vsub.s32 2, %v217
    %v219 = vrot.slane %v107, %v218
    %v220 = vlaneseq
    %v221 = vshrl.u32 %v220, 7
    %v222 = vsub.s32 3, %v221
    %v223 = vrot.slane %v107, %v222
    %v224 = vlaneseq
    %v225 = vshrl.u32 %v224, 7
    %v226 = vsub.s32 4, %v225
    %v227 = vrot.slane %v107, %v226
    %v228 = vlaneseq
    %v229 = vshrl.u32 %v228, 7
    %v230 = vsub.s32 5, %v229
    %v231 = vrot.slane %v107, %v230
    %v232 = vlaneseq
    %v233 = vshrl.u32 %v232, 7
    %v234 = vsub.s32 6, %v233
    %v235 = vrot.slane %v107, %v234
    %v236 = vlaneseq
    %v237 = vshrl.u32 %v236, 7
    %v238 = vsub.s32 7, %v237
    %v239 = vrot.slane %v107, %v238
    %v274 = vunpack.c.l.b16 %v22
    %v275 = vunpack.c.l.b16 %v23
    %v276 = vpack.c.b16 %v275, %v274
    %v357 = vunpack.c.l.b16 %v24
    %v358 = vunpack.c.h.b16 %v24
    %v359 = vunpack.c.l.b16 %v25
    %v360 = vunpack.c.h.b16 %v25
    %v361 = vunpack.c.l.b16 %v26
    %v362 = vunpack.c.h.b16 %v26
    %v363 = vunpack.c.l.b16 %v27
    %v364 = vunpack.c.h.b16 %v27
    %v365 = vunpack.c.l.b16 %v28
    %v366 = vunpack.c.h.b16 %v28
    %v367 = vunpack.c.l.b16 %v29
    %v368 = vunpack.c.h.b16 %v29
    %v369 = vunpack.c.l.b16 %v30
    %v370 = vunpack.c.h.b16 %v30
    %v371 = vunpack.c.l.b16 %v31
    %v372 = vunpack.c.h.b16 %v31
    %v373 = vunpack.c.l.b16 %v32
    %v374 = vunpack.c.h.b16 %v32
    %v375 = vunpack.c.l.b16 %v33
    %v376 = vunpack.c.h.b16 %v33
    %v377 = vunpack.c.l.b16 %v34
    %v378 = vunpack.c.h.b16 %v34
    %v379 = vunpack.c.l.b16 %v35
    %v380 = vunpack.c.h.b16 %v35
    %v381 = vunpack.c.l.b16 %v36
    %v382 = vunpack.c.h.b16 %v36
    %v383 = vunpack.c.l.b16 %v37
    %v384 = vunpack.c.h.b16 %v37
    %v385 = vunpack.c.l.b16 %v38
    %v386 = vunpack.c.h.b16 %v38
    %v387 = vunpack.c.l.b16 %v39
    %v388 = vunpack.c.h.b16 %v39
    %v389 = vunpack.c.l.b16 %v40
    %v390 = vunpack.c.h.b16 %v40
    %v391 = vunpack.c.l.b16 %v41
    %v392 = vunpack.c.h.b16 %v41
    %v393 = vunpack.c.l.b16 %v42
    %v394 = vunpack.c.h.b16 %v42
    %v395 = vunpack.c.l.b16 %v43
    %v396 = vunpack.c.h.b16 %v43
    %v397 = vunpack.c.l.b16 %v44
    %v398 = vunpack.c.h.b16 %v44
    %v399 = vunpack.c.l.b16 %v45
    %v400 = vunpack.c.h.b16 %v45
    %v401 = vunpack.c.l.b16 %v46
    %v402 = vunpack.c.h.b16 %v46
    %v403 = vunpack.c.l.b16 %v47
    %v404 = vunpack.c.h.b16 %v47
    %v405 = vunpack.c.l.b16 %v48
    %v406 = vunpack.c.h.b16 %v48
    %v407 = vunpack.c.l.b16 %v49
    %v408 = vunpack.c.h.b16 %v49
    %v409 = vunpack.c.l.b16 %v50
    %v410 = vunpack.c.h.b16 %v50
    %v411 = vunpack.c.l.b16 %v51
    %v412 = vunpack.c.h.b16 %v51
    %v413 = vunpack.c.l.b16 %v52
    %v414 = vunpack.c.h.b16 %v52
    %v415 = vunpack.c.l.b16 %v53
    %v416 = vunpack.c.h.b16 %v53
    %v417 = vunpack.c.l.b16 %v54
    %v418 = vunpack.c.h.b16 %v54
    %v419 = vunpack.c.l.b16 %v55
    %v420 = vunpack.c.h.b16 %v55
    %v421 = vunpack.c.l.b16 %v56
    %v422 = vunpack.c.h.b16 %v56
    %v423 = vunpack.c.l.b16 %v57
    %v424 = vunpack.c.h.b16 %v57
    %v425 = vunpack.c.l.b16 %v58
    %v426 = vunpack.c.h.b16 %v58
    %v427 = vunpack.c.l.b16 %v59
    %v428 = vunpack.c.h.b16 %v59
    %v429 = vunpack.c.l.b16 %v60
    %v430 = vunpack.c.h.b16 %v60
    %v431 = vunpack.c.l.b16 %v61
    %v432 = vunpack.c.h.b16 %v61
    %v433 = vunpack.c.l.b16 %v62
    %v434 = vunpack.c.h.b16 %v62
    %v435 = vunpack.c.l.b16 %v63
    %v436 = vunpack.c.h.b16 %v63
    %v437 = vunpack.c.l.b16 %v64
    %v438 = vunpack.c.h.b16 %v64
    %v439 = vunpack.c.l.b16 %v65
    %v440 = vunpack.c.h.b16 %v65
    %v441 = vunpack.c.l.b16 %v66
    %v442 = vunpack.c.h.b16 %v66
    %v443 = vunpack.c.l.b16 %v67
    %v444 = vunpack.c.h.b16 %v67
    %v445 = vunpack.c.l.b16 %v68
    %v446 = vunpack.c.h.b16 %v68
    %v447 = vunpack.c.l.b16 %v69
    %v448 = vunpack.c.h.b16 %v69
    %v449 = vunpack.c.l.b16 %v70
    %v450 = vunpack.c.h.b16 %v70
    %v451 = vunpack.c.l.b16 %v71
    %v452 = vunpack.c.h.b16 %v71
    %v453 = vunpack.c.l.b16 %v72
    %v454 = vunpack.c.h.b16 %v72
    %v455 = vunpack.c.l.b16 %v73
    %v456 = vunpack.c.h.b16 %v73
    %v457 = vunpack.c.l.b16 %v74
    %v458 = vunpack.c.h.b16 %v74
    %v459 = vunpack.c.l.b16 %v75
    %v460 = vunpack.c.h.b16 %v75
    %v461 = vunpack.c.l.b16 %v76
    %v462 = vunpack.c.h.b16 %v76
    %v463 = vunpack.c.l.b16 %v77
    %v464 = vunpack.c.h.b16 %v77
    %v465 = vunpack.c.l.b16 %v78
    %v466 = vunpack.c.h.b16 %v78
    %v467 = vunpack.c.l.b16 %v79
    %v468 = vunpack.c.h.b16 %v79
    %v469 = vunpack.c.l.b16 %v80
    %v470 = vunpack.c.h.b16 %v80
    %v471 = vunpack.c.l.b16 %v81
    %v472 = vunpack.c.h.b16 %v81
    %v473 = vunpack.c.l.b16 %v82
    %v474 = vunpack.c.h.b16 %v82
    %v475 = vunpack.c.l.b16 %v83
    %v476 = vunpack.c.h.b16 %v83
    %v477 = vunpack.c.l.b16 %v84
    %v478 = vunpack.c.h.b16 %v84
    %v479 = vunpack.c.l.b16 %v85
    %v480 = vunpack.c.h.b16 %v85
    %v481 = vunpack.c.l.b16 %v86
    %v482 = vunpack.c.h.b16 %v86
    %v483 = vunpack.c.l.b16 %v87
    %v484 = vunpack.c.h.b16 %v87
    %v485 = vunpack.c.l.b16 %v88
    %v486 = vunpack.c.h.b16 %v88
    %v487 = vunpack.c.l.b16 %v89
    %v488 = vunpack.c.h.b16 %v89
    %v489 = vunpack.c.l.b16 %v90
    %v490 = vunpack.c.h.b16 %v90
    %v491 = vunpack.c.l.b16 %v91
    %v492 = vunpack.c.h.b16 %v91
    %v493 = vunpack.c.l.b16 %v92
    %v494 = vunpack.c.h.b16 %v92
    %v495 = vunpack.c.l.b16 %v93
    %v496 = vunpack.c.h.b16 %v93
    %v497 = vunpack.c.l.b16 %v94
    %v498 = vunpack.c.h.b16 %v94
    %v499 = vunpack.c.l.b16 %v95
    %v500 = vunpack.c.h.b16 %v95
    %v501 = vunpack.c.l.b16 %v96
    %v502 = vunpack.c.h.b16 %v96
    %v503 = vunpack.c.l.b16 %v97
    %v504 = vunpack.c.h.b16 %v97
    %v505 = vunpack.c.l.b16 %v98
    %v506 = vunpack.c.h.b16 %v98
    %v507 = vunpack.c.l.b16 %v99
    %v508 = vunpack.c.h.b16 %v99
    %v509 = vunpack.c.l.b16 %v100
    %v510 = vunpack.c.h.b16 %v100
    %v511 = vunpack.c.l.b16 %v101
    %v512 = vunpack.c.h.b16 %v101
    %v513 = vunpack.c.l.b16 %v102
    %v514 = vunpack.c.h.b16 %v102
    %v515 = vunpack.c.l.b16 %v103
    %v516 = vunpack.c.h.b16 %v103
    %v517 = vpack.c.b16 %v389, %v357
    %v518 = vpack.c.b16 %v390, %v358
    %v519 = vpack.c.b16 %v391, %v359
    %v520 = vpack.c.b16 %v392, %v360
    %v521 = vpack.c.b16 %v393, %v361
    %v522 = vpack.c.b16 %v394, %v362
    %v523 = vpack.c.b16 %v395, %v363
    %v524 = vpack.c.b16 %v396, %v364
    %v525 = vpack.c.b16 %v397, %v365
    %v526 = vpack.c.b16 %v398, %v366
    %v527 = vpack.c.b16 %v399, %v367
    %v528 = vpack.c.b16 %v400, %v368
    %v529 = vpack.c.b16 %v401, %v369
    %v530 = vpack.c.b16 %v402, %v370
    %v531 = vpack.c.b16 %v403, %v371
    %v532 = vpack.c.b16 %v404, %v372
    %v533 = vpack.c.b16 %v405, %v373
    %v534 = vpack.c.b16 %v406, %v374
    %v535 = vpack.c.b16 %v407, %v375
    %v536 = vpack.c.b16 %v408, %v376
    %v537 = vpack.c.b16 %v409, %v377
    %v538 = vpack.c.b16 %v410, %v378
    %v539 = vpack.c.b16 %v411, %v379
    %v540 = vpack.c.b16 %v412, %v380
    %v541 = vpack.c.b16 %v413, %v381
    %v542 = vpack.c.b16 %v414, %v382
    %v543 = vpack.c.b16 %v415, %v383
    %v544 = vpack.c.b16 %v416, %v384
    %v545 = vpack.c.b16 %v417, %v385
    %v546 = vpack.c.b16 %v418, %v386
    %v547 = vpack.c.b16 %v419, %v387
    %v548 = vpack.c.b16 %v420, %v388
    %v549 = vpack.c.b16 %v453, %v421
    %v550 = vpack.c.b16 %v454, %v422
    %v551 = vpack.c.b16 %v455, %v423
    %v552 = vpack.c.b16 %v456, %v424
    %v553 = vpack.c.b16 %v457, %v425
    %v554 = vpack.c.b16 %v458, %v426
    %v555 = vpack.c.b16 %v459, %v427
    %v556 = vpack.c.b16 %v460, %v428
    %v557 = vpack.c.b16 %v461, %v429
    %v558 = vpack.c.b16 %v462, %v430
    %v559 = vpack.c.b16 %v463, %v431
    %v560 = vpack.c.b16 %v464, %v432
    %v561 = vpack.c.b16 %v465, %v433
    %v562 = vpack.c.b16 %v466, %v434
    %v563 = vpack.c.b16 %v467, %v435
    %v564 = vpack.c.b16 %v468, %v436
    %v565 = vpack.c.b16 %v469, %v437
    %v566 = vpack.c.b16 %v470, %v438
    %v567 = vpack.c.b16 %v471, %v439
    %v568 = vpack.c.b16 %v472, %v440
    %v569 = vpack.c.b16 %v473, %v441
    %v570 = vpack.c.b16 %v474, %v442
    %v571 = vpack.c.b16 %v475, %v443
    %v572 = vpack.c.b16 %v476, %v444
    %v573 = vpack.c.b16 %v477, %v445
    %v574 = vpack.c.b16 %v478, %v446
    %v575 = vpack.c.b16 %v479, %v447
    %v576 = vpack.c.b16 %v480, %v448
    %v577 = vpack.c.b16 %v481, %v449
    %v578 = vpack.c.b16 %v482, %v450
    %v579 = vpack.c.b16 %v483, %v451
    %v580 = vpack.c.b16 %v484, %v452
    %v581 = vpack.c.b16 %v485, %v485
    %v582 = vpack.c.b16 %v486, %v486
    %v583 = vpack.c.b16 %v487, %v487
    %v584 = vpack.c.b16 %v488, %v488
    %v585 = vpack.c.b16 %v489, %v489
    %v586 = vpack.c.b16 %v490, %v490
    %v587 = vpack.c.b16 %v491, %v491
    %v588 = vpack.c.b16 %v492, %v492
    %v589 = vpack.c.b16 %v493, %v493
    %v590 = vpack.c.b16 %v494, %v494
    %v591 = vpack.c.b16 %v495, %v495
    %v592 = vpack.c.b16 %v496, %v496
    %v593 = vpack.c.b16 %v497, %v497
    %v594 = vpack.c.b16 %v498, %v498
    %v595 = vpack.c.b16 %v499, %v499
    %v596 = vpack.c.b16 %v500, %v500
    %v597 = vpack.c.b16 %v501, %v501
    %v598 = vpack.c.b16 %v502, %v502
    %v599 = vpack.c.b16 %v503, %v503
    %v600 = vpack.c.b16 %v504, %v504
    %v601 = vpack.c.b16 %v505, %v505
    %v602 = vpack.c.b16 %v506, %v506
    %v603 = vpack.c.b16 %v507, %v507
    %v604 = vpack.c.b16 %v508, %v508
    %v605 = vpack.c.b16 %v509, %v509
    %v606 = vpack.c.b16 %v510, %v510
    %v607 = vpack.c.b16 %v511, %v511
    %v608 = vpack.c.b16 %v512, %v512
    %v609 = vpack.c.b16 %v513, %v513
    %v610 = vpack.c.b16 %v514, %v514
    %v611 = vpack.c.b16 %v515, %v515
    %v612 = vpack.c.b16 %v516, %v516
    %vm677 = vcmask 293888
    %v679 = vsel %vm677, %v276, 0
    %vm681 = vcmask 1041408
    %v683 = vsel %vm681, %v581, 0
    %v686 = vsel %vm681, %v582, 0
    %v689 = vsel %vm681, %v583, 0
    %v692 = vsel %vm681, %v584, 0
    %v695 = vsel %vm681, %v585, 0
    %v698 = vsel %vm681, %v586, 0
    %v701 = vsel %vm681, %v587, 0
    %v704 = vsel %vm681, %v588, 0
    %v707 = vsel %vm681, %v589, 0
    %v710 = vsel %vm681, %v590, 0
    %v713 = vsel %vm681, %v591, 0
    %v716 = vsel %vm681, %v592, 0
    %v719 = vsel %vm681, %v593, 0
    %v722 = vsel %vm681, %v594, 0
    %v725 = vsel %vm681, %v595, 0
    %v728 = vsel %vm681, %v596, 0
    %v731 = vsel %vm681, %v597, 0
    %v734 = vsel %vm681, %v598, 0
    %v737 = vsel %vm681, %v599, 0
    %v740 = vsel %vm681, %v600, 0
    %v743 = vsel %vm681, %v601, 0
    %v746 = vsel %vm681, %v602, 0
    %v749 = vsel %vm681, %v603, 0
    %v752 = vsel %vm681, %v604, 0
    %v755 = vsel %vm681, %v605, 0
    %v758 = vsel %vm681, %v606, 0
    %v761 = vsel %vm681, %v607, 0
    %v764 = vsel %vm681, %v608, 0
    %v767 = vsel %vm681, %v609, 0
    %v770 = vsel %vm681, %v610, 0
    %v773 = vsel %vm681, %v611, 0
    %v776 = vsel %vm681, %v612, 0
    %778 = vmatprep.subr.bf16.mxu0 %v518
    %779 = vmatpush1.bf16.msra.mxu0 %v517
    %780 = vmatprep.subr.bf16.mxu0 %v550
    %781 = vmatpush1.bf16.msra.mxu0 %v549
    %782 = vmatprep.subr.bf16.mxu0 %v686
    %783 = vmatpush1.bf16.msra.mxu0 %v683
    %784 = vmatprep.subr.bf16.mxu0 0
    %785 = vmatpush1.bf16.msra.mxu0 0
    %786 = vmatprep.subr.bf16.mxu0 0
    %787 = vmatpush1.bf16.msra.mxu0 0
    %788 = vmatprep.subr.bf16.mxu0 0
    %789 = vmatpush1.bf16.msra.mxu0 0
    %790 = vmatprep.subr.bf16.mxu0 0
    %791 = vmatpush1.bf16.msra.mxu0 0
    %792 = vmatprep.subr.bf16.mxu0 0
    %793 = vmatpush1.bf16.msra.mxu0 0
    %794 = vmatprep.subr.bf16.mxu0 0
    %795 = vmatpush1.bf16.msra.mxu0 0
    %796 = vmatprep.subr.bf16.mxu0 0
    %797 = vmatpush1.bf16.msra.mxu0 0
    %798 = vmatprep.subr.bf16.mxu0 0
    %799 = vmatpush1.bf16.msra.mxu0 0
    %800 = vmatprep.subr.bf16.mxu0 0
    %801 = vmatpush1.bf16.msra.mxu0 0
    %802 = vmatprep.subr.bf16.mxu0 0
    %803 = vmatpush1.bf16.msra.mxu0 0
    %804 = vmatprep.subr.bf16.mxu0 0
    %805 = vmatpush1.bf16.msra.mxu0 0
    %806 = vmatprep.subr.bf16.mxu0 0
    %807 = vmatpush1.bf16.msra.mxu0 0
    %808 = vmatprep.subr.bf16.mxu0 0
    %809 = vmatpush1.bf16.msra.mxu0 0
    %810 = vmatprep.mubr.bf16.mxu0 0
    %811 = vmatmul.mubr.bf16.gmra.mrb[0].mxu0 %v679
    %v812 = vpop.f32.mrb[0].mxu0
    %v813 = vadd.f32 %v115, %v812
    %v814 = vpop.f32.mrb[0].mxu0
    %v815 = vadd.f32 %v119, %v814
    %v816 = vpop.f32.mrb[0].mxu0
    %v817 = vadd.f32 %v115, %v816
    %v818 = vpop.f32.mrb[0].mxu0
    %v819 = vadd.f32 %v119, %v818
    %820 = vdwg.mxu0
    %821 = vmatprep.subr.bf16.mxu0 %v520
    %822 = vmatpush1.bf16.msra.mxu0 %v519
    %823 = vmatprep.subr.bf16.mxu0 %v552
    %824 = vmatpush1.bf16.msra.mxu0 %v551
    %825 = vmatprep.subr.bf16.mxu0 %v692
    %826 = vmatpush1.bf16.msra.mxu0 %v689
    %827 = vmatprep.subr.bf16.mxu0 0
    %828 = vmatpush1.bf16.msra.mxu0 0
    %829 = vmatprep.subr.bf16.mxu0 0
    %830 = vmatpush1.bf16.msra.mxu0 0
    %831 = vmatprep.subr.bf16.mxu0 0
    %832 = vmatpush1.bf16.msra.mxu0 0
    %833 = vmatprep.subr.bf16.mxu0 0
    %834 = vmatpush1.bf16.msra.mxu0 0
    %835 = vmatprep.subr.bf16.mxu0 0
    %836 = vmatpush1.bf16.msra.mxu0 0
    %837 = vmatprep.subr.bf16.mxu0 0
    %838 = vmatpush1.bf16.msra.mxu0 0
    %839 = vmatprep.subr.bf16.mxu0 0
    %840 = vmatpush1.bf16.msra.mxu0 0
    %841 = vmatprep.subr.bf16.mxu0 0
    %842 = vmatpush1.bf16.msra.mxu0 0
    %843 = vmatprep.subr.bf16.mxu0 0
    %844 = vmatpush1.bf16.msra.mxu0 0
    %845 = vmatprep.subr.bf16.mxu0 0
    %846 = vmatpush1.bf16.msra.mxu0 0
    %847 = vmatprep.subr.bf16.mxu0 0
    %848 = vmatpush1.bf16.msra.mxu0 0
    %849 = vmatprep.subr.bf16.mxu0 0
    %850 = vmatpush1.bf16.msra.mxu0 0
    %851 = vmatprep.subr.bf16.mxu0 0
    %852 = vmatpush1.bf16.msra.mxu0 0
    %853 = vmatprep.mubr.bf16.mxu0 0
    %854 = vmatmul.mubr.bf16.gmra.mrb[0].mxu0 %v679
    %v855 = vpop.f32.mrb[0].mxu0
    %v856 = vadd.f32 %v123, %v855
    %v857 = vpop.f32.mrb[0].mxu0
    %v858 = vadd.f32 %v127, %v857
    %v859 = vpop.f32.mrb[0].mxu0
    %v860 = vadd.f32 %v123, %v859
    %v861 = vpop.f32.mrb[0].mxu0
    %v862 = vadd.f32 %v127, %v861
    %863 = vdwg.mxu0
    %864 = vmatprep.subr.bf16.mxu0 %v522
    %865 = vmatpush1.bf16.msra.mxu0 %v521
    %866 = vmatprep.subr.bf16.mxu0 %v554
    %867 = vmatpush1.bf16.msra.mxu0 %v553
    %868 = vmatprep.subr.bf16.mxu0 %v698
    %869 = vmatpush1.bf16.msra.mxu0 %v695
    %870 = vmatprep.subr.bf16.mxu0 0
    %871 = vmatpush1.bf16.msra.mxu0 0
    %872 = vmatprep.subr.bf16.mxu0 0
    %873 = vmatpush1.bf16.msra.mxu0 0
    %874 = vmatprep.subr.bf16.mxu0 0
    %875 = vmatpush1.bf16.msra.mxu0 0
    %876 = vmatprep.subr.bf16.mxu0 0
    %877 = vmatpush1.bf16.msra.mxu0 0
    %878 = vmatprep.subr.bf16.mxu0 0
    %879 = vmatpush1.bf16.msra.mxu0 0
    %880 = vmatprep.subr.bf16.mxu0 0
    %881 = vmatpush1.bf16.msra.mxu0 0
    %882 = vmatprep.subr.bf16.mxu0 0
    %883 = vmatpush1.bf16.msra.mxu0 0
    %884 = vmatprep.subr.bf16.mxu0 0
    %885 = vmatpush1.bf16.msra.mxu0 0
    %886 = vmatprep.subr.bf16.mxu0 0
    %887 = vmatpush1.bf16.msra.mxu0 0
    %888 = vmatprep.subr.bf16.mxu0 0
    %889 = vmatpush1.bf16.msra.mxu0 0
    %890 = vmatprep.subr.bf16.mxu0 0
    %891 = vmatpush1.bf16.msra.mxu0 0
    %892 = vmatprep.subr.bf16.mxu0 0
    %893 = vmatpush1.bf16.msra.mxu0 0
    %894 = vmatprep.subr.bf16.mxu0 0
    %895 = vmatpush1.bf16.msra.mxu0 0
    %896 = vmatprep.mubr.bf16.mxu0 0
    %897 = vmatmul.mubr.bf16.gmra.mrb[0].mxu0 %v679
    %v898 = vpop.f32.mrb[0].mxu0
    %v899 = vadd.f32 %v131, %v898
    %v900 = vpop.f32.mrb[0].mxu0
    %v901 = vadd.f32 %v135, %v900
    %v902 = vpop.f32.mrb[0].mxu0
    %v903 = vadd.f32 %v131, %v902
    %v904 = vpop.f32.mrb[0].mxu0
    %v905 = vadd.f32 %v135, %v904
    %906 = vdwg.mxu0
    %907 = vmatprep.subr.bf16.mxu0 %v524
    %908 = vmatpush1.bf16.msra.mxu0 %v523
    %909 = vmatprep.subr.bf16.mxu0 %v556
    %910 = vmatpush1.bf16.msra.mxu0 %v555
    %911 = vmatprep.subr.bf16.mxu0 %v704
    %912 = vmatpush1.bf16.msra.mxu0 %v701
    %913 = vmatprep.subr.bf16.mxu0 0
    %914 = vmatpush1.bf16.msra.mxu0 0
    %915 = vmatprep.subr.bf16.mxu0 0
    %916 = vmatpush1.bf16.msra.mxu0 0
    %917 = vmatprep.subr.bf16.mxu0 0
    %918 = vmatpush1.bf16.msra.mxu0 0
    %919 = vmatprep.subr.bf16.mxu0 0
    %920 = vmatpush1.bf16.msra.mxu0 0
    %921 = vmatprep.subr.bf16.mxu0 0
    %922 = vmatpush1.bf16.msra.mxu0 0
    %923 = vmatprep.subr.bf16.mxu0 0
    %924 = vmatpush1.bf16.msra.mxu0 0
    %925 = vmatprep.subr.bf16.mxu0 0
    %926 = vmatpush1.bf16.msra.mxu0 0
    %927 = vmatprep.subr.bf16.mxu0 0
    %928 = vmatpush1.bf16.msra.mxu0 0
    %929 = vmatprep.subr.bf16.mxu0 0
    %930 = vmatpush1.bf16.msra.mxu0 0
    %931 = vmatprep.subr.bf16.mxu0 0
    %932 = vmatpush1.bf16.msra.mxu0 0
    %933 = vmatprep.subr.bf16.mxu0 0
    %934 = vmatpush1.bf16.msra.mxu0 0
    %935 = vmatprep.subr.bf16.mxu0 0
    %936 = vmatpush1.bf16.msra.mxu0 0
    %937 = vmatprep.subr.bf16.mxu0 0
    %938 = vmatpush1.bf16.msra.mxu0 0
    %939 = vmatprep.mubr.bf16.mxu0 0
    %940 = vmatmul.mubr.bf16.gmra.mrb[0].mxu0 %v679
    %v941 = vpop.f32.mrb[0].mxu0
    %v942 = vadd.f32 %v139, %v941
    %v943 = vpop.f32.mrb[0].mxu0
    %v944 = vadd.f32 %v143, %v943
    %v945 = vpop.f32.mrb[0].mxu0
    %v946 = vadd.f32 %v139, %v945
    %v947 = vpop.f32.mrb[0].mxu0
    %v948 = vadd.f32 %v143, %v947
    %949 = vdwg.mxu0
    %950 = vmatprep.subr.bf16.mxu0 %v526
    %951 = vmatpush1.bf16.msra.mxu0 %v525
    %952 = vmatprep.subr.bf16.mxu0 %v558
    %953 = vmatpush1.bf16.msra.mxu0 %v557
    %954 = vmatprep.subr.bf16.mxu0 %v710
    %955 = vmatpush1.bf16.msra.mxu0 %v707
    %956 = vmatprep.subr.bf16.mxu0 0
    %957 = vmatpush1.bf16.msra.mxu0 0
    %958 = vmatprep.subr.bf16.mxu0 0
    %959 = vmatpush1.bf16.msra.mxu0 0
    %960 = vmatprep.subr.bf16.mxu0 0
    %961 = vmatpush1.bf16.msra.mxu0 0
    %962 = vmatprep.subr.bf16.mxu0 0
    %963 = vmatpush1.bf16.msra.mxu0 0
    %964 = vmatprep.subr.bf16.mxu0 0
    %965 = vmatpush1.bf16.msra.mxu0 0
    %966 = vmatprep.subr.bf16.mxu0 0
    %967 = vmatpush1.bf16.msra.mxu0 0
    %968 = vmatprep.subr.bf16.mxu0 0
    %969 = vmatpush1.bf16.msra.mxu0 0
    %970 = vmatprep.subr.bf16.mxu0 0
    %971 = vmatpush1.bf16.msra.mxu0 0
    %972 = vmatprep.subr.bf16.mxu0 0
    %973 = vmatpush1.bf16.msra.mxu0 0
    %974 = vmatprep.subr.bf16.mxu0 0
    %975 = vmatpush1.bf16.msra.mxu0 0
    %976 = vmatprep.subr.bf16.mxu0 0
    %977 = vmatpush1.bf16.msra.mxu0 0
    %978 = vmatprep.subr.bf16.mxu0 0
    %979 = vmatpush1.bf16.msra.mxu0 0
    %980 = vmatprep.subr.bf16.mxu0 0
    %981 = vmatpush1.bf16.msra.mxu0 0
    %982 = vmatprep.mubr.bf16.mxu0 0
    %983 = vmatmul.mubr.bf16.gmra.mrb[0].mxu0 %v679
    %v984 = vpop.f32.mrb[0].mxu0
    %v985 = vadd.f32 %v147, %v984
    %v986 = vpop.f32.mrb[0].mxu0
    %v987 = vadd.f32 %v151, %v986
    %v988 = vpop.f32.mrb[0].mxu0
    %v989 = vadd.f32 %v147, %v988
    %v990 = vpop.f32.mrb[0].mxu0
    %v991 = vadd.f32 %v151, %v990
    %992 = vdwg.mxu0
    %993 = vmatprep.subr.bf16.mxu0 %v528
    %994 = vmatpush1.bf16.msra.mxu0 %v527
    %995 = vmatprep.subr.bf16.mxu0 %v560
    %996 = vmatpush1.bf16.msra.mxu0 %v559
    %997 = vmatprep.subr.bf16.mxu0 %v716
    %998 = vmatpush1.bf16.msra.mxu0 %v713
    %999 = vmatprep.subr.bf16.mxu0 0
    %1000 = vmatpush1.bf16.msra.mxu0 0
    %1001 = vmatprep.subr.bf16.mxu0 0
    %1002 = vmatpush1.bf16.msra.mxu0 0
    %1003 = vmatprep.subr.bf16.mxu0 0
    %1004 = vmatpush1.bf16.msra.mxu0 0
    %1005 = vmatprep.subr.bf16.mxu0 0
    %1006 = vmatpush1.bf16.msra.mxu0 0
    %1007 = vmatprep.subr.bf16.mxu0 0
    %1008 = vmatpush1.bf16.msra.mxu0 0
    %1009 = vmatprep.subr.bf16.mxu0 0
    %1010 = vmatpush1.bf16.msra.mxu0 0
    %1011 = vmatprep.subr.bf16.mxu0 0
    %1012 = vmatpush1.bf16.msra.mxu0 0
    %1013 = vmatprep.subr.bf16.mxu0 0
    %1014 = vmatpush1.bf16.msra.mxu0 0
    %1015 = vmatprep.subr.bf16.mxu0 0
    %1016 = vmatpush1.bf16.msra.mxu0 0
    %1017 = vmatprep.subr.bf16.mxu0 0
    %1018 = vmatpush1.bf16.msra.mxu0 0
    %1019 = vmatprep.subr.bf16.mxu0 0
    %1020 = vmatpush1.bf16.msra.mxu0 0
    %1021 = vmatprep.subr.bf16.mxu0 0
    %1022 = vmatpush1.bf16.msra.mxu0 0
    %1023 = vmatprep.subr.bf16.mxu0 0
    %1024 = vmatpush1.bf16.msra.mxu0 0
    %1025 = vmatprep.mubr.bf16.mxu0 0
    %1026 = vmatmul.mubr.bf16.gmra.mrb[0].mxu0 %v679
    %v1027 = vpop.f32.mrb[0].mxu0
    %v1028 = vadd.f32 %v155, %v1027
    %v1029 = vpop.f32.mrb[0].mxu0
    %v1030 = vadd.f32 %v159, %v1029
    %v1031 = vpop.f32.mrb[0].mxu0
    %v1032 = vadd.f32 %v155, %v1031
    %v1033 = vpop.f32.mrb[0].mxu0
    %v1034 = vadd.f32 %v159, %v1033
    %1035 = vdwg.mxu0
    %1036 = vmatprep.subr.bf16.mxu0 %v530
    %1037 = vmatpush1.bf16.msra.mxu0 %v529
    %1038 = vmatprep.subr.bf16.mxu0 %v562
    %1039 = vmatpush1.bf16.msra.mxu0 %v561
    %1040 = vmatprep.subr.bf16.mxu0 %v722
    %1041 = vmatpush1.bf16.msra.mxu0 %v719
    %1042 = vmatprep.subr.bf16.mxu0 0
    %1043 = vmatpush1.bf16.msra.mxu0 0
    %1044 = vmatprep.subr.bf16.mxu0 0
    %1045 = vmatpush1.bf16.msra.mxu0 0
    %1046 = vmatprep.subr.bf16.mxu0 0
    %1047 = vmatpush1.bf16.msra.mxu0 0
    %1048 = vmatprep.subr.bf16.mxu0 0
    %1049 = vmatpush1.bf16.msra.mxu0 0
    %1050 = vmatprep.subr.bf16.mxu0 0
    %1051 = vmatpush1.bf16.msra.mxu0 0
    %1052 = vmatprep.subr.bf16.mxu0 0
    %1053 = vmatpush1.bf16.msra.mxu0 0
    %1054 = vmatprep.subr.bf16.mxu0 0
    %1055 = vmatpush1.bf16.msra.mxu0 0
    %1056 = vmatprep.subr.bf16.mxu0 0
    %1057 = vmatpush1.bf16.msra.mxu0 0
    %1058 = vmatprep.subr.bf16.mxu0 0
    %1059 = vmatpush1.bf16.msra.mxu0 0
    %1060 = vmatprep.subr.bf16.mxu0 0
    %1061 = vmatpush1.bf16.msra.mxu0 0
    %1062 = vmatprep.subr.bf16.mxu0 0
    %1063 = vmatpush1.bf16.msra.mxu0 0
    %1064 = vmatprep.subr.bf16.mxu0 0
    %1065 = vmatpush1.bf16.msra.mxu0 0
    %1066 = vmatprep.subr.bf16.mxu0 0
    %1067 = vmatpush1.bf16.msra.mxu0 0
    %1068 = vmatprep.mubr.bf16.mxu0 0
    %1069 = vmatmul.mubr.bf16.gmra.mrb[0].mxu0 %v679
    %v1070 = vpop.f32.mrb[0].mxu0
    %v1071 = vadd.f32 %v163, %v1070
    %v1072 = vpop.f32.mrb[0].mxu0
    %v1073 = vadd.f32 %v167, %v1072
    %v1074 = vpop.f32.mrb[0].mxu0
    %v1075 = vadd.f32 %v163, %v1074
    %v1076 = vpop.f32.mrb[0].mxu0
    %v1077 = vadd.f32 %v167, %v1076
    %1078 = vdwg.mxu0
    %1079 = vmatprep.subr.bf16.mxu0 %v532
    %1080 = vmatpush1.bf16.msra.mxu0 %v531
    %1081 = vmatprep.subr.bf16.mxu0 %v564
    %1082 = vmatpush1.bf16.msra.mxu0 %v563
    %1083 = vmatprep.subr.bf16.mxu0 %v728
    %1084 = vmatpush1.bf16.msra.mxu0 %v725
    %1085 = vmatprep.subr.bf16.mxu0 0
    %1086 = vmatpush1.bf16.msra.mxu0 0
    %1087 = vmatprep.subr.bf16.mxu0 0
    %1088 = vmatpush1.bf16.msra.mxu0 0
    %1089 = vmatprep.subr.bf16.mxu0 0
    %1090 = vmatpush1.bf16.msra.mxu0 0
    %1091 = vmatprep.subr.bf16.mxu0 0
    %1092 = vmatpush1.bf16.msra.mxu0 0
    %1093 = vmatprep.subr.bf16.mxu0 0
    %1094 = vmatpush1.bf16.msra.mxu0 0
    %1095 = vmatprep.subr.bf16.mxu0 0
    %1096 = vmatpush1.bf16.msra.mxu0 0
    %1097 = vmatprep.subr.bf16.mxu0 0
    %1098 = vmatpush1.bf16.msra.mxu0 0
    %1099 = vmatprep.subr.bf16.mxu0 0
    %1100 = vmatpush1.bf16.msra.mxu0 0
    %1101 = vmatprep.subr.bf16.mxu0 0
    %1102 = vmatpush1.bf16.msra.mxu0 0
    %1103 = vmatprep.subr.bf16.mxu0 0
    %1104 = vmatpush1.bf16.msra.mxu0 0
    %1105 = vmatprep.subr.bf16.mxu0 0
    %1106 = vmatpush1.bf16.msra.mxu0 0
    %1107 = vmatprep.subr.bf16.mxu0 0
    %1108 = vmatpush1.bf16.msra.mxu0 0
    %1109 = vmatprep.subr.bf16.mxu0 0
    %1110 = vmatpush1.bf16.msra.mxu0 0
    %1111 = vmatprep.mubr.bf16.mxu0 0
    %1112 = vmatmul.mubr.bf16.gmra.mrb[0].mxu0 %v679
    %v1113 = vpop.f32.mrb[0].mxu0
    %v1114 = vadd.f32 %v171, %v1113
    %v1115 = vpop.f32.mrb[0].mxu0
    %v1116 = vadd.f32 %v175, %v1115
    %v1117 = vpop.f32.mrb[0].mxu0
    %v1118 = vadd.f32 %v171, %v1117
    %v1119 = vpop.f32.mrb[0].mxu0
    %v1120 = vadd.f32 %v175, %v1119
    %1121 = vdwg.mxu0
    %1122 = vmatprep.subr.bf16.mxu0 %v534
    %1123 = vmatpush1.bf16.msra.mxu0 %v533
    %1124 = vmatprep.subr.bf16.mxu0 %v566
    %1125 = vmatpush1.bf16.msra.mxu0 %v565
    %1126 = vmatprep.subr.bf16.mxu0 %v734
    %1127 = vmatpush1.bf16.msra.mxu0 %v731
    %1128 = vmatprep.subr.bf16.mxu0 0
    %1129 = vmatpush1.bf16.msra.mxu0 0
    %1130 = vmatprep.subr.bf16.mxu0 0
    %1131 = vmatpush1.bf16.msra.mxu0 0
    %1132 = vmatprep.subr.bf16.mxu0 0
    %1133 = vmatpush1.bf16.msra.mxu0 0
    %1134 = vmatprep.subr.bf16.mxu0 0
    %1135 = vmatpush1.bf16.msra.mxu0 0
    %1136 = vmatprep.subr.bf16.mxu0 0
    %1137 = vmatpush1.bf16.msra.mxu0 0
    %1138 = vmatprep.subr.bf16.mxu0 0
    %1139 = vmatpush1.bf16.msra.mxu0 0
    %1140 = vmatprep.subr.bf16.mxu0 0
    %1141 = vmatpush1.bf16.msra.mxu0 0
    %1142 = vmatprep.subr.bf16.mxu0 0
    %1143 = vmatpush1.bf16.msra.mxu0 0
    %1144 = vmatprep.subr.bf16.mxu0 0
    %1145 = vmatpush1.bf16.msra.mxu0 0
    %1146 = vmatprep.subr.bf16.mxu0 0
    %1147 = vmatpush1.bf16.msra.mxu0 0
    %1148 = vmatprep.subr.bf16.mxu0 0
    %1149 = vmatpush1.bf16.msra.mxu0 0
    %1150 = vmatprep.subr.bf16.mxu0 0
    %1151 = vmatpush1.bf16.msra.mxu0 0
    %1152 = vmatprep.subr.bf16.mxu0 0
    %1153 = vmatpush1.bf16.msra.mxu0 0
    %1154 = vmatprep.mubr.bf16.mxu0 0
    %1155 = vmatmul.mubr.bf16.gmra.mrb[0].mxu0 %v679
    %v1156 = vpop.f32.mrb[0].mxu0
    %v1157 = vadd.f32 %v179, %v1156
    %v1158 = vpop.f32.mrb[0].mxu0
    %v1159 = vadd.f32 %v183, %v1158
    %v1160 = vpop.f32.mrb[0].mxu0
    %v1161 = vadd.f32 %v179, %v1160
    %v1162 = vpop.f32.mrb[0].mxu0
    %v1163 = vadd.f32 %v183, %v1162
    %1164 = vdwg.mxu0
    %1165 = vmatprep.subr.bf16.mxu0 %v536
    %1166 = vmatpush1.bf16.msra.mxu0 %v535
    %1167 = vmatprep.subr.bf16.mxu0 %v568
    %1168 = vmatpush1.bf16.msra.mxu0 %v567
    %1169 = vmatprep.subr.bf16.mxu0 %v740
    %1170 = vmatpush1.bf16.msra.mxu0 %v737
    %1171 = vmatprep.subr.bf16.mxu0 0
    %1172 = vmatpush1.bf16.msra.mxu0 0
    %1173 = vmatprep.subr.bf16.mxu0 0
    %1174 = vmatpush1.bf16.msra.mxu0 0
    %1175 = vmatprep.subr.bf16.mxu0 0
    %1176 = vmatpush1.bf16.msra.mxu0 0
    %1177 = vmatprep.subr.bf16.mxu0 0
    %1178 = vmatpush1.bf16.msra.mxu0 0
    %1179 = vmatprep.subr.bf16.mxu0 0
    %1180 = vmatpush1.bf16.msra.mxu0 0
    %1181 = vmatprep.subr.bf16.mxu0 0
    %1182 = vmatpush1.bf16.msra.mxu0 0
    %1183 = vmatprep.subr.bf16.mxu0 0
    %1184 = vmatpush1.bf16.msra.mxu0 0
    %1185 = vmatprep.subr.bf16.mxu0 0
    %1186 = vmatpush1.bf16.msra.mxu0 0
    %1187 = vmatprep.subr.bf16.mxu0 0
    %1188 = vmatpush1.bf16.msra.mxu0 0
    %1189 = vmatprep.subr.bf16.mxu0 0
    %1190 = vmatpush1.bf16.msra.mxu0 0
    %1191 = vmatprep.subr.bf16.mxu0 0
    %1192 = vmatpush1.bf16.msra.mxu0 0
    %1193 = vmatprep.subr.bf16.mxu0 0
    %1194 = vmatpush1.bf16.msra.mxu0 0
    %1195 = vmatprep.subr.bf16.mxu0 0
    %1196 = vmatpush1.bf16.msra.mxu0 0
    %1197 = vmatprep.mubr.bf16.mxu0 0
    %1198 = vmatmul.mubr.bf16.gmra.mrb[0].mxu0 %v679
    %v1199 = vpop.f32.mrb[0].mxu0
    %v1200 = vadd.f32 %v187, %v1199
    %v1201 = vpop.f32.mrb[0].mxu0
    %v1202 = vadd.f32 %v191, %v1201
    %v1203 = vpop.f32.mrb[0].mxu0
    %v1204 = vadd.f32 %v187, %v1203
    %v1205 = vpop.f32.mrb[0].mxu0
    %v1206 = vadd.f32 %v191, %v1205
    %1207 = vdwg.mxu0
    %1208 = vmatprep.subr.bf16.mxu0 %v538
    %1209 = vmatpush1.bf16.msra.mxu0 %v537
    %1210 = vmatprep.subr.bf16.mxu0 %v570
    %1211 = vmatpush1.bf16.msra.mxu0 %v569
    %1212 = vmatprep.subr.bf16.mxu0 %v746
    %1213 = vmatpush1.bf16.msra.mxu0 %v743
    %1214 = vmatprep.subr.bf16.mxu0 0
    %1215 = vmatpush1.bf16.msra.mxu0 0
    %1216 = vmatprep.subr.bf16.mxu0 0
    %1217 = vmatpush1.bf16.msra.mxu0 0
    %1218 = vmatprep.subr.bf16.mxu0 0
    %1219 = vmatpush1.bf16.msra.mxu0 0
    %1220 = vmatprep.subr.bf16.mxu0 0
    %1221 = vmatpush1.bf16.msra.mxu0 0
    %1222 = vmatprep.subr.bf16.mxu0 0
    %1223 = vmatpush1.bf16.msra.mxu0 0
    %1224 = vmatprep.subr.bf16.mxu0 0
    %1225 = vmatpush1.bf16.msra.mxu0 0
    %1226 = vmatprep.subr.bf16.mxu0 0
    %1227 = vmatpush1.bf16.msra.mxu0 0
    %1228 = vmatprep.subr.bf16.mxu0 0
    %1229 = vmatpush1.bf16.msra.mxu0 0
    %1230 = vmatprep.subr.bf16.mxu0 0
    %1231 = vmatpush1.bf16.msra.mxu0 0
    %1232 = vmatprep.subr.bf16.mxu0 0
    %1233 = vmatpush1.bf16.msra.mxu0 0
    %1234 = vmatprep.subr.bf16.mxu0 0
    %1235 = vmatpush1.bf16.msra.mxu0 0
    %1236 = vmatprep.subr.bf16.mxu0 0
    %1237 = vmatpush1.bf16.msra.mxu0 0
    %1238 = vmatprep.subr.bf16.mxu0 0
    %1239 = vmatpush1.bf16.msra.mxu0 0
    %1240 = vmatprep.mubr.bf16.mxu0 0
    %1241 = vmatmul.mubr.bf16.gmra.mrb[0].mxu0 %v679
    %v1242 = vpop.f32.mrb[0].mxu0
    %v1243 = vadd.f32 %v195, %v1242
    %v1244 = vpop.f32.mrb[0].mxu0
    %v1245 = vadd.f32 %v199, %v1244
    %v1246 = vpop.f32.mrb[0].mxu0
    %v1247 = vadd.f32 %v195, %v1246
    %v1248 = vpop.f32.mrb[0].mxu0
    %v1249 = vadd.f32 %v199, %v1248
    %1250 = vdwg.mxu0
    %1251 = vmatprep.subr.bf16.mxu0 %v540
    %1252 = vmatpush1.bf16.msra.mxu0 %v539
    %1253 = vmatprep.subr.bf16.mxu0 %v572
    %1254 = vmatpush1.bf16.msra.mxu0 %v571
    %1255 = vmatprep.subr.bf16.mxu0 %v752
    %1256 = vmatpush1.bf16.msra.mxu0 %v749
    %1257 = vmatprep.subr.bf16.mxu0 0
    %1258 = vmatpush1.bf16.msra.mxu0 0
    %1259 = vmatprep.subr.bf16.mxu0 0
    %1260 = vmatpush1.bf16.msra.mxu0 0
    %1261 = vmatprep.subr.bf16.mxu0 0
    %1262 = vmatpush1.bf16.msra.mxu0 0
    %1263 = vmatprep.subr.bf16.mxu0 0
    %1264 = vmatpush1.bf16.msra.mxu0 0
    %1265 = vmatprep.subr.bf16.mxu0 0
    %1266 = vmatpush1.bf16.msra.mxu0 0
    %1267 = vmatprep.subr.bf16.mxu0 0
    %1268 = vmatpush1.bf16.msra.mxu0 0
    %1269 = vmatprep.subr.bf16.mxu0 0
    %1270 = vmatpush1.bf16.msra.mxu0 0
    %1271 = vmatprep.subr.bf16.mxu0 0
    %1272 = vmatpush1.bf16.msra.mxu0 0
    %1273 = vmatprep.subr.bf16.mxu0 0
    %1274 = vmatpush1.bf16.msra.mxu0 0
    %1275 = vmatprep.subr.bf16.mxu0 0
    %1276 = vmatpush1.bf16.msra.mxu0 0
    %1277 = vmatprep.subr.bf16.mxu0 0
    %1278 = vmatpush1.bf16.msra.mxu0 0
    %1279 = vmatprep.subr.bf16.mxu0 0
    %1280 = vmatpush1.bf16.msra.mxu0 0
    %1281 = vmatprep.subr.bf16.mxu0 0
    %1282 = vmatpush1.bf16.msra.mxu0 0
    %1283 = vmatprep.mubr.bf16.mxu0 0
    %1284 = vmatmul.mubr.bf16.gmra.mrb[0].mxu0 %v679
    %v1285 = vpop.f32.mrb[0].mxu0
    %v1286 = vadd.f32 %v203, %v1285
    %v1287 = vpop.f32.mrb[0].mxu0
    %v1288 = vadd.f32 %v207, %v1287
    %v1289 = vpop.f32.mrb[0].mxu0
    %v1290 = vadd.f32 %v203, %v1289
    %v1291 = vpop.f32.mrb[0].mxu0
    %v1292 = vadd.f32 %v207, %v1291
    %1293 = vdwg.mxu0
    %1294 = vmatprep.subr.bf16.mxu0 %v542
    %1295 = vmatpush1.bf16.msra.mxu0 %v541
    %1296 = vmatprep.subr.bf16.mxu0 %v574
    %1297 = vmatpush1.bf16.msra.mxu0 %v573
    %1298 = vmatprep.subr.bf16.mxu0 %v758
    %1299 = vmatpush1.bf16.msra.mxu0 %v755
    %1300 = vmatprep.subr.bf16.mxu0 0
    %1301 = vmatpush1.bf16.msra.mxu0 0
    %1302 = vmatprep.subr.bf16.mxu0 0
    %1303 = vmatpush1.bf16.msra.mxu0 0
    %1304 = vmatprep.subr.bf16.mxu0 0
    %1305 = vmatpush1.bf16.msra.mxu0 0
    %1306 = vmatprep.subr.bf16.mxu0 0
    %1307 = vmatpush1.bf16.msra.mxu0 0
    %1308 = vmatprep.subr.bf16.mxu0 0
    %1309 = vmatpush1.bf16.msra.mxu0 0
    %1310 = vmatprep.subr.bf16.mxu0 0
    %1311 = vmatpush1.bf16.msra.mxu0 0
    %1312 = vmatprep.subr.bf16.mxu0 0
    %1313 = vmatpush1.bf16.msra.mxu0 0
    %1314 = vmatprep.subr.bf16.mxu0 0
    %1315 = vmatpush1.bf16.msra.mxu0 0
    %1316 = vmatprep.subr.bf16.mxu0 0
    %1317 = vmatpush1.bf16.msra.mxu0 0
    %1318 = vmatprep.subr.bf16.mxu0 0
    %1319 = vmatpush1.bf16.msra.mxu0 0
    %1320 = vmatprep.subr.bf16.mxu0 0
    %1321 = vmatpush1.bf16.msra.mxu0 0
    %1322 = vmatprep.subr.bf16.mxu0 0
    %1323 = vmatpush1.bf16.msra.mxu0 0
    %1324 = vmatprep.subr.bf16.mxu0 0
    %1325 = vmatpush1.bf16.msra.mxu0 0
    %1326 = vmatprep.mubr.bf16.mxu0 0
    %1327 = vmatmul.mubr.bf16.gmra.mrb[0].mxu0 %v679
    %v1328 = vpop.f32.mrb[0].mxu0
    %v1329 = vadd.f32 %v211, %v1328
    %v1330 = vpop.f32.mrb[0].mxu0
    %v1331 = vadd.f32 %v215, %v1330
    %v1332 = vpop.f32.mrb[0].mxu0
    %v1333 = vadd.f32 %v211, %v1332
    %v1334 = vpop.f32.mrb[0].mxu0
    %v1335 = vadd.f32 %v215, %v1334
    %1336 = vdwg.mxu0
    %1337 = vmatprep.subr.bf16.mxu0 %v544
    %1338 = vmatpush1.bf16.msra.mxu0 %v543
    %1339 = vmatprep.subr.bf16.mxu0 %v576
    %1340 = vmatpush1.bf16.msra.mxu0 %v575
    %1341 = vmatprep.subr.bf16.mxu0 %v764
    %1342 = vmatpush1.bf16.msra.mxu0 %v761
    %1343 = vmatprep.subr.bf16.mxu0 0
    %1344 = vmatpush1.bf16.msra.mxu0 0
    %1345 = vmatprep.subr.bf16.mxu0 0
    %1346 = vmatpush1.bf16.msra.mxu0 0
    %1347 = vmatprep.subr.bf16.mxu0 0
    %1348 = vmatpush1.bf16.msra.mxu0 0
    %1349 = vmatprep.subr.bf16.mxu0 0
    %1350 = vmatpush1.bf16.msra.mxu0 0
    %1351 = vmatprep.subr.bf16.mxu0 0
    %1352 = vmatpush1.bf16.msra.mxu0 0
    %1353 = vmatprep.subr.bf16.mxu0 0
    %1354 = vmatpush1.bf16.msra.mxu0 0
    %1355 = vmatprep.subr.bf16.mxu0 0
    %1356 = vmatpush1.bf16.msra.mxu0 0
    %1357 = vmatprep.subr.bf16.mxu0 0
    %1358 = vmatpush1.bf16.msra.mxu0 0
    %1359 = vmatprep.subr.bf16.mxu0 0
    %1360 = vmatpush1.bf16.msra.mxu0 0
    %1361 = vmatprep.subr.bf16.mxu0 0
    %1362 = vmatpush1.bf16.msra.mxu0 0
    %1363 = vmatprep.subr.bf16.mxu0 0
    %1364 = vmatpush1.bf16.msra.mxu0 0
    %1365 = vmatprep.subr.bf16.mxu0 0
    %1366 = vmatpush1.bf16.msra.mxu0 0
    %1367 = vmatprep.subr.bf16.mxu0 0
    %1368 = vmatpush1.bf16.msra.mxu0 0
    %1369 = vmatprep.mubr.bf16.mxu0 0
    %1370 = vmatmul.mubr.bf16.gmra.mrb[0].mxu0 %v679
    %v1371 = vpop.f32.mrb[0].mxu0
    %v1372 = vadd.f32 %v219, %v1371
    %v1373 = vpop.f32.mrb[0].mxu0
    %v1374 = vadd.f32 %v223, %v1373
    %v1375 = vpop.f32.mrb[0].mxu0
    %v1376 = vadd.f32 %v219, %v1375
    %v1377 = vpop.f32.mrb[0].mxu0
    %v1378 = vadd.f32 %v223, %v1377
    %1379 = vdwg.mxu0
    %1380 = vmatprep.subr.bf16.mxu0 %v546
    %1381 = vmatpush1.bf16.msra.mxu0 %v545
    %1382 = vmatprep.subr.bf16.mxu0 %v578
    %1383 = vmatpush1.bf16.msra.mxu0 %v577
    %1384 = vmatprep.subr.bf16.mxu0 %v770
    %1385 = vmatpush1.bf16.msra.mxu0 %v767
    %1386 = vmatprep.subr.bf16.mxu0 0
    %1387 = vmatpush1.bf16.msra.mxu0 0
    %1388 = vmatprep.subr.bf16.mxu0 0
    %1389 = vmatpush1.bf16.msra.mxu0 0
    %1390 = vmatprep.subr.bf16.mxu0 0
    %1391 = vmatpush1.bf16.msra.mxu0 0
    %1392 = vmatprep.subr.bf16.mxu0 0
    %1393 = vmatpush1.bf16.msra.mxu0 0
    %1394 = vmatprep.subr.bf16.mxu0 0
    %1395 = vmatpush1.bf16.msra.mxu0 0
    %1396 = vmatprep.subr.bf16.mxu0 0
    %1397 = vmatpush1.bf16.msra.mxu0 0
    %1398 = vmatprep.subr.bf16.mxu0 0
    %1399 = vmatpush1.bf16.msra.mxu0 0
    %1400 = vmatprep.subr.bf16.mxu0 0
    %1401 = vmatpush1.bf16.msra.mxu0 0
    %1402 = vmatprep.subr.bf16.mxu0 0
    %1403 = vmatpush1.bf16.msra.mxu0 0
    %1404 = vmatprep.subr.bf16.mxu0 0
    %1405 = vmatpush1.bf16.msra.mxu0 0
    %1406 = vmatprep.subr.bf16.mxu0 0
    %1407 = vmatpush1.bf16.msra.mxu0 0
    %1408 = vmatprep.subr.bf16.mxu0 0
    %1409 = vmatpush1.bf16.msra.mxu0 0
    %1410 = vmatprep.subr.bf16.mxu0 0
    %1411 = vmatpush1.bf16.msra.mxu0 0
    %1412 = vmatprep.mubr.bf16.mxu0 0
    %1413 = vmatmul.mubr.bf16.gmra.mrb[0].mxu0 %v679
    %v1414 = vpop.f32.mrb[0].mxu0
    %v1415 = vadd.f32 %v227, %v1414
    %v1416 = vpop.f32.mrb[0].mxu0
    %v1417 = vadd.f32 %v231, %v1416
    %v1418 = vpop.f32.mrb[0].mxu0
    %v1419 = vadd.f32 %v227, %v1418
    %v1420 = vpop.f32.mrb[0].mxu0
    %v1421 = vadd.f32 %v231, %v1420
    %1422 = vdwg.mxu0
    %1423 = vmatprep.subr.bf16.mxu0 %v548
    %1424 = vmatpush1.bf16.msra.mxu0 %v547
    %1425 = vmatprep.subr.bf16.mxu0 %v580
    %1426 = vmatpush1.bf16.msra.mxu0 %v579
    %1427 = vmatprep.subr.bf16.mxu0 %v776
    %1428 = vmatpush1.bf16.msra.mxu0 %v773
    %1429 = vmatprep.subr.bf16.mxu0 0
    %1430 = vmatpush1.bf16.msra.mxu0 0
    %1431 = vmatprep.subr.bf16.mxu0 0
    %1432 = vmatpush1.bf16.msra.mxu0 0
    %1433 = vmatprep.subr.bf16.mxu0 0
    %1434 = vmatpush1.bf16.msra.mxu0 0
    %1435 = vmatprep.subr.bf16.mxu0 0
    %1436 = vmatpush1.bf16.msra.mxu0 0
    %1437 = vmatprep.subr.bf16.mxu0 0
    %1438 = vmatpush1.bf16.msra.mxu0 0
    %1439 = vmatprep.subr.bf16.mxu0 0
    %1440 = vmatpush1.bf16.msra.mxu0 0
    %1441 = vmatprep.subr.bf16.mxu0 0
    %1442 = vmatpush1.bf16.msra.mxu0 0
    %1443 = vmatprep.subr.bf16.mxu0 0
    %1444 = vmatpush1.bf16.msra.mxu0 0
    %1445 = vmatprep.subr.bf16.mxu0 0
    %1446 = vmatpush1.bf16.msra.mxu0 0
    %1447 = vmatprep.subr.bf16.mxu0 0
    %1448 = vmatpush1.bf16.msra.mxu0 0
    %1449 = vmatprep.subr.bf16.mxu0 0
    %1450 = vmatpush1.bf16.msra.mxu0 0
    %1451 = vmatprep.subr.bf16.mxu0 0
    %1452 = vmatpush1.bf16.msra.mxu0 0
    %1453 = vmatprep.subr.bf16.mxu0 0
    %1454 = vmatpush1.bf16.msra.mxu0 0
    %1455 = vmatprep.mubr.bf16.mxu0 0
    %1456 = vmatmul.mubr.bf16.gmra.mrb[0].mxu0 %v679
    %v1457 = vpop.f32.mrb[0].mxu0
    %v1458 = vadd.f32 %v235, %v1457
    %v1459 = vpop.f32.mrb[0].mxu0
    %v1460 = vadd.f32 %v239, %v1459
    %v1461 = vpop.f32.mrb[0].mxu0
    %v1462 = vadd.f32 %v235, %v1461
    %v1463 = vpop.f32.mrb[0].mxu0
    %v1464 = vadd.f32 %v239, %v1463
    %1465 = vdwg.mxu0
    %v1466 = vmul.f32 %v813, 0.01
    %v1467 = vmul.f32 %v815, 0.01
    %v1468 = vmul.f32 %v856, 0.01
    %v1469 = vmul.f32 %v858, 0.01
    %v1470 = vmul.f32 %v899, 0.01
    %v1471 = vmul.f32 %v901, 0.01
    %v1472 = vmul.f32 %v942, 0.01
    %v1473 = vmul.f32 %v944, 0.01
    %v1474 = vmul.f32 %v985, 0.01
    %v1475 = vmul.f32 %v987, 0.01
    %v1476 = vmul.f32 %v1028, 0.01
    %v1477 = vmul.f32 %v1030, 0.01
    %v1478 = vmul.f32 %v1071, 0.01
    %v1479 = vmul.f32 %v1073, 0.01
    %v1480 = vmul.f32 %v1114, 0.01
    %v1481 = vmul.f32 %v1116, 0.01
    %v1482 = vmul.f32 %v1157, 0.01
    %v1483 = vmul.f32 %v1159, 0.01
    %v1484 = vmul.f32 %v1200, 0.01
    %v1485 = vmul.f32 %v1202, 0.01
    %v1486 = vmul.f32 %v1243, 0.01
    %v1487 = vmul.f32 %v1245, 0.01
    %v1488 = vmul.f32 %v1286, 0.01
    %v1489 = vmul.f32 %v1288, 0.01
    %v1490 = vmul.f32 %v1329, 0.01
    %v1491 = vmul.f32 %v1331, 0.01
    %v1492 = vmul.f32 %v1372, 0.01
    %v1493 = vmul.f32 %v1374, 0.01
    %v1494 = vmul.f32 %v1415, 0.01
    %v1495 = vmul.f32 %v1417, 0.01
    %v1496 = vmul.f32 %v1458, 0.01
    %v1497 = vmul.f32 %v1460, 0.01
    %v1498 = vmul.f32 %v817, 0.01
    %v1499 = vmul.f32 %v819, 0.01
    %v1500 = vmul.f32 %v860, 0.01
    %v1501 = vmul.f32 %v862, 0.01
    %v1502 = vmul.f32 %v903, 0.01
    %v1503 = vmul.f32 %v905, 0.01
    %v1504 = vmul.f32 %v946, 0.01
    %v1505 = vmul.f32 %v948, 0.01
    %v1506 = vmul.f32 %v989, 0.01
    %v1507 = vmul.f32 %v991, 0.01
    %v1508 = vmul.f32 %v1032, 0.01
    %v1509 = vmul.f32 %v1034, 0.01
    %v1510 = vmul.f32 %v1075, 0.01
    %v1511 = vmul.f32 %v1077, 0.01
    %v1512 = vmul.f32 %v1118, 0.01
    %v1513 = vmul.f32 %v1120, 0.01
    %v1514 = vmul.f32 %v1161, 0.01
    %v1515 = vmul.f32 %v1163, 0.01
    %v1516 = vmul.f32 %v1204, 0.01
    %v1517 = vmul.f32 %v1206, 0.01
    %v1518 = vmul.f32 %v1247, 0.01
    %v1519 = vmul.f32 %v1249, 0.01
    %v1520 = vmul.f32 %v1290, 0.01
    %v1521 = vmul.f32 %v1292, 0.01
    %v1522 = vmul.f32 %v1333, 0.01
    %v1523 = vmul.f32 %v1335, 0.01
    %v1524 = vmul.f32 %v1376, 0.01
    %v1525 = vmul.f32 %v1378, 0.01
    %v1526 = vmul.f32 %v1419, 0.01
    %v1527 = vmul.f32 %v1421, 0.01
    %v1528 = vmul.f32 %v1462, 0.01
    %v1529 = vmul.f32 %v1464, 0.01
    %v1530 = vmax.f32 %v813, %v1466
    %v1531 = vmax.f32 %v815, %v1467
    %v1532 = vmax.f32 %v856, %v1468
    %v1533 = vmax.f32 %v858, %v1469
    %v1534 = vmax.f32 %v899, %v1470
    %v1535 = vmax.f32 %v901, %v1471
    %v1536 = vmax.f32 %v942, %v1472
    %v1537 = vmax.f32 %v944, %v1473
    %v1538 = vmax.f32 %v985, %v1474
    %v1539 = vmax.f32 %v987, %v1475
    %v1540 = vmax.f32 %v1028, %v1476
    %v1541 = vmax.f32 %v1030, %v1477
    %v1542 = vmax.f32 %v1071, %v1478
    %v1543 = vmax.f32 %v1073, %v1479
    %v1544 = vmax.f32 %v1114, %v1480
    %v1545 = vmax.f32 %v1116, %v1481
    %v1546 = vmax.f32 %v1157, %v1482
    %v1547 = vmax.f32 %v1159, %v1483
    %v1548 = vmax.f32 %v1200, %v1484
    %v1549 = vmax.f32 %v1202, %v1485
    %v1550 = vmax.f32 %v1243, %v1486
    %v1551 = vmax.f32 %v1245, %v1487
    %v1552 = vmax.f32 %v1286, %v1488
    %v1553 = vmax.f32 %v1288, %v1489
    %v1554 = vmax.f32 %v1329, %v1490
    %v1555 = vmax.f32 %v1331, %v1491
    %v1556 = vmax.f32 %v1372, %v1492
    %v1557 = vmax.f32 %v1374, %v1493
    %v1558 = vmax.f32 %v1415, %v1494
    %v1559 = vmax.f32 %v1417, %v1495
    %v1560 = vmax.f32 %v1458, %v1496
    %v1561 = vmax.f32 %v1460, %v1497
    %v1562 = vmax.f32 %v817, %v1498
    %v1563 = vmax.f32 %v819, %v1499
    %v1564 = vmax.f32 %v860, %v1500
    %v1565 = vmax.f32 %v862, %v1501
    %v1566 = vmax.f32 %v903, %v1502
    %v1567 = vmax.f32 %v905, %v1503
    %v1568 = vmax.f32 %v946, %v1504
    %v1569 = vmax.f32 %v948, %v1505
    %v1570 = vmax.f32 %v989, %v1506
    %v1571 = vmax.f32 %v991, %v1507
    %v1572 = vmax.f32 %v1032, %v1508
    %v1573 = vmax.f32 %v1034, %v1509
    %v1574 = vmax.f32 %v1075, %v1510
    %v1575 = vmax.f32 %v1077, %v1511
    %v1576 = vmax.f32 %v1118, %v1512
    %v1577 = vmax.f32 %v1120, %v1513
    %v1578 = vmax.f32 %v1161, %v1514
    %v1579 = vmax.f32 %v1163, %v1515
    %v1580 = vmax.f32 %v1204, %v1516
    %v1581 = vmax.f32 %v1206, %v1517
    %v1582 = vmax.f32 %v1247, %v1518
    %v1583 = vmax.f32 %v1249, %v1519
    %v1584 = vmax.f32 %v1290, %v1520
    %v1585 = vmax.f32 %v1292, %v1521
    %v1586 = vmax.f32 %v1333, %v1522
    %v1587 = vmax.f32 %v1335, %v1523
    %v1588 = vmax.f32 %v1376, %v1524
    %v1589 = vmax.f32 %v1378, %v1525
    %v1590 = vmax.f32 %v1419, %v1526
    %v1591 = vmax.f32 %v1421, %v1527
    %v1592 = vmax.f32 %v1462, %v1528
    %v1593 = vmax.f32 %v1464, %v1529
    %v1594 = vpack.c.bf16 %v1562, %v1530
    %v1595 = vpack.c.bf16 %v1563, %v1531
    %v1596 = vpack.c.bf16 %v1564, %v1532
    %v1597 = vpack.c.bf16 %v1565, %v1533
    %v1598 = vpack.c.bf16 %v1566, %v1534
    %v1599 = vpack.c.bf16 %v1567, %v1535
    %v1600 = vpack.c.bf16 %v1568, %v1536
    %v1601 = vpack.c.bf16 %v1569, %v1537
    %v1602 = vpack.c.bf16 %v1570, %v1538
    %v1603 = vpack.c.bf16 %v1571, %v1539
    %v1604 = vpack.c.bf16 %v1572, %v1540
    %v1605 = vpack.c.bf16 %v1573, %v1541
    %v1606 = vpack.c.bf16 %v1574, %v1542
    %v1607 = vpack.c.bf16 %v1575, %v1543
    %v1608 = vpack.c.bf16 %v1576, %v1544
    %v1609 = vpack.c.bf16 %v1577, %v1545
    %v1610 = vpack.c.bf16 %v1578, %v1546
    %v1611 = vpack.c.bf16 %v1579, %v1547
    %v1612 = vpack.c.bf16 %v1580, %v1548
    %v1613 = vpack.c.bf16 %v1581, %v1549
    %v1614 = vpack.c.bf16 %v1582, %v1550
    %v1615 = vpack.c.bf16 %v1583, %v1551
    %v1616 = vpack.c.bf16 %v1584, %v1552
    %v1617 = vpack.c.bf16 %v1585, %v1553
    %v1618 = vpack.c.bf16 %v1586, %v1554
    %v1619 = vpack.c.bf16 %v1587, %v1555
    %v1620 = vpack.c.bf16 %v1588, %v1556
    %v1621 = vpack.c.bf16 %v1589, %v1557
    %v1622 = vpack.c.bf16 %v1590, %v1558
    %v1623 = vpack.c.bf16 %v1591, %v1559
    %v1624 = vpack.c.bf16 %v1592, %v1560
    %v1625 = vpack.c.bf16 %v1593, %v1561
    %v1626 = vld [vmem:[%s3] sm:$0xf]
    %v1627 = vld [vmem:[%s3 + $0x4] sm:$0xf]
    %v1628 = vld [vmem:[%s3 + $0x8] sm:$0xf]
    %v1629 = vld [vmem:[%s3 + $0xc] sm:$0xf]
    %v1630 = vld [vmem:[%s3 + $0x10] sm:$0xf]
    %v1631 = vld [vmem:[%s3 + $0x14] sm:$0xf]
    %v1632 = vld [vmem:[%s3 + $0x18] sm:$0xf]
    %v1633 = vld [vmem:[%s3 + $0x1c] sm:$0xf]
    %v1634 = vld [vmem:[%s3 + $0x20] sm:$0xf]
    %v1635 = vld [vmem:[%s3 + $0x24] sm:$0xf]
    %v1636 = vld [vmem:[%s3 + $0x28] sm:$0xf]
    %v1637 = vld [vmem:[%s3 + $0x2c] sm:$0xf]
    %v1638 = vld [vmem:[%s3 + $0x30] sm:$0xf]
    %v1639 = vld [vmem:[%s3 + $0x34] sm:$0xf]
    %v1640 = vld [vmem:[%s3 + $0x38] sm:$0xf]
    %v1641 = vld [vmem:[%s3 + $0x3c] sm:$0xf]
    %v1642 = vld [vmem:[%s3 + $0x40] sm:$0xf]
    %v1643 = vld [vmem:[%s3 + $0x44] sm:$0xf]
    %v1644 = vld [vmem:[%s3 + $0x48] sm:$0xf]
    %v1645 = vld [vmem:[%s3 + $0x4c] sm:$0xf]
    %v1646 = vld [vmem:[%s3 + $0x50] sm:$0xf]
    %v1647 = vld [vmem:[%s3 + $0x54] sm:$0xf]
    %v1648 = vld [vmem:[%s3 + $0x58] sm:$0xf]
    %v1649 = vld [vmem:[%s3 + $0x5c] sm:$0xf]
    %v1650 = vld [vmem:[%s3 + $0x60] sm:$0xf]
    %v1651 = vld [vmem:[%s3 + $0x64] sm:$0xf]
    %v1652 = vld [vmem:[%s3 + $0x68] sm:$0xf]
    %v1653 = vld [vmem:[%s3 + $0x6c] sm:$0xf]
    %v1654 = vld [vmem:[%s3 + $0x70] sm:$0xf]
    %v1655 = vld [vmem:[%s3 + $0x74] sm:$0xf]
    %v1656 = vld [vmem:[%s3 + $0x78] sm:$0xf]
    %v1657 = vld [vmem:[%s3 + $0x7c] sm:$0xf]
    %v1658 = vld [vmem:[%s3 + $0x80] sm:$0xf]
    %v1659 = vld [vmem:[%s3 + $0x84] sm:$0xf]
    %v1660 = vld [vmem:[%s3 + $0x88] sm:$0xf]
    %v1661 = vld [vmem:[%s3 + $0x8c] sm:$0xf]
    %v1662 = vld [vmem:[%s3 + $0x90] sm:$0xf]
    %v1663 = vld [vmem:[%s3 + $0x94] sm:$0xf]
    %v1664 = vld [vmem:[%s3 + $0x98] sm:$0xf]
    %v1665 = vld [vmem:[%s3 + $0x9c] sm:$0xf]
    %v1666 = vld [vmem:[%s3 + $0xa0] sm:$0xf]
    %v1667 = vld [vmem:[%s3 + $0xa4] sm:$0xf]
    %v1668 = vld [vmem:[%s3 + $0xa8] sm:$0xf]
    %v1669 = vld [vmem:[%s3 + $0xac] sm:$0xf]
    %v1670 = vld [vmem:[%s3 + $0xb0] sm:$0xf]
    %v1671 = vld [vmem:[%s3 + $0xb4] sm:$0xf]
    %v1672 = vld [vmem:[%s3 + $0xb8] sm:$0xf]
    %v1673 = vld [vmem:[%s3 + $0xbc] sm:$0xf]
    %v1674 = vld [vmem:[%s3 + $0xc0] sm:$0xf]
    %v1675 = vld [vmem:[%s3 + $0xc4] sm:$0xf]
    %v1676 = vld [vmem:[%s3 + $0xc8] sm:$0xf]
    %v1677 = vld [vmem:[%s3 + $0xcc] sm:$0xf]
    %v1678 = vld [vmem:[%s3 + $0xd0] sm:$0xf]
    %v1679 = vld [vmem:[%s3 + $0xd4] sm:$0xf]
    %v1680 = vld [vmem:[%s3 + $0xd8] sm:$0xf]
    %v1681 = vld [vmem:[%s3 + $0xdc] sm:$0xf]
    %v1682 = vld [vmem:[%s3 + $0xe0] sm:$0xf]
    %v1683 = vld [vmem:[%s3 + $0xe4] sm:$0xf]
    %v1684 = vld [vmem:[%s3 + $0xe8] sm:$0xf]
    %v1685 = vld [vmem:[%s3 + $0xec] sm:$0xf]
    %v1686 = vld [vmem:[%s3 + $0xf0] sm:$0xf]
    %v1687 = vld [vmem:[%s3 + $0xf4] sm:$0xf]
    %v1688 = vld [vmem:[%s3 + $0xf8] sm:$0xf]
    %v1689 = vld [vmem:[%s3 + $0xfc] sm:$0xf]
    %v1690 = vld [vmem:[%s3 + $0x100] sm:$0xf]
    %v1691 = vld [vmem:[%s3 + $0x104] sm:$0xf]
    %v1692 = vld [vmem:[%s3 + $0x108] sm:$0xf]
    %v1693 = vld [vmem:[%s3 + $0x10c] sm:$0xf]
    %v1694 = vld [vmem:[%s3 + $0x110] sm:$0xf]
    %v1695 = vld [vmem:[%s3 + $0x114] sm:$0xf]
    %v1696 = vld [vmem:[%s3 + $0x118] sm:$0xf]
    %v1697 = vld [vmem:[%s3 + $0x11c] sm:$0xf]
    %v1698 = vld [vmem:[%s3 + $0x120] sm:$0xf]
    %v1699 = vld [vmem:[%s3 + $0x124] sm:$0xf]
    %v1700 = vld [vmem:[%s3 + $0x128] sm:$0xf]
    %v1701 = vld [vmem:[%s3 + $0x12c] sm:$0xf]
    %v1702 = vld [vmem:[%s3 + $0x130] sm:$0xf]
    %v1703 = vld [vmem:[%s3 + $0x134] sm:$0xf]
    %v1704 = vld [vmem:[%s3 + $0x138] sm:$0xf]
    %v1705 = vld [vmem:[%s3 + $0x13c] sm:$0xf]
    %v1706 = vld [vmem:[%s3 + $0x140] sm:$0xf]
    %v1707 = vld [vmem:[%s3 + $0x144] sm:$0xf]
    %v1708 = vld [vmem:[%s3 + $0x148] sm:$0xf]
    %v1709 = vld [vmem:[%s3 + $0x14c] sm:$0xf]
    %v1710 = vld [vmem:[%s3 + $0x150] sm:$0xf]
    %v1711 = vld [vmem:[%s3 + $0x154] sm:$0xf]
    %v1712 = vld [vmem:[%s3 + $0x158] sm:$0xf]
    %v1713 = vld [vmem:[%s3 + $0x15c] sm:$0xf]
    %v1714 = vld [vmem:[%s3 + $0x160] sm:$0xf]
    %v1715 = vld [vmem:[%s3 + $0x164] sm:$0xf]
    %v1716 = vld [vmem:[%s3 + $0x168] sm:$0xf]
    %v1717 = vld [vmem:[%s3 + $0x16c] sm:$0xf]
    %v1718 = vld [vmem:[%s3 + $0x170] sm:$0xf]
    %v1719 = vld [vmem:[%s3 + $0x174] sm:$0xf]
    %v1720 = vld [vmem:[%s3 + $0x178] sm:$0xf]
    %v1721 = vld [vmem:[%s3 + $0x17c] sm:$0xf]
    %v1722 = vld [vmem:[%s3 + $0x180] sm:$0xf]
    %v1723 = vld [vmem:[%s3 + $0x184] sm:$0xf]
    %v1724 = vld [vmem:[%s3 + $0x188] sm:$0xf]
    %v1725 = vld [vmem:[%s3 + $0x18c] sm:$0xf]
    %v1726 = vld [vmem:[%s3 + $0x190] sm:$0xf]
    %v1727 = vld [vmem:[%s3 + $0x194] sm:$0xf]
    %v1728 = vld [vmem:[%s3 + $0x198] sm:$0xf]
    %v1729 = vld [vmem:[%s3 + $0x19c] sm:$0xf]
    %v1730 = vld [vmem:[%s3 + $0x1a0] sm:$0xf]
    %v1731 = vld [vmem:[%s3 + $0x1a4] sm:$0xf]
    %v1732 = vld [vmem:[%s3 + $0x1a8] sm:$0xf]
    %v1733 = vld [vmem:[%s3 + $0x1ac] sm:$0xf]
    %v1734 = vld [vmem:[%s3 + $0x1b0] sm:$0xf]
    %v1735 = vld [vmem:[%s3 + $0x1b4] sm:$0xf]
    %v1736 = vld [vmem:[%s3 + $0x1b8] sm:$0xf]
    %v1737 = vld [vmem:[%s3 + $0x1bc] sm:$0xf]
    %v1738 = vld [vmem:[%s3 + $0x1c0] sm:$0xf]
    %v1739 = vld [vmem:[%s3 + $0x1c4] sm:$0xf]
    %v1740 = vld [vmem:[%s3 + $0x1c8] sm:$0xf]
    %v1741 = vld [vmem:[%s3 + $0x1cc] sm:$0xf]
    %v1742 = vld [vmem:[%s3 + $0x1d0] sm:$0xf]
    %v1743 = vld [vmem:[%s3 + $0x1d4] sm:$0xf]
    %v1744 = vld [vmem:[%s3 + $0x1d8] sm:$0xf]
    %v1745 = vld [vmem:[%s3 + $0x1dc] sm:$0xf]
    %v1746 = vld [vmem:[%s3 + $0x1e0] sm:$0xf]
    %v1747 = vld [vmem:[%s3 + $0x1e4] sm:$0xf]
    %v1748 = vld [vmem:[%s3 + $0x1e8] sm:$0xf]
    %v1749 = vld [vmem:[%s3 + $0x1ec] sm:$0xf]
    %v1750 = vld [vmem:[%s3 + $0x1f0] sm:$0xf]
    %v1751 = vld [vmem:[%s3 + $0x1f4] sm:$0xf]
    %v1752 = vld [vmem:[%s3 + $0x1f8] sm:$0xf]
    %v1753 = vld [vmem:[%s3 + $0x1fc] sm:$0xf]
    %v1754 = vld [vmem:[%s3 + $0x200] sm:$0xf]
    %v1755 = vld [vmem:[%s3 + $0x204] sm:$0xf]
    %v1756 = vld [vmem:[%s3 + $0x208] sm:$0xf]
    %v1757 = vld [vmem:[%s3 + $0x20c] sm:$0xf]
    %v1758 = vld [vmem:[%s3 + $0x210] sm:$0xf]
    %v1759 = vld [vmem:[%s3 + $0x214] sm:$0xf]
    %v1760 = vld [vmem:[%s3 + $0x218] sm:$0xf]
    %v1761 = vld [vmem:[%s3 + $0x21c] sm:$0xf]
    %v1762 = vld [vmem:[%s3 + $0x220] sm:$0xf]
    %v1763 = vld [vmem:[%s3 + $0x224] sm:$0xf]
    %v1764 = vld [vmem:[%s3 + $0x228] sm:$0xf]
    %v1765 = vld [vmem:[%s3 + $0x22c] sm:$0xf]
    %v1766 = vld [vmem:[%s3 + $0x230] sm:$0xf]
    %v1767 = vld [vmem:[%s3 + $0x234] sm:$0xf]
    %v1768 = vld [vmem:[%s3 + $0x238] sm:$0xf]
    %v1769 = vld [vmem:[%s3 + $0x23c] sm:$0xf]
    %v1770 = vld [vmem:[%s3 + $0x240] sm:$0xf]
    %v1771 = vld [vmem:[%s3 + $0x244] sm:$0xf]
    %v1772 = vld [vmem:[%s3 + $0x248] sm:$0xf]
    %v1773 = vld [vmem:[%s3 + $0x24c] sm:$0xf]
    %v1774 = vld [vmem:[%s3 + $0x250] sm:$0xf]
    %v1775 = vld [vmem:[%s3 + $0x254] sm:$0xf]
    %v1776 = vld [vmem:[%s3 + $0x258] sm:$0xf]
    %v1777 = vld [vmem:[%s3 + $0x25c] sm:$0xf]
    %v1778 = vld [vmem:[%s3 + $0x260] sm:$0xf]
    %v1779 = vld [vmem:[%s3 + $0x264] sm:$0xf]
    %v1780 = vld [vmem:[%s3 + $0x268] sm:$0xf]
    %v1781 = vld [vmem:[%s3 + $0x26c] sm:$0xf]
    %v1782 = vld [vmem:[%s3 + $0x270] sm:$0xf]
    %v1783 = vld [vmem:[%s3 + $0x274] sm:$0xf]
    %v1784 = vld [vmem:[%s3 + $0x278] sm:$0xf]
    %v1785 = vld [vmem:[%s3 + $0x27c] sm:$0xf]
    %v1786 = vld [vmem:[%s3 + $0x280] sm:$0xf]
    %v1787 = vld [vmem:[%s3 + $0x284] sm:$0xf]
    %v1788 = vld [vmem:[%s3 + $0x288] sm:$0xf]
    %v1789 = vld [vmem:[%s3 + $0x28c] sm:$0xf]
    %v1790 = vld [vmem:[%s3 + $0x290] sm:$0xf]
    %v1791 = vld [vmem:[%s3 + $0x294] sm:$0xf]
    %v1792 = vld [vmem:[%s3 + $0x298] sm:$0xf]
    %v1793 = vld [vmem:[%s3 + $0x29c] sm:$0xf]
    %v1794 = vld [vmem:[%s3 + $0x2a0] sm:$0xf]
    %v1795 = vld [vmem:[%s3 + $0x2a4] sm:$0xf]
    %v1796 = vld [vmem:[%s3 + $0x2a8] sm:$0xf]
    %v1797 = vld [vmem:[%s3 + $0x2ac] sm:$0xf]
    %v1798 = vld [vmem:[%s3 + $0x2b0] sm:$0xf]
    %v1799 = vld [vmem:[%s3 + $0x2b4] sm:$0xf]
    %v1800 = vld [vmem:[%s3 + $0x2b8] sm:$0xf]
    %v1801 = vld [vmem:[%s3 + $0x2bc] sm:$0xf]
    %v1802 = vld [vmem:[%s3 + $0x2c0] sm:$0xf]
    %v1803 = vld [vmem:[%s3 + $0x2c4] sm:$0xf]
    %v1804 = vld [vmem:[%s3 + $0x2c8] sm:$0xf]
    %v1805 = vld [vmem:[%s3 + $0x2cc] sm:$0xf]
    %v1806 = vld [vmem:[%s3 + $0x2d0] sm:$0xf]
    %v1807 = vld [vmem:[%s3 + $0x2d4] sm:$0xf]
    %v1808 = vld [vmem:[%s3 + $0x2d8] sm:$0xf]
    %v1809 = vld [vmem:[%s3 + $0x2dc] sm:$0xf]
    %v1810 = vld [vmem:[%s3 + $0x2e0] sm:$0xf]
    %v1811 = vld [vmem:[%s3 + $0x2e4] sm:$0xf]
    %v1812 = vld [vmem:[%s3 + $0x2e8] sm:$0xf]
    %v1813 = vld [vmem:[%s3 + $0x2ec] sm:$0xf]
    %v1814 = vld [vmem:[%s3 + $0x2f0] sm:$0xf]
    %v1815 = vld [vmem:[%s3 + $0x2f4] sm:$0xf]
    %v1816 = vld [vmem:[%s3 + $0x2f8] sm:$0xf]
    %v1817 = vld [vmem:[%s3 + $0x2fc] sm:$0xf]
    %v1818 = vld [vmem:[%s3 + $0x300] sm:$0xf]
    %v1819 = vld [vmem:[%s3 + $0x304] sm:$0xf]
    %v1820 = vld [vmem:[%s3 + $0x308] sm:$0xf]
    %v1821 = vld [vmem:[%s3 + $0x30c] sm:$0xf]
    %v1822 = vld [vmem:[%s3 + $0x310] sm:$0xf]
    %v1823 = vld [vmem:[%s3 + $0x314] sm:$0xf]
    %v1824 = vld [vmem:[%s3 + $0x318] sm:$0xf]
    %v1825 = vld [vmem:[%s3 + $0x31c] sm:$0xf]
    %v1826 = vld [vmem:[%s3 + $0x320] sm:$0xf]
    %v1827 = vld [vmem:[%s3 + $0x324] sm:$0xf]
    %v1828 = vld [vmem:[%s3 + $0x328] sm:$0xf]
    %v1829 = vld [vmem:[%s3 + $0x32c] sm:$0xf]
    %v1830 = vld [vmem:[%s3 + $0x330] sm:$0xf]
    %v1831 = vld [vmem:[%s3 + $0x334] sm:$0xf]
    %v1832 = vld [vmem:[%s3 + $0x338] sm:$0xf]
    %v1833 = vld [vmem:[%s3 + $0x33c] sm:$0xf]
    %v1834 = vld [vmem:[%s3 + $0x340] sm:$0xf]
    %v1835 = vld [vmem:[%s3 + $0x344] sm:$0xf]
    %v1836 = vld [vmem:[%s3 + $0x348] sm:$0xf]
    %v1837 = vld [vmem:[%s3 + $0x34c] sm:$0xf]
    %v1838 = vld [vmem:[%s3 + $0x350] sm:$0xf]
    %v1839 = vld [vmem:[%s3 + $0x354] sm:$0xf]
    %v1840 = vld [vmem:[%s3 + $0x358] sm:$0xf]
    %v1841 = vld [vmem:[%s3 + $0x35c] sm:$0xf]
    %v1842 = vld [vmem:[%s3 + $0x360] sm:$0xf]
    %v1843 = vld [vmem:[%s3 + $0x364] sm:$0xf]
    %v1844 = vld [vmem:[%s3 + $0x368] sm:$0xf]
    %v1845 = vld [vmem:[%s3 + $0x36c] sm:$0xf]
    %v1846 = vld [vmem:[%s3 + $0x370] sm:$0xf]
    %v1847 = vld [vmem:[%s3 + $0x374] sm:$0xf]
    %v1848 = vld [vmem:[%s3 + $0x378] sm:$0xf]
    %v1849 = vld [vmem:[%s3 + $0x37c] sm:$0xf]
    %v1850 = vld [vmem:[%s3 + $0x380] sm:$0xf]
    %v1851 = vld [vmem:[%s3 + $0x384] sm:$0xf]
    %v1852 = vld [vmem:[%s3 + $0x388] sm:$0xf]
    %v1853 = vld [vmem:[%s3 + $0x38c] sm:$0xf]
    %v1854 = vld [vmem:[%s3 + $0x390] sm:$0xf]
    %v1855 = vld [vmem:[%s3 + $0x394] sm:$0xf]
    %v1856 = vld [vmem:[%s3 + $0x398] sm:$0xf]
    %v1857 = vld [vmem:[%s3 + $0x39c] sm:$0xf]
    %v1858 = vld [vmem:[%s3 + $0x3a0] sm:$0xf]
    %v1859 = vld [vmem:[%s3 + $0x3a4] sm:$0xf]
    %v1860 = vld [vmem:[%s3 + $0x3a8] sm:$0xf]
    %v1861 = vld [vmem:[%s3 + $0x3ac] sm:$0xf]
    %v1862 = vld [vmem:[%s3 + $0x3b0] sm:$0xf]
    %v1863 = vld [vmem:[%s3 + $0x3b4] sm:$0xf]
    %v1864 = vld [vmem:[%s3 + $0x3b8] sm:$0xf]
    %v1865 = vld [vmem:[%s3 + $0x3bc] sm:$0xf]
    %v1866 = vld [vmem:[%s3 + $0x3c0] sm:$0xf]
    %v1867 = vld [vmem:[%s3 + $0x3c4] sm:$0xf]
    %v1868 = vld [vmem:[%s3 + $0x3c8] sm:$0xf]
    %v1869 = vld [vmem:[%s3 + $0x3cc] sm:$0xf]
    %v1870 = vld [vmem:[%s3 + $0x3d0] sm:$0xf]
    %v1871 = vld [vmem:[%s3 + $0x3d4] sm:$0xf]
    %v1872 = vld [vmem:[%s3 + $0x3d8] sm:$0xf]
    %v1873 = vld [vmem:[%s3 + $0x3dc] sm:$0xf]
    %v1874 = vld [vmem:[%s3 + $0x3e0] sm:$0xf]
    %v1875 = vld [vmem:[%s3 + $0x3e4] sm:$0xf]
    %v1876 = vld [vmem:[%s3 + $0x3e8] sm:$0xf]
    %v1877 = vld [vmem:[%s3 + $0x3ec] sm:$0xf]
    %v1878 = vld [vmem:[%s3 + $0x3f0] sm:$0xf]
    %v1879 = vld [vmem:[%s3 + $0x3f4] sm:$0xf]
    %v1880 = vld [vmem:[%s3 + $0x3f8] sm:$0xf]
    %v1881 = vld [vmem:[%s3 + $0x3fc] sm:$0xf]
    %v1882 = vld [vmem:[%s3 + $0x400] sm:$0xf]
    %v1883 = vld [vmem:[%s3 + $0x404] sm:$0xf]
    %v1884 = vld [vmem:[%s3 + $0x408] sm:$0xf]
    %v1885 = vld [vmem:[%s3 + $0x40c] sm:$0xf]
    %v1886 = vld [vmem:[%s3 + $0x410] sm:$0xf]
    %v1887 = vld [vmem:[%s3 + $0x414] sm:$0xf]
    %v1888 = vld [vmem:[%s3 + $0x418] sm:$0xf]
    %v1889 = vld [vmem:[%s3 + $0x41c] sm:$0xf]
    %v1890 = vld [vmem:[%s3 + $0x420] sm:$0xf]
    %v1891 = vld [vmem:[%s3 + $0x424] sm:$0xf]
    %v1892 = vld [vmem:[%s3 + $0x428] sm:$0xf]
    %v1893 = vld [vmem:[%s3 + $0x42c] sm:$0xf]
    %v1894 = vld [vmem:[%s3 + $0x430] sm:$0xf]
    %v1895 = vld [vmem:[%s3 + $0x434] sm:$0xf]
    %v1896 = vld [vmem:[%s3 + $0x438] sm:$0xf]
    %v1897 = vld [vmem:[%s3 + $0x43c] sm:$0xf]
    %v1898 = vld [vmem:[%s3 + $0x440] sm:$0xf]
    %v1899 = vld [vmem:[%s3 + $0x444] sm:$0xf]
    %v1900 = vld [vmem:[%s3 + $0x448] sm:$0xf]
    %v1901 = vld [vmem:[%s3 + $0x44c] sm:$0xf]
    %v1902 = vld [vmem:[%s3 + $0x450] sm:$0xf]
    %v1903 = vld [vmem:[%s3 + $0x454] sm:$0xf]
    %v1904 = vld [vmem:[%s3 + $0x458] sm:$0xf]
    %v1905 = vld [vmem:[%s3 + $0x45c] sm:$0xf]
    %v1906 = vld [vmem:[%s3 + $0x460] sm:$0xf]
    %v1907 = vld [vmem:[%s3 + $0x464] sm:$0xf]
    %v1908 = vld [vmem:[%s3 + $0x468] sm:$0xf]
    %v1909 = vld [vmem:[%s3 + $0x46c] sm:$0xf]
    %v1910 = vld [vmem:[%s3 + $0x470] sm:$0xf]
    %v1911 = vld [vmem:[%s3 + $0x474] sm:$0xf]
    %v1912 = vld [vmem:[%s3 + $0x478] sm:$0xf]
    %v1913 = vld [vmem:[%s3 + $0x47c] sm:$0xf]
    %v1914 = vld [vmem:[%s3 + $0x480] sm:$0xf]
    %v1915 = vld [vmem:[%s3 + $0x484] sm:$0xf]
    %v1916 = vld [vmem:[%s3 + $0x488] sm:$0xf]
    %v1917 = vld [vmem:[%s3 + $0x48c] sm:$0xf]
    %v1918 = vld [vmem:[%s3 + $0x490] sm:$0xf]
    %v1919 = vld [vmem:[%s3 + $0x494] sm:$0xf]
    %v1920 = vld [vmem:[%s3 + $0x498] sm:$0xf]
    %v1921 = vld [vmem:[%s3 + $0x49c] sm:$0xf]
    %v1922 = vld [vmem:[%s3 + $0x4a0] sm:$0xf]
    %v1923 = vld [vmem:[%s3 + $0x4a4] sm:$0xf]
    %v1924 = vld [vmem:[%s3 + $0x4a8] sm:$0xf]
    %v1925 = vld [vmem:[%s3 + $0x4ac] sm:$0xf]
    %v1926 = vld [vmem:[%s3 + $0x4b0] sm:$0xf]
    %v1927 = vld [vmem:[%s3 + $0x4b4] sm:$0xf]
    %v1928 = vld [vmem:[%s3 + $0x4b8] sm:$0xf]
    %v1929 = vld [vmem:[%s3 + $0x4bc] sm:$0xf]
    %v1930 = vld [vmem:[%s3 + $0x4c0] sm:$0xf]
    %v1931 = vld [vmem:[%s3 + $0x4c4] sm:$0xf]
    %v1932 = vld [vmem:[%s3 + $0x4c8] sm:$0xf]
    %v1933 = vld [vmem:[%s3 + $0x4cc] sm:$0xf]
    %v1934 = vld [vmem:[%s3 + $0x4d0] sm:$0xf]
    %v1935 = vld [vmem:[%s3 + $0x4d4] sm:$0xf]
    %v1936 = vld [vmem:[%s3 + $0x4d8] sm:$0xf]
    %v1937 = vld [vmem:[%s3 + $0x4dc] sm:$0xf]
    %v1938 = vld [vmem:[%s3 + $0x4e0] sm:$0xf]
    %v1939 = vld [vmem:[%s3 + $0x4e4] sm:$0xf]
    %v1940 = vld [vmem:[%s3 + $0x4e8] sm:$0xf]
    %v1941 = vld [vmem:[%s3 + $0x4ec] sm:$0xf]
    %v1942 = vld [vmem:[%s3 + $0x4f0] sm:$0xf]
    %v1943 = vld [vmem:[%s3 + $0x4f4] sm:$0xf]
    %v1944 = vld [vmem:[%s3 + $0x4f8] sm:$0xf]
    %v1945 = vld [vmem:[%s3 + $0x4fc] sm:$0xf]
    %v1946 = vld [vmem:[%s3 + $0x500] sm:$0xf]
    %v1947 = vld [vmem:[%s3 + $0x504] sm:$0xf]
    %v1948 = vld [vmem:[%s3 + $0x508] sm:$0xf]
    %v1949 = vld [vmem:[%s3 + $0x50c] sm:$0xf]
    %v1950 = vld [vmem:[%s3 + $0x510] sm:$0xf]
    %v1951 = vld [vmem:[%s3 + $0x514] sm:$0xf]
    %v1952 = vld [vmem:[%s3 + $0x518] sm:$0xf]
    %v1953 = vld [vmem:[%s3 + $0x51c] sm:$0xf]
    %v1954 = vld [vmem:[%s3 + $0x520] sm:$0xf]
    %v1955 = vld [vmem:[%s3 + $0x524] sm:$0xf]
    %v1956 = vld [vmem:[%s3 + $0x528] sm:$0xf]
    %v1957 = vld [vmem:[%s3 + $0x52c] sm:$0xf]
    %v1958 = vld [vmem:[%s3 + $0x530] sm:$0xf]
    %v1959 = vld [vmem:[%s3 + $0x534] sm:$0xf]
    %v1960 = vld [vmem:[%s3 + $0x538] sm:$0xf]
    %v1961 = vld [vmem:[%s3 + $0x53c] sm:$0xf]
    %v1962 = vld [vmem:[%s3 + $0x540] sm:$0xf]
    %v1963 = vld [vmem:[%s3 + $0x544] sm:$0xf]
    %v1964 = vld [vmem:[%s3 + $0x548] sm:$0xf]
    %v1965 = vld [vmem:[%s3 + $0x54c] sm:$0xf]
    %v1966 = vld [vmem:[%s3 + $0x550] sm:$0xf]
    %v1967 = vld [vmem:[%s3 + $0x554] sm:$0xf]
    %v1968 = vld [vmem:[%s3 + $0x558] sm:$0xf]
    %v1969 = vld [vmem:[%s3 + $0x55c] sm:$0xf]
    %v1970 = vld [vmem:[%s3 + $0x560] sm:$0xf]
    %v1971 = vld [vmem:[%s3 + $0x564] sm:$0xf]
    %v1972 = vld [vmem:[%s3 + $0x568] sm:$0xf]
    %v1973 = vld [vmem:[%s3 + $0x56c] sm:$0xf]
    %v1974 = vld [vmem:[%s3 + $0x570] sm:$0xf]
    %v1975 = vld [vmem:[%s3 + $0x574] sm:$0xf]
    %v1976 = vld [vmem:[%s3 + $0x578] sm:$0xf]
    %v1977 = vld [vmem:[%s3 + $0x57c] sm:$0xf]
    %v1978 = vld [vmem:[%s3 + $0x580] sm:$0xf]
    %v1979 = vld [vmem:[%s3 + $0x584] sm:$0xf]
    %v1980 = vld [vmem:[%s3 + $0x588] sm:$0xf]
    %v1981 = vld [vmem:[%s3 + $0x58c] sm:$0xf]
    %v1982 = vld [vmem:[%s3 + $0x590] sm:$0xf]
    %v1983 = vld [vmem:[%s3 + $0x594] sm:$0xf]
    %v1984 = vld [vmem:[%s3 + $0x598] sm:$0xf]
    %v1985 = vld [vmem:[%s3 + $0x59c] sm:$0xf]
    %v1986 = vld [vmem:[%s3 + $0x5a0] sm:$0xf]
    %v1987 = vld [vmem:[%s3 + $0x5a4] sm:$0xf]
    %v1988 = vld [vmem:[%s3 + $0x5a8] sm:$0xf]
    %v1989 = vld [vmem:[%s3 + $0x5ac] sm:$0xf]
    %v1990 = vld [vmem:[%s3 + $0x5b0] sm:$0xf]
    %v1991 = vld [vmem:[%s3 + $0x5b4] sm:$0xf]
    %v1992 = vld [vmem:[%s3 + $0x5b8] sm:$0xf]
    %v1993 = vld [vmem:[%s3 + $0x5bc] sm:$0xf]
    %v1994 = vld [vmem:[%s3 + $0x5c0] sm:$0xf]
    %v1995 = vld [vmem:[%s3 + $0x5c4] sm:$0xf]
    %v1996 = vld [vmem:[%s3 + $0x5c8] sm:$0xf]
    %v1997 = vld [vmem:[%s3 + $0x5cc] sm:$0xf]
    %v1998 = vld [vmem:[%s3 + $0x5d0] sm:$0xf]
    %v1999 = vld [vmem:[%s3 + $0x5d4] sm:$0xf]
    %v2000 = vld [vmem:[%s3 + $0x5d8] sm:$0xf]
    %v2001 = vld [vmem:[%s3 + $0x5dc] sm:$0xf]
    %v2002 = vld [vmem:[%s3 + $0x5e0] sm:$0xf]
    %v2003 = vld [vmem:[%s3 + $0x5e4] sm:$0xf]
    %v2004 = vld [vmem:[%s3 + $0x5e8] sm:$0xf]
    %v2005 = vld [vmem:[%s3 + $0x5ec] sm:$0xf]
    %v2006 = vld [vmem:[%s3 + $0x5f0] sm:$0xf]
    %v2007 = vld [vmem:[%s3 + $0x5f4] sm:$0xf]
    %v2008 = vld [vmem:[%s3 + $0x5f8] sm:$0xf]
    %v2009 = vld [vmem:[%s3 + $0x5fc] sm:$0xf]
    %v2010 = vld [vmem:[%s3 + $0x600] sm:$0xf]
    %v2011 = vld [vmem:[%s3 + $0x604] sm:$0xf]
    %v2012 = vld [vmem:[%s3 + $0x608] sm:$0xf]
    %v2013 = vld [vmem:[%s3 + $0x60c] sm:$0xf]
    %v2014 = vld [vmem:[%s3 + $0x610] sm:$0xf]
    %v2015 = vld [vmem:[%s3 + $0x614] sm:$0xf]
    %v2016 = vld [vmem:[%s3 + $0x618] sm:$0xf]
    %v2017 = vld [vmem:[%s3 + $0x61c] sm:$0xf]
    %v2018 = vld [vmem:[%s3 + $0x620] sm:$0xf]
    %v2019 = vld [vmem:[%s3 + $0x624] sm:$0xf]
    %v2020 = vld [vmem:[%s3 + $0x628] sm:$0xf]
    %v2021 = vld [vmem:[%s3 + $0x62c] sm:$0xf]
    %v2022 = vld [vmem:[%s3 + $0x630] sm:$0xf]
    %v2023 = vld [vmem:[%s3 + $0x634] sm:$0xf]
    %v2024 = vld [vmem:[%s3 + $0x638] sm:$0xf]
    %v2025 = vld [vmem:[%s3 + $0x63c] sm:$0xf]
    %v2026 = vld [vmem:[%s3 + $0x640] sm:$0xf]
    %v2027 = vld [vmem:[%s3 + $0x644] sm:$0xf]
    %v2028 = vld [vmem:[%s3 + $0x648] sm:$0xf]
    %v2029 = vld [vmem:[%s3 + $0x64c] sm:$0xf]
    %v2030 = vld [vmem:[%s3 + $0x650] sm:$0xf]
    %v2031 = vld [vmem:[%s3 + $0x654] sm:$0xf]
    %v2032 = vld [vmem:[%s3 + $0x658] sm:$0xf]
    %v2033 = vld [vmem:[%s3 + $0x65c] sm:$0xf]
    %v2034 = vld [vmem:[%s3 + $0x660] sm:$0xf]
    %v2035 = vld [vmem:[%s3 + $0x664] sm:$0xf]
    %v2036 = vld [vmem:[%s3 + $0x668] sm:$0xf]
    %v2037 = vld [vmem:[%s3 + $0x66c] sm:$0xf]
    %v2038 = vld [vmem:[%s3 + $0x670] sm:$0xf]
    %v2039 = vld [vmem:[%s3 + $0x674] sm:$0xf]
    %v2040 = vld [vmem:[%s3 + $0x678] sm:$0xf]
    %v2041 = vld [vmem:[%s3 + $0x67c] sm:$0xf]
    %v2042 = vld [vmem:[%s3 + $0x680] sm:$0xf]
    %v2043 = vld [vmem:[%s3 + $0x684] sm:$0xf]
    %v2044 = vld [vmem:[%s3 + $0x688] sm:$0xf]
    %v2045 = vld [vmem:[%s3 + $0x68c] sm:$0xf]
    %v2046 = vld [vmem:[%s3 + $0x690] sm:$0xf]
    %v2047 = vld [vmem:[%s3 + $0x694] sm:$0xf]
    %v2048 = vld [vmem:[%s3 + $0x698] sm:$0xf]
    %v2049 = vld [vmem:[%s3 + $0x69c] sm:$0xf]
    %v2050 = vld [vmem:[%s3 + $0x6a0] sm:$0xf]
    %v2051 = vld [vmem:[%s3 + $0x6a4] sm:$0xf]
    %v2052 = vld [vmem:[%s3 + $0x6a8] sm:$0xf]
    %v2053 = vld [vmem:[%s3 + $0x6ac] sm:$0xf]
    %v2054 = vld [vmem:[%s3 + $0x6b0] sm:$0xf]
    %v2055 = vld [vmem:[%s3 + $0x6b4] sm:$0xf]
    %v2056 = vld [vmem:[%s3 + $0x6b8] sm:$0xf]
    %v2057 = vld [vmem:[%s3 + $0x6bc] sm:$0xf]
    %v2058 = vld [vmem:[%s3 + $0x6c0] sm:$0xf]
    %v2059 = vld [vmem:[%s3 + $0x6c4] sm:$0xf]
    %v2060 = vld [vmem:[%s3 + $0x6c8] sm:$0xf]
    %v2061 = vld [vmem:[%s3 + $0x6cc] sm:$0xf]
    %v2062 = vld [vmem:[%s3 + $0x6d0] sm:$0xf]
    %v2063 = vld [vmem:[%s3 + $0x6d4] sm:$0xf]
    %v2064 = vld [vmem:[%s3 + $0x6d8] sm:$0xf]
    %v2065 = vld [vmem:[%s3 + $0x6dc] sm:$0xf]
    %v2066 = vld [vmem:[%s3 + $0x6e0] sm:$0xf]
    %v2067 = vld [vmem:[%s3 + $0x6e4] sm:$0xf]
    %v2068 = vld [vmem:[%s3 + $0x6e8] sm:$0xf]
    %v2069 = vld [vmem:[%s3 + $0x6ec] sm:$0xf]
    %v2070 = vld [vmem:[%s3 + $0x6f0] sm:$0xf]
    %v2071 = vld [vmem:[%s3 + $0x6f4] sm:$0xf]
    %v2072 = vld [vmem:[%s3 + $0x6f8] sm:$0xf]
    %v2073 = vld [vmem:[%s3 + $0x6fc] sm:$0xf]
    %v2074 = vld [vmem:[%s3 + $0x700] sm:$0xf]
    %v2075 = vld [vmem:[%s3 + $0x704] sm:$0xf]
    %v2076 = vld [vmem:[%s3 + $0x708] sm:$0xf]
    %v2077 = vld [vmem:[%s3 + $0x70c] sm:$0xf]
    %v2078 = vld [vmem:[%s3 + $0x710] sm:$0xf]
    %v2079 = vld [vmem:[%s3 + $0x714] sm:$0xf]
    %v2080 = vld [vmem:[%s3 + $0x718] sm:$0xf]
    %v2081 = vld [vmem:[%s3 + $0x71c] sm:$0xf]
    %v2082 = vld [vmem:[%s3 + $0x720] sm:$0xf]
    %v2083 = vld [vmem:[%s3 + $0x724] sm:$0xf]
    %v2084 = vld [vmem:[%s3 + $0x728] sm:$0xf]
    %v2085 = vld [vmem:[%s3 + $0x72c] sm:$0xf]
    %v2086 = vld [vmem:[%s3 + $0x730] sm:$0xf]
    %v2087 = vld [vmem:[%s3 + $0x734] sm:$0xf]
    %v2088 = vld [vmem:[%s3 + $0x738] sm:$0xf]
    %v2089 = vld [vmem:[%s3 + $0x73c] sm:$0xf]
    %v2090 = vld [vmem:[%s3 + $0x740] sm:$0xf]
    %v2091 = vld [vmem:[%s3 + $0x744] sm:$0xf]
    %v2092 = vld [vmem:[%s3 + $0x748] sm:$0xf]
    %v2093 = vld [vmem:[%s3 + $0x74c] sm:$0xf]
    %v2094 = vld [vmem:[%s3 + $0x750] sm:$0xf]
    %v2095 = vld [vmem:[%s3 + $0x754] sm:$0xf]
    %v2096 = vld [vmem:[%s3 + $0x758] sm:$0xf]
    %v2097 = vld [vmem:[%s3 + $0x75c] sm:$0xf]
    %v2098 = vld [vmem:[%s3 + $0x760] sm:$0xf]
    %v2099 = vld [vmem:[%s3 + $0x764] sm:$0xf]
    %v2100 = vld [vmem:[%s3 + $0x768] sm:$0xf]
    %v2101 = vld [vmem:[%s3 + $0x76c] sm:$0xf]
    %v2102 = vld [vmem:[%s3 + $0x770] sm:$0xf]
    %v2103 = vld [vmem:[%s3 + $0x774] sm:$0xf]
    %v2104 = vld [vmem:[%s3 + $0x778] sm:$0xf]
    %v2105 = vld [vmem:[%s3 + $0x77c] sm:$0xf]
    %v2106 = vld [vmem:[%s3 + $0x780] sm:$0xf]
    %v2107 = vld [vmem:[%s3 + $0x784] sm:$0xf]
    %v2108 = vld [vmem:[%s3 + $0x788] sm:$0xf]
    %v2109 = vld [vmem:[%s3 + $0x78c] sm:$0xf]
    %v2110 = vld [vmem:[%s3 + $0x790] sm:$0xf]
    %v2111 = vld [vmem:[%s3 + $0x794] sm:$0xf]
    %v2112 = vld [vmem:[%s3 + $0x798] sm:$0xf]
    %v2113 = vld [vmem:[%s3 + $0x79c] sm:$0xf]
    %v2114 = vld [vmem:[%s3 + $0x7a0] sm:$0xf]
    %v2115 = vld [vmem:[%s3 + $0x7a4] sm:$0xf]
    %v2116 = vld [vmem:[%s3 + $0x7a8] sm:$0xf]
    %v2117 = vld [vmem:[%s3 + $0x7ac] sm:$0xf]
    %v2118 = vld [vmem:[%s3 + $0x7b0] sm:$0xf]
    %v2119 = vld [vmem:[%s3 + $0x7b4] sm:$0xf]
    %v2120 = vld [vmem:[%s3 + $0x7b8] sm:$0xf]
    %v2121 = vld [vmem:[%s3 + $0x7bc] sm:$0xf]
    %v2122 = vld [vmem:[%s3 + $0x7c0] sm:$0xf]
    %v2123 = vld [vmem:[%s3 + $0x7c4] sm:$0xf]
    %v2124 = vld [vmem:[%s3 + $0x7c8] sm:$0xf]
    %v2125 = vld [vmem:[%s3 + $0x7cc] sm:$0xf]
    %v2126 = vld [vmem:[%s3 + $0x7d0] sm:$0xf]
    %v2127 = vld [vmem:[%s3 + $0x7d4] sm:$0xf]
    %v2128 = vld [vmem:[%s3 + $0x7d8] sm:$0xf]
    %v2129 = vld [vmem:[%s3 + $0x7dc] sm:$0xf]
    %v2130 = vld [vmem:[%s3 + $0x7e0] sm:$0xf]
    %v2131 = vld [vmem:[%s3 + $0x7e4] sm:$0xf]
    %v2132 = vld [vmem:[%s3 + $0x7e8] sm:$0xf]
    %v2133 = vld [vmem:[%s3 + $0x7ec] sm:$0xf]
    %v2134 = vld [vmem:[%s3 + $0x7f0] sm:$0xf]
    %v2135 = vld [vmem:[%s3 + $0x7f4] sm:$0xf]
    %v2136 = vld [vmem:[%s3 + $0x7f8] sm:$0xf]
    %v2137 = vld [vmem:[%s3 + $0x7fc] sm:$0xf]
    %v2138 = vld [vmem:[%s4] sm:$0x1]
    %v2140 = vlaneseq
    %v2141 = vshrl.u32 %v2140, 7
    %v2142 = vsub.s32 0, %v2141
    %v2143 = vrot.slane %v2138, %v2142
    %v2657 = vunpack.c.l.b16 %v1626
    %v2658 = vunpack.c.l.b16 %v1627
    %v2659 = vunpack.c.l.b16 %v1628
    %v2660 = vunpack.c.l.b16 %v1629
    %v2661 = vunpack.c.l.b16 %v1630
    %v2662 = vunpack.c.l.b16 %v1631
    %v2663 = vunpack.c.l.b16 %v1632
    %v2664 = vunpack.c.l.b16 %v1633
    %v2665 = vunpack.c.l.b16 %v1634
    %v2666 = vunpack.c.l.b16 %v1635
    %v2667 = vunpack.c.l.b16 %v1636
    %v2668 = vunpack.c.l.b16 %v1637
    %v2669 = vunpack.c.l.b16 %v1638
    %v2670 = vunpack.c.l.b16 %v1639
    %v2671 = vunpack.c.l.b16 %v1640
    %v2672 = vunpack.c.l.b16 %v1641
    %v2673 = vunpack.c.l.b16 %v1642
    %v2674 = vunpack.c.l.b16 %v1643
    %v2675 = vunpack.c.l.b16 %v1644
    %v2676 = vunpack.c.l.b16 %v1645
    %v2677 = vunpack.c.l.b16 %v1646
    %v2678 = vunpack.c.l.b16 %v1647
    %v2679 = vunpack.c.l.b16 %v1648
    %v2680 = vunpack.c.l.b16 %v1649
    %v2681 = vunpack.c.l.b16 %v1650
    %v2682 = vunpack.c.l.b16 %v1651
    %v2683 = vunpack.c.l.b16 %v1652
    %v2684 = vunpack.c.l.b16 %v1653
    %v2685 = vunpack.c.l.b16 %v1654
    %v2686 = vunpack.c.l.b16 %v1655
    %v2687 = vunpack.c.l.b16 %v1656
    %v2688 = vunpack.c.l.b16 %v1657
    %v2689 = vunpack.c.l.b16 %v1658
    %v2690 = vunpack.c.l.b16 %v1659
    %v2691 = vunpack.c.l.b16 %v1660
    %v2692 = vunpack.c.l.b16 %v1661
    %v2693 = vunpack.c.l.b16 %v1662
    %v2694 = vunpack.c.l.b16 %v1663
    %v2695 = vunpack.c.l.b16 %v1664
    %v2696 = vunpack.c.l.b16 %v1665
    %v2697 = vunpack.c.l.b16 %v1666
    %v2698 = vunpack.c.l.b16 %v1667
    %v2699 = vunpack.c.l.b16 %v1668
    %v2700 = vunpack.c.l.b16 %v1669
    %v2701 = vunpack.c.l.b16 %v1670
    %v2702 = vunpack.c.l.b16 %v1671
    %v2703 = vunpack.c.l.b16 %v1672
    %v2704 = vunpack.c.l.b16 %v1673
    %v2705 = vunpack.c.l.b16 %v1674
    %v2706 = vunpack.c.l.b16 %v1675
    %v2707 = vunpack.c.l.b16 %v1676
    %v2708 = vunpack.c.l.b16 %v1677
    %v2709 = vunpack.c.l.b16 %v1678
    %v2710 = vunpack.c.l.b16 %v1679
    %v2711 = vunpack.c.l.b16 %v1680
    %v2712 = vunpack.c.l.b16 %v1681
    %v2713 = vunpack.c.l.b16 %v1682
    %v2714 = vunpack.c.l.b16 %v1683
    %v2715 = vunpack.c.l.b16 %v1684
    %v2716 = vunpack.c.l.b16 %v1685
    %v2717 = vunpack.c.l.b16 %v1686
    %v2718 = vunpack.c.l.b16 %v1687
    %v2719 = vunpack.c.l.b16 %v1688
    %v2720 = vunpack.c.l.b16 %v1689
    %v2721 = vunpack.c.l.b16 %v1690
    %v2722 = vunpack.c.l.b16 %v1691
    %v2723 = vunpack.c.l.b16 %v1692
    %v2724 = vunpack.c.l.b16 %v1693
    %v2725 = vunpack.c.l.b16 %v1694
    %v2726 = vunpack.c.l.b16 %v1695
    %v2727 = vunpack.c.l.b16 %v1696
    %v2728 = vunpack.c.l.b16 %v1697
    %v2729 = vunpack.c.l.b16 %v1698
    %v2730 = vunpack.c.l.b16 %v1699
    %v2731 = vunpack.c.l.b16 %v1700
    %v2732 = vunpack.c.l.b16 %v1701
    %v2733 = vunpack.c.l.b16 %v1702
    %v2734 = vunpack.c.l.b16 %v1703
    %v2735 = vunpack.c.l.b16 %v1704
    %v2736 = vunpack.c.l.b16 %v1705
    %v2737 = vunpack.c.l.b16 %v1706
    %v2738 = vunpack.c.l.b16 %v1707
    %v2739 = vunpack.c.l.b16 %v1708
    %v2740 = vunpack.c.l.b16 %v1709
    %v2741 = vunpack.c.l.b16 %v1710
    %v2742 = vunpack.c.l.b16 %v1711
    %v2743 = vunpack.c.l.b16 %v1712
    %v2744 = vunpack.c.l.b16 %v1713
    %v2745 = vunpack.c.l.b16 %v1714
    %v2746 = vunpack.c.l.b16 %v1715
    %v2747 = vunpack.c.l.b16 %v1716
    %v2748 = vunpack.c.l.b16 %v1717
    %v2749 = vunpack.c.l.b16 %v1718
    %v2750 = vunpack.c.l.b16 %v1719
    %v2751 = vunpack.c.l.b16 %v1720
    %v2752 = vunpack.c.l.b16 %v1721
    %v2753 = vunpack.c.l.b16 %v1722
    %v2754 = vunpack.c.l.b16 %v1723
    %v2755 = vunpack.c.l.b16 %v1724
    %v2756 = vunpack.c.l.b16 %v1725
    %v2757 = vunpack.c.l.b16 %v1726
    %v2758 = vunpack.c.l.b16 %v1727
    %v2759 = vunpack.c.l.b16 %v1728
    %v2760 = vunpack.c.l.b16 %v1729
    %v2761 = vunpack.c.l.b16 %v1730
    %v2762 = vunpack.c.l.b16 %v1731
    %v2763 = vunpack.c.l.b16 %v1732
    %v2764 = vunpack.c.l.b16 %v1733
    %v2765 = vunpack.c.l.b16 %v1734
    %v2766 = vunpack.c.l.b16 %v1735
    %v2767 = vunpack.c.l.b16 %v1736
    %v2768 = vunpack.c.l.b16 %v1737
    %v2769 = vunpack.c.l.b16 %v1738
    %v2770 = vunpack.c.l.b16 %v1739
    %v2771 = vunpack.c.l.b16 %v1740
    %v2772 = vunpack.c.l.b16 %v1741
    %v2773 = vunpack.c.l.b16 %v1742
    %v2774 = vunpack.c.l.b16 %v1743
    %v2775 = vunpack.c.l.b16 %v1744
    %v2776 = vunpack.c.l.b16 %v1745
    %v2777 = vunpack.c.l.b16 %v1746
    %v2778 = vunpack.c.l.b16 %v1747
    %v2779 = vunpack.c.l.b16 %v1748
    %v2780 = vunpack.c.l.b16 %v1749
    %v2781 = vunpack.c.l.b16 %v1750
    %v2782 = vunpack.c.l.b16 %v1751
    %v2783 = vunpack.c.l.b16 %v1752
    %v2784 = vunpack.c.l.b16 %v1753
    %v2785 = vunpack.c.l.b16 %v1754
    %v2786 = vunpack.c.l.b16 %v1755
    %v2787 = vunpack.c.l.b16 %v1756
    %v2788 = vunpack.c.l.b16 %v1757
    %v2789 = vunpack.c.l.b16 %v1758
    %v2790 = vunpack.c.l.b16 %v1759
    %v2791 = vunpack.c.l.b16 %v1760
    %v2792 = vunpack.c.l.b16 %v1761
    %v2793 = vunpack.c.l.b16 %v1762
    %v2794 = vunpack.c.l.b16 %v1763
    %v2795 = vunpack.c.l.b16 %v1764
    %v2796 = vunpack.c.l.b16 %v1765
    %v2797 = vunpack.c.l.b16 %v1766
    %v2798 = vunpack.c.l.b16 %v1767
    %v2799 = vunpack.c.l.b16 %v1768
    %v2800 = vunpack.c.l.b16 %v1769
    %v2801 = vunpack.c.l.b16 %v1770
    %v2802 = vunpack.c.l.b16 %v1771
    %v2803 = vunpack.c.l.b16 %v1772
    %v2804 = vunpack.c.l.b16 %v1773
    %v2805 = vunpack.c.l.b16 %v1774
    %v2806 = vunpack.c.l.b16 %v1775
    %v2807 = vunpack.c.l.b16 %v1776
    %v2808 = vunpack.c.l.b16 %v1777
    %v2809 = vunpack.c.l.b16 %v1778
    %v2810 = vunpack.c.l.b16 %v1779
    %v2811 = vunpack.c.l.b16 %v1780
    %v2812 = vunpack.c.l.b16 %v1781
    %v2813 = vunpack.c.l.b16 %v1782
    %v2814 = vunpack.c.l.b16 %v1783
    %v2815 = vunpack.c.l.b16 %v1784
    %v2816 = vunpack.c.l.b16 %v1785
    %v2817 = vunpack.c.l.b16 %v1786
    %v2818 = vunpack.c.l.b16 %v1787
    %v2819 = vunpack.c.l.b16 %v1788
    %v2820 = vunpack.c.l.b16 %v1789
    %v2821 = vunpack.c.l.b16 %v1790
    %v2822 = vunpack.c.l.b16 %v1791
    %v2823 = vunpack.c.l.b16 %v1792
    %v2824 = vunpack.c.l.b16 %v1793
    %v2825 = vunpack.c.l.b16 %v1794
    %v2826 = vunpack.c.l.b16 %v1795
    %v2827 = vunpack.c.l.b16 %v1796
    %v2828 = vunpack.c.l.b16 %v1797
    %v2829 = vunpack.c.l.b16 %v1798
    %v2830 = vunpack.c.l.b16 %v1799
    %v2831 = vunpack.c.l.b16 %v1800
    %v2832 = vunpack.c.l.b16 %v1801
    %v2833 = vunpack.c.l.b16 %v1802
    %v2834 = vunpack.c.l.b16 %v1803
    %v2835 = vunpack.c.l.b16 %v1804
    %v2836 = vunpack.c.l.b16 %v1805
    %v2837 = vunpack.c.l.b16 %v1806
    %v2838 = vunpack.c.l.b16 %v1807
    %v2839 = vunpack.c.l.b16 %v1808
    %v2840 = vunpack.c.l.b16 %v1809
    %v2841 = vunpack.c.l.b16 %v1810
    %v2842 = vunpack.c.l.b16 %v1811
    %v2843 = vunpack.c.l.b16 %v1812
    %v2844 = vunpack.c.l.b16 %v1813
    %v2845 = vunpack.c.l.b16 %v1814
    %v2846 = vunpack.c.l.b16 %v1815
    %v2847 = vunpack.c.l.b16 %v1816
    %v2848 = vunpack.c.l.b16 %v1817
    %v2849 = vunpack.c.l.b16 %v1818
    %v2850 = vunpack.c.l.b16 %v1819
    %v2851 = vunpack.c.l.b16 %v1820
    %v2852 = vunpack.c.l.b16 %v1821
    %v2853 = vunpack.c.l.b16 %v1822
    %v2854 = vunpack.c.l.b16 %v1823
    %v2855 = vunpack.c.l.b16 %v1824
    %v2856 = vunpack.c.l.b16 %v1825
    %v2857 = vunpack.c.l.b16 %v1826
    %v2858 = vunpack.c.l.b16 %v1827
    %v2859 = vunpack.c.l.b16 %v1828
    %v2860 = vunpack.c.l.b16 %v1829
    %v2861 = vunpack.c.l.b16 %v1830
    %v2862 = vunpack.c.l.b16 %v1831
    %v2863 = vunpack.c.l.b16 %v1832
    %v2864 = vunpack.c.l.b16 %v1833
    %v2865 = vunpack.c.l.b16 %v1834
    %v2866 = vunpack.c.l.b16 %v1835
    %v2867 = vunpack.c.l.b16 %v1836
    %v2868 = vunpack.c.l.b16 %v1837
    %v2869 = vunpack.c.l.b16 %v1838
    %v2870 = vunpack.c.l.b16 %v1839
    %v2871 = vunpack.c.l.b16 %v1840
    %v2872 = vunpack.c.l.b16 %v1841
    %v2873 = vunpack.c.l.b16 %v1842
    %v2874 = vunpack.c.l.b16 %v1843
    %v2875 = vunpack.c.l.b16 %v1844
    %v2876 = vunpack.c.l.b16 %v1845
    %v2877 = vunpack.c.l.b16 %v1846
    %v2878 = vunpack.c.l.b16 %v1847
    %v2879 = vunpack.c.l.b16 %v1848
    %v2880 = vunpack.c.l.b16 %v1849
    %v2881 = vunpack.c.l.b16 %v1850
    %v2882 = vunpack.c.l.b16 %v1851
    %v2883 = vunpack.c.l.b16 %v1852
    %v2884 = vunpack.c.l.b16 %v1853
    %v2885 = vunpack.c.l.b16 %v1854
    %v2886 = vunpack.c.l.b16 %v1855
    %v2887 = vunpack.c.l.b16 %v1856
    %v2888 = vunpack.c.l.b16 %v1857
    %v2889 = vunpack.c.l.b16 %v1858
    %v2890 = vunpack.c.l.b16 %v1859
    %v2891 = vunpack.c.l.b16 %v1860
    %v2892 = vunpack.c.l.b16 %v1861
    %v2893 = vunpack.c.l.b16 %v1862
    %v2894 = vunpack.c.l.b16 %v1863
    %v2895 = vunpack.c.l.b16 %v1864
    %v2896 = vunpack.c.l.b16 %v1865
    %v2897 = vunpack.c.l.b16 %v1866
    %v2898 = vunpack.c.l.b16 %v1867
    %v2899 = vunpack.c.l.b16 %v1868
    %v2900 = vunpack.c.l.b16 %v1869
    %v2901 = vunpack.c.l.b16 %v1870
    %v2902 = vunpack.c.l.b16 %v1871
    %v2903 = vunpack.c.l.b16 %v1872
    %v2904 = vunpack.c.l.b16 %v1873
    %v2905 = vunpack.c.l.b16 %v1874
    %v2906 = vunpack.c.l.b16 %v1875
    %v2907 = vunpack.c.l.b16 %v1876
    %v2908 = vunpack.c.l.b16 %v1877
    %v2909 = vunpack.c.l.b16 %v1878
    %v2910 = vunpack.c.l.b16 %v1879
    %v2911 = vunpack.c.l.b16 %v1880
    %v2912 = vunpack.c.l.b16 %v1881
    %v2913 = vunpack.c.l.b16 %v1882
    %v2914 = vunpack.c.l.b16 %v1883
    %v2915 = vunpack.c.l.b16 %v1884
    %v2916 = vunpack.c.l.b16 %v1885
    %v2917 = vunpack.c.l.b16 %v1886
    %v2918 = vunpack.c.l.b16 %v1887
    %v2919 = vunpack.c.l.b16 %v1888
    %v2920 = vunpack.c.l.b16 %v1889
    %v2921 = vunpack.c.l.b16 %v1890
    %v2922 = vunpack.c.l.b16 %v1891
    %v2923 = vunpack.c.l.b16 %v1892
    %v2924 = vunpack.c.l.b16 %v1893
    %v2925 = vunpack.c.l.b16 %v1894
    %v2926 = vunpack.c.l.b16 %v1895
    %v2927 = vunpack.c.l.b16 %v1896
    %v2928 = vunpack.c.l.b16 %v1897
    %v2929 = vunpack.c.l.b16 %v1898
    %v2930 = vunpack.c.l.b16 %v1899
    %v2931 = vunpack.c.l.b16 %v1900
    %v2932 = vunpack.c.l.b16 %v1901
    %v2933 = vunpack.c.l.b16 %v1902
    %v2934 = vunpack.c.l.b16 %v1903
    %v2935 = vunpack.c.l.b16 %v1904
    %v2936 = vunpack.c.l.b16 %v1905
    %v2937 = vunpack.c.l.b16 %v1906
    %v2938 = vunpack.c.l.b16 %v1907
    %v2939 = vunpack.c.l.b16 %v1908
    %v2940 = vunpack.c.l.b16 %v1909
    %v2941 = vunpack.c.l.b16 %v1910
    %v2942 = vunpack.c.l.b16 %v1911
    %v2943 = vunpack.c.l.b16 %v1912
    %v2944 = vunpack.c.l.b16 %v1913
    %v2945 = vunpack.c.l.b16 %v1914
    %v2946 = vunpack.c.l.b16 %v1915
    %v2947 = vunpack.c.l.b16 %v1916
    %v2948 = vunpack.c.l.b16 %v1917
    %v2949 = vunpack.c.l.b16 %v1918
    %v2950 = vunpack.c.l.b16 %v1919
    %v2951 = vunpack.c.l.b16 %v1920
    %v2952 = vunpack.c.l.b16 %v1921
    %v2953 = vunpack.c.l.b16 %v1922
    %v2954 = vunpack.c.l.b16 %v1923
    %v2955 = vunpack.c.l.b16 %v1924
    %v2956 = vunpack.c.l.b16 %v1925
    %v2957 = vunpack.c.l.b16 %v1926
    %v2958 = vunpack.c.l.b16 %v1927
    %v2959 = vunpack.c.l.b16 %v1928
    %v2960 = vunpack.c.l.b16 %v1929
    %v2961 = vunpack.c.l.b16 %v1930
    %v2962 = vunpack.c.l.b16 %v1931
    %v2963 = vunpack.c.l.b16 %v1932
    %v2964 = vunpack.c.l.b16 %v1933
    %v2965 = vunpack.c.l.b16 %v1934
    %v2966 = vunpack.c.l.b16 %v1935
    %v2967 = vunpack.c.l.b16 %v1936
    %v2968 = vunpack.c.l.b16 %v1937
    %v2969 = vunpack.c.l.b16 %v1938
    %v2970 = vunpack.c.l.b16 %v1939
    %v2971 = vunpack.c.l.b16 %v1940
    %v2972 = vunpack.c.l.b16 %v1941
    %v2973 = vunpack.c.l.b16 %v1942
    %v2974 = vunpack.c.l.b16 %v1943
    %v2975 = vunpack.c.l.b16 %v1944
    %v2976 = vunpack.c.l.b16 %v1945
    %v2977 = vunpack.c.l.b16 %v1946
    %v2978 = vunpack.c.l.b16 %v1947
    %v2979 = vunpack.c.l.b16 %v1948
    %v2980 = vunpack.c.l.b16 %v1949
    %v2981 = vunpack.c.l.b16 %v1950
    %v2982 = vunpack.c.l.b16 %v1951
    %v2983 = vunpack.c.l.b16 %v1952
    %v2984 = vunpack.c.l.b16 %v1953
    %v2985 = vunpack.c.l.b16 %v1954
    %v2986 = vunpack.c.l.b16 %v1955
    %v2987 = vunpack.c.l.b16 %v1956
    %v2988 = vunpack.c.l.b16 %v1957
    %v2989 = vunpack.c.l.b16 %v1958
    %v2990 = vunpack.c.l.b16 %v1959
    %v2991 = vunpack.c.l.b16 %v1960
    %v2992 = vunpack.c.l.b16 %v1961
    %v2993 = vunpack.c.l.b16 %v1962
    %v2994 = vunpack.c.l.b16 %v1963
    %v2995 = vunpack.c.l.b16 %v1964
    %v2996 = vunpack.c.l.b16 %v1965
    %v2997 = vunpack.c.l.b16 %v1966
    %v2998 = vunpack.c.l.b16 %v1967
    %v2999 = vunpack.c.l.b16 %v1968
    %v3000 = vunpack.c.l.b16 %v1969
    %v3001 = vunpack.c.l.b16 %v1970
    %v3002 = vunpack.c.l.b16 %v1971
    %v3003 = vunpack.c.l.b16 %v1972
    %v3004 = vunpack.c.l.b16 %v1973
    %v3005 = vunpack.c.l.b16 %v1974
    %v3006 = vunpack.c.l.b16 %v1975
    %v3007 = vunpack.c.l.b16 %v1976
    %v3008 = vunpack.c.l.b16 %v1977
    %v3009 = vunpack.c.l.b16 %v1978
    %v3010 = vunpack.c.l.b16 %v1979
    %v3011 = vunpack.c.l.b16 %v1980
    %v3012 = vunpack.c.l.b16 %v1981
    %v3013 = vunpack.c.l.b16 %v1982
    %v3014 = vunpack.c.l.b16 %v1983
    %v3015 = vunpack.c.l.b16 %v1984
    %v3016 = vunpack.c.l.b16 %v1985
    %v3017 = vunpack.c.l.b16 %v1986
    %v3018 = vunpack.c.l.b16 %v1987
    %v3019 = vunpack.c.l.b16 %v1988
    %v3020 = vunpack.c.l.b16 %v1989
    %v3021 = vunpack.c.l.b16 %v1990
    %v3022 = vunpack.c.l.b16 %v1991
    %v3023 = vunpack.c.l.b16 %v1992
    %v3024 = vunpack.c.l.b16 %v1993
    %v3025 = vunpack.c.l.b16 %v1994
    %v3026 = vunpack.c.l.b16 %v1995
    %v3027 = vunpack.c.l.b16 %v1996
    %v3028 = vunpack.c.l.b16 %v1997
    %v3029 = vunpack.c.l.b16 %v1998
    %v3030 = vunpack.c.l.b16 %v1999
    %v3031 = vunpack.c.l.b16 %v2000
    %v3032 = vunpack.c.l.b16 %v2001
    %v3033 = vunpack.c.l.b16 %v2002
    %v3034 = vunpack.c.l.b16 %v2003
    %v3035 = vunpack.c.l.b16 %v2004
    %v3036 = vunpack.c.l.b16 %v2005
    %v3037 = vunpack.c.l.b16 %v2006
    %v3038 = vunpack.c.l.b16 %v2007
    %v3039 = vunpack.c.l.b16 %v2008
    %v3040 = vunpack.c.l.b16 %v2009
    %v3041 = vunpack.c.l.b16 %v2010
    %v3042 = vunpack.c.l.b16 %v2011
    %v3043 = vunpack.c.l.b16 %v2012
    %v3044 = vunpack.c.l.b16 %v2013
    %v3045 = vunpack.c.l.b16 %v2014
    %v3046 = vunpack.c.l.b16 %v2015
    %v3047 = vunpack.c.l.b16 %v2016
    %v3048 = vunpack.c.l.b16 %v2017
    %v3049 = vunpack.c.l.b16 %v2018
    %v3050 = vunpack.c.l.b16 %v2019
    %v3051 = vunpack.c.l.b16 %v2020
    %v3052 = vunpack.c.l.b16 %v2021
    %v3053 = vunpack.c.l.b16 %v2022
    %v3054 = vunpack.c.l.b16 %v2023
    %v3055 = vunpack.c.l.b16 %v2024
    %v3056 = vunpack.c.l.b16 %v2025
    %v3057 = vunpack.c.l.b16 %v2026
    %v3058 = vunpack.c.l.b16 %v2027
    %v3059 = vunpack.c.l.b16 %v2028
    %v3060 = vunpack.c.l.b16 %v2029
    %v3061 = vunpack.c.l.b16 %v2030
    %v3062 = vunpack.c.l.b16 %v2031
    %v3063 = vunpack.c.l.b16 %v2032
    %v3064 = vunpack.c.l.b16 %v2033
    %v3065 = vunpack.c.l.b16 %v2034
    %v3066 = vunpack.c.l.b16 %v2035
    %v3067 = vunpack.c.l.b16 %v2036
    %v3068 = vunpack.c.l.b16 %v2037
    %v3069 = vunpack.c.l.b16 %v2038
    %v3070 = vunpack.c.l.b16 %v2039
    %v3071 = vunpack.c.l.b16 %v2040
    %v3072 = vunpack.c.l.b16 %v2041
    %v3073 = vunpack.c.l.b16 %v2042
    %v3074 = vunpack.c.l.b16 %v2043
    %v3075 = vunpack.c.l.b16 %v2044
    %v3076 = vunpack.c.l.b16 %v2045
    %v3077 = vunpack.c.l.b16 %v2046
    %v3078 = vunpack.c.l.b16 %v2047
    %v3079 = vunpack.c.l.b16 %v2048
    %v3080 = vunpack.c.l.b16 %v2049
    %v3081 = vunpack.c.l.b16 %v2050
    %v3082 = vunpack.c.l.b16 %v2051
    %v3083 = vunpack.c.l.b16 %v2052
    %v3084 = vunpack.c.l.b16 %v2053
    %v3085 = vunpack.c.l.b16 %v2054
    %v3086 = vunpack.c.l.b16 %v2055
    %v3087 = vunpack.c.l.b16 %v2056
    %v3088 = vunpack.c.l.b16 %v2057
    %v3089 = vunpack.c.l.b16 %v2058
    %v3090 = vunpack.c.l.b16 %v2059
    %v3091 = vunpack.c.l.b16 %v2060
    %v3092 = vunpack.c.l.b16 %v2061
    %v3093 = vunpack.c.l.b16 %v2062
    %v3094 = vunpack.c.l.b16 %v2063
    %v3095 = vunpack.c.l.b16 %v2064
    %v3096 = vunpack.c.l.b16 %v2065
    %v3097 = vunpack.c.l.b16 %v2066
    %v3098 = vunpack.c.l.b16 %v2067
    %v3099 = vunpack.c.l.b16 %v2068
    %v3100 = vunpack.c.l.b16 %v2069
    %v3101 = vunpack.c.l.b16 %v2070
    %v3102 = vunpack.c.l.b16 %v2071
    %v3103 = vunpack.c.l.b16 %v2072
    %v3104 = vunpack.c.l.b16 %v2073
    %v3105 = vunpack.c.l.b16 %v2074
    %v3106 = vunpack.c.l.b16 %v2075
    %v3107 = vunpack.c.l.b16 %v2076
    %v3108 = vunpack.c.l.b16 %v2077
    %v3109 = vunpack.c.l.b16 %v2078
    %v3110 = vunpack.c.l.b16 %v2079
    %v3111 = vunpack.c.l.b16 %v2080
    %v3112 = vunpack.c.l.b16 %v2081
    %v3113 = vunpack.c.l.b16 %v2082
    %v3114 = vunpack.c.l.b16 %v2083
    %v3115 = vunpack.c.l.b16 %v2084
    %v3116 = vunpack.c.l.b16 %v2085
    %v3117 = vunpack.c.l.b16 %v2086
    %v3118 = vunpack.c.l.b16 %v2087
    %v3119 = vunpack.c.l.b16 %v2088
    %v3120 = vunpack.c.l.b16 %v2089
    %v3121 = vunpack.c.l.b16 %v2090
    %v3122 = vunpack.c.l.b16 %v2091
    %v3123 = vunpack.c.l.b16 %v2092
    %v3124 = vunpack.c.l.b16 %v2093
    %v3125 = vunpack.c.l.b16 %v2094
    %v3126 = vunpack.c.l.b16 %v2095
    %v3127 = vunpack.c.l.b16 %v2096
    %v3128 = vunpack.c.l.b16 %v2097
    %v3129 = vunpack.c.l.b16 %v2098
    %v3130 = vunpack.c.l.b16 %v2099
    %v3131 = vunpack.c.l.b16 %v2100
    %v3132 = vunpack.c.l.b16 %v2101
    %v3133 = vunpack.c.l.b16 %v2102
    %v3134 = vunpack.c.l.b16 %v2103
    %v3135 = vunpack.c.l.b16 %v2104
    %v3136 = vunpack.c.l.b16 %v2105
    %v3137 = vunpack.c.l.b16 %v2106
    %v3138 = vunpack.c.l.b16 %v2107
    %v3139 = vunpack.c.l.b16 %v2108
    %v3140 = vunpack.c.l.b16 %v2109
    %v3141 = vunpack.c.l.b16 %v2110
    %v3142 = vunpack.c.l.b16 %v2111
    %v3143 = vunpack.c.l.b16 %v2112
    %v3144 = vunpack.c.l.b16 %v2113
    %v3145 = vunpack.c.l.b16 %v2114
    %v3146 = vunpack.c.l.b16 %v2115
    %v3147 = vunpack.c.l.b16 %v2116
    %v3148 = vunpack.c.l.b16 %v2117
    %v3149 = vunpack.c.l.b16 %v2118
    %v3150 = vunpack.c.l.b16 %v2119
    %v3151 = vunpack.c.l.b16 %v2120
    %v3152 = vunpack.c.l.b16 %v2121
    %v3153 = vunpack.c.l.b16 %v2122
    %v3154 = vunpack.c.l.b16 %v2123
    %v3155 = vunpack.c.l.b16 %v2124
    %v3156 = vunpack.c.l.b16 %v2125
    %v3157 = vunpack.c.l.b16 %v2126
    %v3158 = vunpack.c.l.b16 %v2127
    %v3159 = vunpack.c.l.b16 %v2128
    %v3160 = vunpack.c.l.b16 %v2129
    %v3161 = vunpack.c.l.b16 %v2130
    %v3162 = vunpack.c.l.b16 %v2131
    %v3163 = vunpack.c.l.b16 %v2132
    %v3164 = vunpack.c.l.b16 %v2133
    %v3165 = vunpack.c.l.b16 %v2134
    %v3166 = vunpack.c.l.b16 %v2135
    %v3167 = vunpack.c.l.b16 %v2136
    %v3168 = vunpack.c.l.b16 %v2137
    %v3169 = vpack.c.b16 %v2658, %v2657
    %v3170 = vpack.c.b16 %v2660, %v2659
    %v3171 = vpack.c.b16 %v2662, %v2661
    %v3172 = vpack.c.b16 %v2664, %v2663
    %v3173 = vpack.c.b16 %v2666, %v2665
    %v3174 = vpack.c.b16 %v2668, %v2667
    %v3175 = vpack.c.b16 %v2670, %v2669
    %v3176 = vpack.c.b16 %v2672, %v2671
    %v3177 = vpack.c.b16 %v2674, %v2673
    %v3178 = vpack.c.b16 %v2676, %v2675
    %v3179 = vpack.c.b16 %v2678, %v2677
    %v3180 = vpack.c.b16 %v2680, %v2679
    %v3181 = vpack.c.b16 %v2682, %v2681
    %v3182 = vpack.c.b16 %v2684, %v2683
    %v3183 = vpack.c.b16 %v2686, %v2685
    %v3184 = vpack.c.b16 %v2688, %v2687
    %v3185 = vpack.c.b16 %v2690, %v2689
    %v3186 = vpack.c.b16 %v2692, %v2691
    %v3187 = vpack.c.b16 %v2694, %v2693
    %v3188 = vpack.c.b16 %v2696, %v2695
    %v3189 = vpack.c.b16 %v2698, %v2697
    %v3190 = vpack.c.b16 %v2700, %v2699
    %v3191 = vpack.c.b16 %v2702, %v2701
    %v3192 = vpack.c.b16 %v2704, %v2703
    %v3193 = vpack.c.b16 %v2706, %v2705
    %v3194 = vpack.c.b16 %v2708, %v2707
    %v3195 = vpack.c.b16 %v2710, %v2709
    %v3196 = vpack.c.b16 %v2712, %v2711
    %v3197 = vpack.c.b16 %v2714, %v2713
    %v3198 = vpack.c.b16 %v2716, %v2715
    %v3199 = vpack.c.b16 %v2718, %v2717
    %v3200 = vpack.c.b16 %v2720, %v2719
    %v3201 = vpack.c.b16 %v2722, %v2721
    %v3202 = vpack.c.b16 %v2724, %v2723
    %v3203 = vpack.c.b16 %v2726, %v2725
    %v3204 = vpack.c.b16 %v2728, %v2727
    %v3205 = vpack.c.b16 %v2730, %v2729
    %v3206 = vpack.c.b16 %v2732, %v2731
    %v3207 = vpack.c.b16 %v2734, %v2733
    %v3208 = vpack.c.b16 %v2736, %v2735
    %v3209 = vpack.c.b16 %v2738, %v2737
    %v3210 = vpack.c.b16 %v2740, %v2739
    %v3211 = vpack.c.b16 %v2742, %v2741
    %v3212 = vpack.c.b16 %v2744, %v2743
    %v3213 = vpack.c.b16 %v2746, %v2745
    %v3214 = vpack.c.b16 %v2748, %v2747
    %v3215 = vpack.c.b16 %v2750, %v2749
    %v3216 = vpack.c.b16 %v2752, %v2751
    %v3217 = vpack.c.b16 %v2754, %v2753
    %v3218 = vpack.c.b16 %v2756, %v2755
    %v3219 = vpack.c.b16 %v2758, %v2757
    %v3220 = vpack.c.b16 %v2760, %v2759
    %v3221 = vpack.c.b16 %v2762, %v2761
    %v3222 = vpack.c.b16 %v2764, %v2763
    %v3223 = vpack.c.b16 %v2766, %v2765
    %v3224 = vpack.c.b16 %v2768, %v2767
    %v3225 = vpack.c.b16 %v2770, %v2769
    %v3226 = vpack.c.b16 %v2772, %v2771
    %v3227 = vpack.c.b16 %v2774, %v2773
    %v3228 = vpack.c.b16 %v2776, %v2775
    %v3229 = vpack.c.b16 %v2778, %v2777
    %v3230 = vpack.c.b16 %v2780, %v2779
    %v3231 = vpack.c.b16 %v2782, %v2781
    %v3232 = vpack.c.b16 %v2784, %v2783
    %v3233 = vpack.c.b16 %v2786, %v2785
    %v3234 = vpack.c.b16 %v2788, %v2787
    %v3235 = vpack.c.b16 %v2790, %v2789
    %v3236 = vpack.c.b16 %v2792, %v2791
    %v3237 = vpack.c.b16 %v2794, %v2793
    %v3238 = vpack.c.b16 %v2796, %v2795
    %v3239 = vpack.c.b16 %v2798, %v2797
    %v3240 = vpack.c.b16 %v2800, %v2799
    %v3241 = vpack.c.b16 %v2802, %v2801
    %v3242 = vpack.c.b16 %v2804, %v2803
    %v3243 = vpack.c.b16 %v2806, %v2805
    %v3244 = vpack.c.b16 %v2808, %v2807
    %v3245 = vpack.c.b16 %v2810, %v2809
    %v3246 = vpack.c.b16 %v2812, %v2811
    %v3247 = vpack.c.b16 %v2814, %v2813
    %v3248 = vpack.c.b16 %v2816, %v2815
    %v3249 = vpack.c.b16 %v2818, %v2817
    %v3250 = vpack.c.b16 %v2820, %v2819
    %v3251 = vpack.c.b16 %v2822, %v2821
    %v3252 = vpack.c.b16 %v2824, %v2823
    %v3253 = vpack.c.b16 %v2826, %v2825
    %v3254 = vpack.c.b16 %v2828, %v2827
    %v3255 = vpack.c.b16 %v2830, %v2829
    %v3256 = vpack.c.b16 %v2832, %v2831
    %v3257 = vpack.c.b16 %v2834, %v2833
    %v3258 = vpack.c.b16 %v2836, %v2835
    %v3259 = vpack.c.b16 %v2838, %v2837
    %v3260 = vpack.c.b16 %v2840, %v2839
    %v3261 = vpack.c.b16 %v2842, %v2841
    %v3262 = vpack.c.b16 %v2844, %v2843
    %v3263 = vpack.c.b16 %v2846, %v2845
    %v3264 = vpack.c.b16 %v2848, %v2847
    %v3265 = vpack.c.b16 %v2850, %v2849
    %v3266 = vpack.c.b16 %v2852, %v2851
    %v3267 = vpack.c.b16 %v2854, %v2853
    %v3268 = vpack.c.b16 %v2856, %v2855
    %v3269 = vpack.c.b16 %v2858, %v2857
    %v3270 = vpack.c.b16 %v2860, %v2859
    %v3271 = vpack.c.b16 %v2862, %v2861
    %v3272 = vpack.c.b16 %v2864, %v2863
    %v3273 = vpack.c.b16 %v2866, %v2865
    %v3274 = vpack.c.b16 %v2868, %v2867
    %v3275 = vpack.c.b16 %v2870, %v2869
    %v3276 = vpack.c.b16 %v2872, %v2871
    %v3277 = vpack.c.b16 %v2874, %v2873
    %v3278 = vpack.c.b16 %v2876, %v2875
    %v3279 = vpack.c.b16 %v2878, %v2877
    %v3280 = vpack.c.b16 %v2880, %v2879
    %v3281 = vpack.c.b16 %v2882, %v2881
    %v3282 = vpack.c.b16 %v2884, %v2883
    %v3283 = vpack.c.b16 %v2886, %v2885
    %v3284 = vpack.c.b16 %v2888, %v2887
    %v3285 = vpack.c.b16 %v2890, %v2889
    %v3286 = vpack.c.b16 %v2892, %v2891
    %v3287 = vpack.c.b16 %v2894, %v2893
    %v3288 = vpack.c.b16 %v2896, %v2895
    %v3289 = vpack.c.b16 %v2898, %v2897
    %v3290 = vpack.c.b16 %v2900, %v2899
    %v3291 = vpack.c.b16 %v2902, %v2901
    %v3292 = vpack.c.b16 %v2904, %v2903
    %v3293 = vpack.c.b16 %v2906, %v2905
    %v3294 = vpack.c.b16 %v2908, %v2907
    %v3295 = vpack.c.b16 %v2910, %v2909
    %v3296 = vpack.c.b16 %v2912, %v2911
    %v3297 = vpack.c.b16 %v2914, %v2913
    %v3298 = vpack.c.b16 %v2916, %v2915
    %v3299 = vpack.c.b16 %v2918, %v2917
    %v3300 = vpack.c.b16 %v2920, %v2919
    %v3301 = vpack.c.b16 %v2922, %v2921
    %v3302 = vpack.c.b16 %v2924, %v2923
    %v3303 = vpack.c.b16 %v2926, %v2925
    %v3304 = vpack.c.b16 %v2928, %v2927
    %v3305 = vpack.c.b16 %v2930, %v2929
    %v3306 = vpack.c.b16 %v2932, %v2931
    %v3307 = vpack.c.b16 %v2934, %v2933
    %v3308 = vpack.c.b16 %v2936, %v2935
    %v3309 = vpack.c.b16 %v2938, %v2937
    %v3310 = vpack.c.b16 %v2940, %v2939
    %v3311 = vpack.c.b16 %v2942, %v2941
    %v3312 = vpack.c.b16 %v2944, %v2943
    %v3313 = vpack.c.b16 %v2946, %v2945
    %v3314 = vpack.c.b16 %v2948, %v2947
    %v3315 = vpack.c.b16 %v2950, %v2949
    %v3316 = vpack.c.b16 %v2952, %v2951
    %v3317 = vpack.c.b16 %v2954, %v2953
    %v3318 = vpack.c.b16 %v2956, %v2955
    %v3319 = vpack.c.b16 %v2958, %v2957
    %v3320 = vpack.c.b16 %v2960, %v2959
    %v3321 = vpack.c.b16 %v2962, %v2961
    %v3322 = vpack.c.b16 %v2964, %v2963
    %v3323 = vpack.c.b16 %v2966, %v2965
    %v3324 = vpack.c.b16 %v2968, %v2967
    %v3325 = vpack.c.b16 %v2970, %v2969
    %v3326 = vpack.c.b16 %v2972, %v2971
    %v3327 = vpack.c.b16 %v2974, %v2973
    %v3328 = vpack.c.b16 %v2976, %v2975
    %v3329 = vpack.c.b16 %v2978, %v2977
    %v3330 = vpack.c.b16 %v2980, %v2979
    %v3331 = vpack.c.b16 %v2982, %v2981
    %v3332 = vpack.c.b16 %v2984, %v2983
    %v3333 = vpack.c.b16 %v2986, %v2985
    %v3334 = vpack.c.b16 %v2988, %v2987
    %v3335 = vpack.c.b16 %v2990, %v2989
    %v3336 = vpack.c.b16 %v2992, %v2991
    %v3337 = vpack.c.b16 %v2994, %v2993
    %v3338 = vpack.c.b16 %v2996, %v2995
    %v3339 = vpack.c.b16 %v2998, %v2997
    %v3340 = vpack.c.b16 %v3000, %v2999
    %v3341 = vpack.c.b16 %v3002, %v3001
    %v3342 = vpack.c.b16 %v3004, %v3003
    %v3343 = vpack.c.b16 %v3006, %v3005
    %v3344 = vpack.c.b16 %v3008, %v3007
    %v3345 = vpack.c.b16 %v3010, %v3009
    %v3346 = vpack.c.b16 %v3012, %v3011
    %v3347 = vpack.c.b16 %v3014, %v3013
    %v3348 = vpack.c.b16 %v3016, %v3015
    %v3349 = vpack.c.b16 %v3018, %v3017
    %v3350 = vpack.c.b16 %v3020, %v3019
    %v3351 = vpack.c.b16 %v3022, %v3021
    %v3352 = vpack.c.b16 %v3024, %v3023
    %v3353 = vpack.c.b16 %v3026, %v3025
    %v3354 = vpack.c.b16 %v3028, %v3027
    %v3355 = vpack.c.b16 %v3030, %v3029
    %v3356 = vpack.c.b16 %v3032, %v3031
    %v3357 = vpack.c.b16 %v3034, %v3033
    %v3358 = vpack.c.b16 %v3036, %v3035
    %v3359 = vpack.c.b16 %v3038, %v3037
    %v3360 = vpack.c.b16 %v3040, %v3039
    %v3361 = vpack.c.b16 %v3042, %v3041
    %v3362 = vpack.c.b16 %v3044, %v3043
    %v3363 = vpack.c.b16 %v3046, %v3045
    %v3364 = vpack.c.b16 %v3048, %v3047
    %v3365 = vpack.c.b16 %v3050, %v3049
    %v3366 = vpack.c.b16 %v3052, %v3051
    %v3367 = vpack.c.b16 %v3054, %v3053
    %v3368 = vpack.c.b16 %v3056, %v3055
    %v3369 = vpack.c.b16 %v3058, %v3057
    %v3370 = vpack.c.b16 %v3060, %v3059
    %v3371 = vpack.c.b16 %v3062, %v3061
    %v3372 = vpack.c.b16 %v3064, %v3063
    %v3373 = vpack.c.b16 %v3066, %v3065
    %v3374 = vpack.c.b16 %v3068, %v3067
    %v3375 = vpack.c.b16 %v3070, %v3069
    %v3376 = vpack.c.b16 %v3072, %v3071
    %v3377 = vpack.c.b16 %v3074, %v3073
    %v3378 = vpack.c.b16 %v3076, %v3075
    %v3379 = vpack.c.b16 %v3078, %v3077
    %v3380 = vpack.c.b16 %v3080, %v3079
    %v3381 = vpack.c.b16 %v3082, %v3081
    %v3382 = vpack.c.b16 %v3084, %v3083
    %v3383 = vpack.c.b16 %v3086, %v3085
    %v3384 = vpack.c.b16 %v3088, %v3087
    %v3385 = vpack.c.b16 %v3090, %v3089
    %v3386 = vpack.c.b16 %v3092, %v3091
    %v3387 = vpack.c.b16 %v3094, %v3093
    %v3388 = vpack.c.b16 %v3096, %v3095
    %v3389 = vpack.c.b16 %v3098, %v3097
    %v3390 = vpack.c.b16 %v3100, %v3099
    %v3391 = vpack.c.b16 %v3102, %v3101
    %v3392 = vpack.c.b16 %v3104, %v3103
    %v3393 = vpack.c.b16 %v3106, %v3105
    %v3394 = vpack.c.b16 %v3108, %v3107
    %v3395 = vpack.c.b16 %v3110, %v3109
    %v3396 = vpack.c.b16 %v3112, %v3111
    %v3397 = vpack.c.b16 %v3114, %v3113
    %v3398 = vpack.c.b16 %v3116, %v3115
    %v3399 = vpack.c.b16 %v3118, %v3117
    %v3400 = vpack.c.b16 %v3120, %v3119
    %v3401 = vpack.c.b16 %v3122, %v3121
    %v3402 = vpack.c.b16 %v3124, %v3123
    %v3403 = vpack.c.b16 %v3126, %v3125
    %v3404 = vpack.c.b16 %v3128, %v3127
    %v3405 = vpack.c.b16 %v3130, %v3129
    %v3406 = vpack.c.b16 %v3132, %v3131
    %v3407 = vpack.c.b16 %v3134, %v3133
    %v3408 = vpack.c.b16 %v3136, %v3135
    %v3409 = vpack.c.b16 %v3138, %v3137
    %v3410 = vpack.c.b16 %v3140, %v3139
    %v3411 = vpack.c.b16 %v3142, %v3141
    %v3412 = vpack.c.b16 %v3144, %v3143
    %v3413 = vpack.c.b16 %v3146, %v3145
    %v3414 = vpack.c.b16 %v3148, %v3147
    %v3415 = vpack.c.b16 %v3150, %v3149
    %v3416 = vpack.c.b16 %v3152, %v3151
    %v3417 = vpack.c.b16 %v3154, %v3153
    %v3418 = vpack.c.b16 %v3156, %v3155
    %v3419 = vpack.c.b16 %v3158, %v3157
    %v3420 = vpack.c.b16 %v3160, %v3159
    %v3421 = vpack.c.b16 %v3162, %v3161
    %v3422 = vpack.c.b16 %v3164, %v3163
    %v3423 = vpack.c.b16 %v3166, %v3165
    %v3424 = vpack.c.b16 %v3168, %v3167
    %3681 = vmatprep.subr.bf16.mxu0 0
    %3682 = vmatpush1.bf16.msra.mxu0 %v3169
    %3683 = vmatprep.subr.bf16.mxu0 0
    %3684 = vmatpush1.bf16.msra.mxu0 %v3170
    %3685 = vmatprep.subr.bf16.mxu0 0
    %3686 = vmatpush1.bf16.msra.mxu0 %v3171
    %3687 = vmatprep.subr.bf16.mxu0 0
    %3688 = vmatpush1.bf16.msra.mxu0 %v3172
    %3689 = vmatprep.subr.bf16.mxu0 0
    %3690 = vmatpush1.bf16.msra.mxu0 %v3173
    %3691 = vmatprep.subr.bf16.mxu0 0
    %3692 = vmatpush1.bf16.msra.mxu0 %v3174
    %3693 = vmatprep.subr.bf16.mxu0 0
    %3694 = vmatpush1.bf16.msra.mxu0 %v3175
    %3695 = vmatprep.subr.bf16.mxu0 0
    %3696 = vmatpush1.bf16.msra.mxu0 %v3176
    %3697 = vmatprep.subr.bf16.mxu0 0
    %3698 = vmatpush1.bf16.msra.mxu0 %v3177
    %3699 = vmatprep.subr.bf16.mxu0 0
    %3700 = vmatpush1.bf16.msra.mxu0 %v3178
    %3701 = vmatprep.subr.bf16.mxu0 0
    %3702 = vmatpush1.bf16.msra.mxu0 %v3179
    %3703 = vmatprep.subr.bf16.mxu0 0
    %3704 = vmatpush1.bf16.msra.mxu0 %v3180
    %3705 = vmatprep.subr.bf16.mxu0 0
    %3706 = vmatpush1.bf16.msra.mxu0 %v3181
    %3707 = vmatprep.subr.bf16.mxu0 0
    %3708 = vmatpush1.bf16.msra.mxu0 %v3182
    %3709 = vmatprep.subr.bf16.mxu0 0
    %3710 = vmatpush1.bf16.msra.mxu0 %v3183
    %3711 = vmatprep.subr.bf16.mxu0 0
    %3712 = vmatpush1.bf16.msra.mxu0 %v3184
    %3713 = vmatprep.mubr.bf16.mxu0 %v1595
    %3714 = vmatmul.mubr.bf16.gmra.mrb[0].mxu0 %v1594
    %v3715 = vpop.f32.mrb[0].mxu0
    %v3716 = vadd.f32 %v2143, %v3715
    %v3717 = vpop.f32.mrb[0].mxu0
    %v3718 = vpop.f32.mrb[0].mxu0
    %v3719 = vadd.f32 %v2143, %v3718
    %v3720 = vpop.f32.mrb[0].mxu0
    %3721 = vdwg.mxu0
    %3722 = vmatprep.subr.bf16.mxu0 0
    %3723 = vmatpush1.bf16.msra.mxu0 %v3185
    %3724 = vmatprep.subr.bf16.mxu0 0
    %3725 = vmatpush1.bf16.msra.mxu0 %v3186
    %3726 = vmatprep.subr.bf16.mxu0 0
    %3727 = vmatpush1.bf16.msra.mxu0 %v3187
    %3728 = vmatprep.subr.bf16.mxu0 0
    %3729 = vmatpush1.bf16.msra.mxu0 %v3188
    %3730 = vmatprep.subr.bf16.mxu0 0
    %3731 = vmatpush1.bf16.msra.mxu0 %v3189
    %3732 = vmatprep.subr.bf16.mxu0 0
    %3733 = vmatpush1.bf16.msra.mxu0 %v3190
    %3734 = vmatprep.subr.bf16.mxu0 0
    %3735 = vmatpush1.bf16.msra.mxu0 %v3191
    %3736 = vmatprep.subr.bf16.mxu0 0
    %3737 = vmatpush1.bf16.msra.mxu0 %v3192
    %3738 = vmatprep.subr.bf16.mxu0 0
    %3739 = vmatpush1.bf16.msra.mxu0 %v3193
    %3740 = vmatprep.subr.bf16.mxu0 0
    %3741 = vmatpush1.bf16.msra.mxu0 %v3194
    %3742 = vmatprep.subr.bf16.mxu0 0
    %3743 = vmatpush1.bf16.msra.mxu0 %v3195
    %3744 = vmatprep.subr.bf16.mxu0 0
    %3745 = vmatpush1.bf16.msra.mxu0 %v3196
    %3746 = vmatprep.subr.bf16.mxu0 0
    %3747 = vmatpush1.bf16.msra.mxu0 %v3197
    %3748 = vmatprep.subr.bf16.mxu0 0
    %3749 = vmatpush1.bf16.msra.mxu0 %v3198
    %3750 = vmatprep.subr.bf16.mxu0 0
    %3751 = vmatpush1.bf16.msra.mxu0 %v3199
    %3752 = vmatprep.subr.bf16.mxu0 0
    %3753 = vmatpush1.bf16.msra.mxu0 %v3200
    %3754 = vmatprep.mubr.bf16.mxu0 %v1597
    %3755 = vmatmul.mubr.bf16.gmra.mrb[0].mxu0 %v1596
    %v3756 = vpop.f32.mrb[0].mxu0
    %v3757 = vadd.f32 %v3716, %v3756
    %v3758 = vpop.f32.mrb[0].mxu0
    %v3759 = vpop.f32.mrb[0].mxu0
    %v3760 = vadd.f32 %v3719, %v3759
    %v3761 = vpop.f32.mrb[0].mxu0
    %3762 = vdwg.mxu0
    %3763 = vmatprep.subr.bf16.mxu0 0
    %3764 = vmatpush1.bf16.msra.mxu0 %v3201
    %3765 = vmatprep.subr.bf16.mxu0 0
    %3766 = vmatpush1.bf16.msra.mxu0 %v3202
    %3767 = vmatprep.subr.bf16.mxu0 0
    %3768 = vmatpush1.bf16.msra.mxu0 %v3203
    %3769 = vmatprep.subr.bf16.mxu0 0
    %3770 = vmatpush1.bf16.msra.mxu0 %v3204
    %3771 = vmatprep.subr.bf16.mxu0 0
    %3772 = vmatpush1.bf16.msra.mxu0 %v3205
    %3773 = vmatprep.subr.bf16.mxu0 0
    %3774 = vmatpush1.bf16.msra.mxu0 %v3206
    %3775 = vmatprep.subr.bf16.mxu0 0
    %3776 = vmatpush1.bf16.msra.mxu0 %v3207
    %3777 = vmatprep.subr.bf16.mxu0 0
    %3778 = vmatpush1.bf16.msra.mxu0 %v3208
    %3779 = vmatprep.subr.bf16.mxu0 0
    %3780 = vmatpush1.bf16.msra.mxu0 %v3209
    %3781 = vmatprep.subr.bf16.mxu0 0
    %3782 = vmatpush1.bf16.msra.mxu0 %v3210
    %3783 = vmatprep.subr.bf16.mxu0 0
    %3784 = vmatpush1.bf16.msra.mxu0 %v3211
    %3785 = vmatprep.subr.bf16.mxu0 0
    %3786 = vmatpush1.bf16.msra.mxu0 %v3212
    %3787 = vmatprep.subr.bf16.mxu0 0
    %3788 = vmatpush1.bf16.msra.mxu0 %v3213
    %3789 = vmatprep.subr.bf16.mxu0 0
    %3790 = vmatpush1.bf16.msra.mxu0 %v3214
    %3791 = vmatprep.subr.bf16.mxu0 0
    %3792 = vmatpush1.bf16.msra.mxu0 %v3215
    %3793 = vmatprep.subr.bf16.mxu0 0
    %3794 = vmatpush1.bf16.msra.mxu0 %v3216
    %3795 = vmatprep.mubr.bf16.mxu0 %v1599
    %3796 = vmatmul.mubr.bf16.gmra.mrb[0].mxu0 %v1598
    %v3797 = vpop.f32.mrb[0].mxu0
    %v3798 = vadd.f32 %v3757, %v3797
    %v3799 = vpop.f32.mrb[0].mxu0
    %v3800 = vpop.f32.mrb[0].mxu0
    %v3801 = vadd.f32 %v3760, %v3800
    %v3802 = vpop.f32.mrb[0].mxu0
    %3803 = vdwg.mxu0
    %3804 = vmatprep.subr.bf16.mxu0 0
    %3805 = vmatpush1.bf16.msra.mxu0 %v3217
    %3806 = vmatprep.subr.bf16.mxu0 0
    %3807 = vmatpush1.bf16.msra.mxu0 %v3218
    %3808 = vmatprep.subr.bf16.mxu0 0
    %3809 = vmatpush1.bf16.msra.mxu0 %v3219
    %3810 = vmatprep.subr.bf16.mxu0 0
    %3811 = vmatpush1.bf16.msra.mxu0 %v3220
    %3812 = vmatprep.subr.bf16.mxu0 0
    %3813 = vmatpush1.bf16.msra.mxu0 %v3221
    %3814 = vmatprep.subr.bf16.mxu0 0
    %3815 = vmatpush1.bf16.msra.mxu0 %v3222
    %3816 = vmatprep.subr.bf16.mxu0 0
    %3817 = vmatpush1.bf16.msra.mxu0 %v3223
    %3818 = vmatprep.subr.bf16.mxu0 0
    %3819 = vmatpush1.bf16.msra.mxu0 %v3224
    %3820 = vmatprep.subr.bf16.mxu0 0
    %3821 = vmatpush1.bf16.msra.mxu0 %v3225
    %3822 = vmatprep.subr.bf16.mxu0 0
    %3823 = vmatpush1.bf16.msra.mxu0 %v3226
    %3824 = vmatprep.subr.bf16.mxu0 0
    %3825 = vmatpush1.bf16.msra.mxu0 %v3227
    %3826 = vmatprep.subr.bf16.mxu0 0
    %3827 = vmatpush1.bf16.msra.mxu0 %v3228
    %3828 = vmatprep.subr.bf16.mxu0 0
    %3829 = vmatpush1.bf16.msra.mxu0 %v3229
    %3830 = vmatprep.subr.bf16.mxu0 0
    %3831 = vmatpush1.bf16.msra.mxu0 %v3230
    %3832 = vmatprep.subr.bf16.mxu0 0
    %3833 = vmatpush1.bf16.msra.mxu0 %v3231
    %3834 = vmatprep.subr.bf16.mxu0 0
    %3835 = vmatpush1.bf16.msra.mxu0 %v3232
    %3836 = vmatprep.mubr.bf16.mxu0 %v1601
    %3837 = vmatmul.mubr.bf16.gmra.mrb[0].mxu0 %v1600
    %v3838 = vpop.f32.mrb[0].mxu0
    %v3839 = vadd.f32 %v3798, %v3838
    %v3840 = vpop.f32.mrb[0].mxu0
    %v3841 = vpop.f32.mrb[0].mxu0
    %v3842 = vadd.f32 %v3801, %v3841
    %v3843 = vpop.f32.mrb[0].mxu0
    %3844 = vdwg.mxu0
    %3845 = vmatprep.subr.bf16.mxu0 0
    %3846 = vmatpush1.bf16.msra.mxu0 %v3233
    %3847 = vmatprep.subr.bf16.mxu0 0
    %3848 = vmatpush1.bf16.msra.mxu0 %v3234
    %3849 = vmatprep.subr.bf16.mxu0 0
    %3850 = vmatpush1.bf16.msra.mxu0 %v3235
    %3851 = vmatprep.subr.bf16.mxu0 0
    %3852 = vmatpush1.bf16.msra.mxu0 %v3236
    %3853 = vmatprep.subr.bf16.mxu0 0
    %3854 = vmatpush1.bf16.msra.mxu0 %v3237
    %3855 = vmatprep.subr.bf16.mxu0 0
    %3856 = vmatpush1.bf16.msra.mxu0 %v3238
    %3857 = vmatprep.subr.bf16.mxu0 0
    %3858 = vmatpush1.bf16.msra.mxu0 %v3239
    %3859 = vmatprep.subr.bf16.mxu0 0
    %3860 = vmatpush1.bf16.msra.mxu0 %v3240
    %3861 = vmatprep.subr.bf16.mxu0 0
    %3862 = vmatpush1.bf16.msra.mxu0 %v3241
    %3863 = vmatprep.subr.bf16.mxu0 0
    %3864 = vmatpush1.bf16.msra.mxu0 %v3242
    %3865 = vmatprep.subr.bf16.mxu0 0
    %3866 = vmatpush1.bf16.msra.mxu0 %v3243
    %3867 = vmatprep.subr.bf16.mxu0 0
    %3868 = vmatpush1.bf16.msra.mxu0 %v3244
    %3869 = vmatprep.subr.bf16.mxu0 0
    %3870 = vmatpush1.bf16.msra.mxu0 %v3245
    %3871 = vmatprep.subr.bf16.mxu0 0
    %3872 = vmatpush1.bf16.msra.mxu0 %v3246
    %3873 = vmatprep.subr.bf16.mxu0 0
    %3874 = vmatpush1.bf16.msra.mxu0 %v3247
    %3875 = vmatprep.subr.bf16.mxu0 0
    %3876 = vmatpush1.bf16.msra.mxu0 %v3248
    %3877 = vmatprep.mubr.bf16.mxu0 %v1603
    %3878 = vmatmul.mubr.bf16.gmra.mrb[0].mxu0 %v1602
    %v3879 = vpop.f32.mrb[0].mxu0
    %v3880 = vadd.f32 %v3839, %v3879
    %v3881 = vpop.f32.mrb[0].mxu0
    %v3882 = vpop.f32.mrb[0].mxu0
    %v3883 = vadd.f32 %v3842, %v3882
    %v3884 = vpop.f32.mrb[0].mxu0
    %3885 = vdwg.mxu0
    %3886 = vmatprep.subr.bf16.mxu0 0
    %3887 = vmatpush1.bf16.msra.mxu0 %v3249
    %3888 = vmatprep.subr.bf16.mxu0 0
    %3889 = vmatpush1.bf16.msra.mxu0 %v3250
    %3890 = vmatprep.subr.bf16.mxu0 0
    %3891 = vmatpush1.bf16.msra.mxu0 %v3251
    %3892 = vmatprep.subr.bf16.mxu0 0
    %3893 = vmatpush1.bf16.msra.mxu0 %v3252
    %3894 = vmatprep.subr.bf16.mxu0 0
    %3895 = vmatpush1.bf16.msra.mxu0 %v3253
    %3896 = vmatprep.subr.bf16.mxu0 0
    %3897 = vmatpush1.bf16.msra.mxu0 %v3254
    %3898 = vmatprep.subr.bf16.mxu0 0
    %3899 = vmatpush1.bf16.msra.mxu0 %v3255
    %3900 = vmatprep.subr.bf16.mxu0 0
    %3901 = vmatpush1.bf16.msra.mxu0 %v3256
    %3902 = vmatprep.subr.bf16.mxu0 0
    %3903 = vmatpush1.bf16.msra.mxu0 %v3257
    %3904 = vmatprep.subr.bf16.mxu0 0
    %3905 = vmatpush1.bf16.msra.mxu0 %v3258
    %3906 = vmatprep.subr.bf16.mxu0 0
    %3907 = vmatpush1.bf16.msra.mxu0 %v3259
    %3908 = vmatprep.subr.bf16.mxu0 0
    %3909 = vmatpush1.bf16.msra.mxu0 %v3260
    %3910 = vmatprep.subr.bf16.mxu0 0
    %3911 = vmatpush1.bf16.msra.mxu0 %v3261
    %3912 = vmatprep.subr.bf16.mxu0 0
    %3913 = vmatpush1.bf16.msra.mxu0 %v3262
    %3914 = vmatprep.subr.bf16.mxu0 0
    %3915 = vmatpush1.bf16.msra.mxu0 %v3263
    %3916 = vmatprep.subr.bf16.mxu0 0
    %3917 = vmatpush1.bf16.msra.mxu0 %v3264
    %3918 = vmatprep.mubr.bf16.mxu0 %v1605
    %3919 = vmatmul.mubr.bf16.gmra.mrb[0].mxu0 %v1604
    %v3920 = vpop.f32.mrb[0].mxu0
    %v3921 = vadd.f32 %v3880, %v3920
    %v3922 = vpop.f32.mrb[0].mxu0
    %v3923 = vpop.f32.mrb[0].mxu0
    %v3924 = vadd.f32 %v3883, %v3923
    %v3925 = vpop.f32.mrb[0].mxu0
    %3926 = vdwg.mxu0
    %3927 = vmatprep.subr.bf16.mxu0 0
    %3928 = vmatpush1.bf16.msra.mxu0 %v3265
    %3929 = vmatprep.subr.bf16.mxu0 0
    %3930 = vmatpush1.bf16.msra.mxu0 %v3266
    %3931 = vmatprep.subr.bf16.mxu0 0
    %3932 = vmatpush1.bf16.msra.mxu0 %v3267
    %3933 = vmatprep.subr.bf16.mxu0 0
    %3934 = vmatpush1.bf16.msra.mxu0 %v3268
    %3935 = vmatprep.subr.bf16.mxu0 0
    %3936 = vmatpush1.bf16.msra.mxu0 %v3269
    %3937 = vmatprep.subr.bf16.mxu0 0
    %3938 = vmatpush1.bf16.msra.mxu0 %v3270
    %3939 = vmatprep.subr.bf16.mxu0 0
    %3940 = vmatpush1.bf16.msra.mxu0 %v3271
    %3941 = vmatprep.subr.bf16.mxu0 0
    %3942 = vmatpush1.bf16.msra.mxu0 %v3272
    %3943 = vmatprep.subr.bf16.mxu0 0
    %3944 = vmatpush1.bf16.msra.mxu0 %v3273
    %3945 = vmatprep.subr.bf16.mxu0 0
    %3946 = vmatpush1.bf16.msra.mxu0 %v3274
    %3947 = vmatprep.subr.bf16.mxu0 0
    %3948 = vmatpush1.bf16.msra.mxu0 %v3275
    %3949 = vmatprep.subr.bf16.mxu0 0
    %3950 = vmatpush1.bf16.msra.mxu0 %v3276
    %3951 = vmatprep.subr.bf16.mxu0 0
    %3952 = vmatpush1.bf16.msra.mxu0 %v3277
    %3953 = vmatprep.subr.bf16.mxu0 0
    %3954 = vmatpush1.bf16.msra.mxu0 %v3278
    %3955 = vmatprep.subr.bf16.mxu0 0
    %3956 = vmatpush1.bf16.msra.mxu0 %v3279
    %3957 = vmatprep.subr.bf16.mxu0 0
    %3958 = vmatpush1.bf16.msra.mxu0 %v3280
    %3959 = vmatprep.mubr.bf16.mxu0 %v1607
    %3960 = vmatmul.mubr.bf16.gmra.mrb[0].mxu0 %v1606
    %v3961 = vpop.f32.mrb[0].mxu0
    %v3962 = vadd.f32 %v3921, %v3961
    %v3963 = vpop.f32.mrb[0].mxu0
    %v3964 = vpop.f32.mrb[0].mxu0
    %v3965 = vadd.f32 %v3924, %v3964
    %v3966 = vpop.f32.mrb[0].mxu0
    %3967 = vdwg.mxu0
    %3968 = vmatprep.subr.bf16.mxu0 0
    %3969 = vmatpush1.bf16.msra.mxu0 %v3281
    %3970 = vmatprep.subr.bf16.mxu0 0
    %3971 = vmatpush1.bf16.msra.mxu0 %v3282
    %3972 = vmatprep.subr.bf16.mxu0 0
    %3973 = vmatpush1.bf16.msra.mxu0 %v3283
    %3974 = vmatprep.subr.bf16.mxu0 0
    %3975 = vmatpush1.bf16.msra.mxu0 %v3284
    %3976 = vmatprep.subr.bf16.mxu0 0
    %3977 = vmatpush1.bf16.msra.mxu0 %v3285
    %3978 = vmatprep.subr.bf16.mxu0 0
    %3979 = vmatpush1.bf16.msra.mxu0 %v3286
    %3980 = vmatprep.subr.bf16.mxu0 0
    %3981 = vmatpush1.bf16.msra.mxu0 %v3287
    %3982 = vmatprep.subr.bf16.mxu0 0
    %3983 = vmatpush1.bf16.msra.mxu0 %v3288
    %3984 = vmatprep.subr.bf16.mxu0 0
    %3985 = vmatpush1.bf16.msra.mxu0 %v3289
    %3986 = vmatprep.subr.bf16.mxu0 0
    %3987 = vmatpush1.bf16.msra.mxu0 %v3290
    %3988 = vmatprep.subr.bf16.mxu0 0
    %3989 = vmatpush1.bf16.msra.mxu0 %v3291
    %3990 = vmatprep.subr.bf16.mxu0 0
    %3991 = vmatpush1.bf16.msra.mxu0 %v3292
    %3992 = vmatprep.subr.bf16.mxu0 0
    %3993 = vmatpush1.bf16.msra.mxu0 %v3293
    %3994 = vmatprep.subr.bf16.mxu0 0
    %3995 = vmatpush1.bf16.msra.mxu0 %v3294
    %3996 = vmatprep.subr.bf16.mxu0 0
    %3997 = vmatpush1.bf16.msra.mxu0 %v3295
    %3998 = vmatprep.subr.bf16.mxu0 0
    %3999 = vmatpush1.bf16.msra.mxu0 %v3296
    %4000 = vmatprep.mubr.bf16.mxu0 %v1609
    %4001 = vmatmul.mubr.bf16.gmra.mrb[0].mxu0 %v1608
    %v4002 = vpop.f32.mrb[0].mxu0
    %v4003 = vadd.f32 %v3962, %v4002
    %v4004 = vpop.f32.mrb[0].mxu0
    %v4005 = vpop.f32.mrb[0].mxu0
    %v4006 = vadd.f32 %v3965, %v4005
    %v4007 = vpop.f32.mrb[0].mxu0
    %4008 = vdwg.mxu0
    %4009 = vmatprep.subr.bf16.mxu0 0
    %4010 = vmatpush1.bf16.msra.mxu0 %v3297
    %4011 = vmatprep.subr.bf16.mxu0 0
    %4012 = vmatpush1.bf16.msra.mxu0 %v3298
    %4013 = vmatprep.subr.bf16.mxu0 0
    %4014 = vmatpush1.bf16.msra.mxu0 %v3299
    %4015 = vmatprep.subr.bf16.mxu0 0
    %4016 = vmatpush1.bf16.msra.mxu0 %v3300
    %4017 = vmatprep.subr.bf16.mxu0 0
    %4018 = vmatpush1.bf16.msra.mxu0 %v3301
    %4019 = vmatprep.subr.bf16.mxu0 0
    %4020 = vmatpush1.bf16.msra.mxu0 %v3302
    %4021 = vmatprep.subr.bf16.mxu0 0
    %4022 = vmatpush1.bf16.msra.mxu0 %v3303
    %4023 = vmatprep.subr.bf16.mxu0 0
    %4024 = vmatpush1.bf16.msra.mxu0 %v3304
    %4025 = vmatprep.subr.bf16.mxu0 0
    %4026 = vmatpush1.bf16.msra.mxu0 %v3305
    %4027 = vmatprep.subr.bf16.mxu0 0
    %4028 = vmatpush1.bf16.msra.mxu0 %v3306
    %4029 = vmatprep.subr.bf16.mxu0 0
    %4030 = vmatpush1.bf16.msra.mxu0 %v3307
    %4031 = vmatprep.subr.bf16.mxu0 0
    %4032 = vmatpush1.bf16.msra.mxu0 %v3308
    %4033 = vmatprep.subr.bf16.mxu0 0
    %4034 = vmatpush1.bf16.msra.mxu0 %v3309
    %4035 = vmatprep.subr.bf16.mxu0 0
    %4036 = vmatpush1.bf16.msra.mxu0 %v3310
    %4037 = vmatprep.subr.bf16.mxu0 0
    %4038 = vmatpush1.bf16.msra.mxu0 %v3311
    %4039 = vmatprep.subr.bf16.mxu0 0
    %4040 = vmatpush1.bf16.msra.mxu0 %v3312
    %4041 = vmatprep.mubr.bf16.mxu0 %v1611
    %4042 = vmatmul.mubr.bf16.gmra.mrb[0].mxu0 %v1610
    %v4043 = vpop.f32.mrb[0].mxu0
    %v4044 = vadd.f32 %v4003, %v4043
    %v4045 = vpop.f32.mrb[0].mxu0
    %v4046 = vpop.f32.mrb[0].mxu0
    %v4047 = vadd.f32 %v4006, %v4046
    %v4048 = vpop.f32.mrb[0].mxu0
    %4049 = vdwg.mxu0
    %4050 = vmatprep.subr.bf16.mxu0 0
    %4051 = vmatpush1.bf16.msra.mxu0 %v3313
    %4052 = vmatprep.subr.bf16.mxu0 0
    %4053 = vmatpush1.bf16.msra.mxu0 %v3314
    %4054 = vmatprep.subr.bf16.mxu0 0
    %4055 = vmatpush1.bf16.msra.mxu0 %v3315
    %4056 = vmatprep.subr.bf16.mxu0 0
    %4057 = vmatpush1.bf16.msra.mxu0 %v3316
    %4058 = vmatprep.subr.bf16.mxu0 0
    %4059 = vmatpush1.bf16.msra.mxu0 %v3317
    %4060 = vmatprep.subr.bf16.mxu0 0
    %4061 = vmatpush1.bf16.msra.mxu0 %v3318
    %4062 = vmatprep.subr.bf16.mxu0 0
    %4063 = vmatpush1.bf16.msra.mxu0 %v3319
    %4064 = vmatprep.subr.bf16.mxu0 0
    %4065 = vmatpush1.bf16.msra.mxu0 %v3320
    %4066 = vmatprep.subr.bf16.mxu0 0
    %4067 = vmatpush1.bf16.msra.mxu0 %v3321
    %4068 = vmatprep.subr.bf16.mxu0 0
    %4069 = vmatpush1.bf16.msra.mxu0 %v3322
    %4070 = vmatprep.subr.bf16.mxu0 0
    %4071 = vmatpush1.bf16.msra.mxu0 %v3323
    %4072 = vmatprep.subr.bf16.mxu0 0
    %4073 = vmatpush1.bf16.msra.mxu0 %v3324
    %4074 = vmatprep.subr.bf16.mxu0 0
    %4075 = vmatpush1.bf16.msra.mxu0 %v3325
    %4076 = vmatprep.subr.bf16.mxu0 0
    %4077 = vmatpush1.bf16.msra.mxu0 %v3326
    %4078 = vmatprep.subr.bf16.mxu0 0
    %4079 = vmatpush1.bf16.msra.mxu0 %v3327
    %4080 = vmatprep.subr.bf16.mxu0 0
    %4081 = vmatpush1.bf16.msra.mxu0 %v3328
    %4082 = vmatprep.mubr.bf16.mxu0 %v1613
    %4083 = vmatmul.mubr.bf16.gmra.mrb[0].mxu0 %v1612
    %v4084 = vpop.f32.mrb[0].mxu0
    %v4085 = vadd.f32 %v4044, %v4084
    %v4086 = vpop.f32.mrb[0].mxu0
    %v4087 = vpop.f32.mrb[0].mxu0
    %v4088 = vadd.f32 %v4047, %v4087
    %v4089 = vpop.f32.mrb[0].mxu0
    %4090 = vdwg.mxu0
    %4091 = vmatprep.subr.bf16.mxu0 0
    %4092 = vmatpush1.bf16.msra.mxu0 %v3329
    %4093 = vmatprep.subr.bf16.mxu0 0
    %4094 = vmatpush1.bf16.msra.mxu0 %v3330
    %4095 = vmatprep.subr.bf16.mxu0 0
    %4096 = vmatpush1.bf16.msra.mxu0 %v3331
    %4097 = vmatprep.subr.bf16.mxu0 0
    %4098 = vmatpush1.bf16.msra.mxu0 %v3332
    %4099 = vmatprep.subr.bf16.mxu0 0
    %4100 = vmatpush1.bf16.msra.mxu0 %v3333
    %4101 = vmatprep.subr.bf16.mxu0 0
    %4102 = vmatpush1.bf16.msra.mxu0 %v3334
    %4103 = vmatprep.subr.bf16.mxu0 0
    %4104 = vmatpush1.bf16.msra.mxu0 %v3335
    %4105 = vmatprep.subr.bf16.mxu0 0
    %4106 = vmatpush1.bf16.msra.mxu0 %v3336
    %4107 = vmatprep.subr.bf16.mxu0 0
    %4108 = vmatpush1.bf16.msra.mxu0 %v3337
    %4109 = vmatprep.subr.bf16.mxu0 0
    %4110 = vmatpush1.bf16.msra.mxu0 %v3338
    %4111 = vmatprep.subr.bf16.mxu0 0
    %4112 = vmatpush1.bf16.msra.mxu0 %v3339
    %4113 = vmatprep.subr.bf16.mxu0 0
    %4114 = vmatpush1.bf16.msra.mxu0 %v3340
    %4115 = vmatprep.subr.bf16.mxu0 0
    %4116 = vmatpush1.bf16.msra.mxu0 %v3341
    %4117 = vmatprep.subr.bf16.mxu0 0
    %4118 = vmatpush1.bf16.msra.mxu0 %v3342
    %4119 = vmatprep.subr.bf16.mxu0 0
    %4120 = vmatpush1.bf16.msra.mxu0 %v3343
    %4121 = vmatprep.subr.bf16.mxu0 0
    %4122 = vmatpush1.bf16.msra.mxu0 %v3344
    %4123 = vmatprep.mubr.bf16.mxu0 %v1615
    %4124 = vmatmul.mubr.bf16.gmra.mrb[0].mxu0 %v1614
    %v4125 = vpop.f32.mrb[0].mxu0
    %v4126 = vadd.f32 %v4085, %v4125
    %v4127 = vpop.f32.mrb[0].mxu0
    %v4128 = vpop.f32.mrb[0].mxu0
    %v4129 = vadd.f32 %v4088, %v4128
    %v4130 = vpop.f32.mrb[0].mxu0
    %4131 = vdwg.mxu0
    %4132 = vmatprep.subr.bf16.mxu0 0
    %4133 = vmatpush1.bf16.msra.mxu0 %v3345
    %4134 = vmatprep.subr.bf16.mxu0 0
    %4135 = vmatpush1.bf16.msra.mxu0 %v3346
    %4136 = vmatprep.subr.bf16.mxu0 0
    %4137 = vmatpush1.bf16.msra.mxu0 %v3347
    %4138 = vmatprep.subr.bf16.mxu0 0
    %4139 = vmatpush1.bf16.msra.mxu0 %v3348
    %4140 = vmatprep.subr.bf16.mxu0 0
    %4141 = vmatpush1.bf16.msra.mxu0 %v3349
    %4142 = vmatprep.subr.bf16.mxu0 0
    %4143 = vmatpush1.bf16.msra.mxu0 %v3350
    %4144 = vmatprep.subr.bf16.mxu0 0
    %4145 = vmatpush1.bf16.msra.mxu0 %v3351
    %4146 = vmatprep.subr.bf16.mxu0 0
    %4147 = vmatpush1.bf16.msra.mxu0 %v3352
    %4148 = vmatprep.subr.bf16.mxu0 0
    %4149 = vmatpush1.bf16.msra.mxu0 %v3353
    %4150 = vmatprep.subr.bf16.mxu0 0
    %4151 = vmatpush1.bf16.msra.mxu0 %v3354
    %4152 = vmatprep.subr.bf16.mxu0 0
    %4153 = vmatpush1.bf16.msra.mxu0 %v3355
    %4154 = vmatprep.subr.bf16.mxu0 0
    %4155 = vmatpush1.bf16.msra.mxu0 %v3356
    %4156 = vmatprep.subr.bf16.mxu0 0
    %4157 = vmatpush1.bf16.msra.mxu0 %v3357
    %4158 = vmatprep.subr.bf16.mxu0 0
    %4159 = vmatpush1.bf16.msra.mxu0 %v3358
    %4160 = vmatprep.subr.bf16.mxu0 0
    %4161 = vmatpush1.bf16.msra.mxu0 %v3359
    %4162 = vmatprep.subr.bf16.mxu0 0
    %4163 = vmatpush1.bf16.msra.mxu0 %v3360
    %4164 = vmatprep.mubr.bf16.mxu0 %v1617
    %4165 = vmatmul.mubr.bf16.gmra.mrb[0].mxu0 %v1616
    %v4166 = vpop.f32.mrb[0].mxu0
    %v4167 = vadd.f32 %v4126, %v4166
    %v4168 = vpop.f32.mrb[0].mxu0
    %v4169 = vpop.f32.mrb[0].mxu0
    %v4170 = vadd.f32 %v4129, %v4169
    %v4171 = vpop.f32.mrb[0].mxu0
    %4172 = vdwg.mxu0
    %4173 = vmatprep.subr.bf16.mxu0 0
    %4174 = vmatpush1.bf16.msra.mxu0 %v3361
    %4175 = vmatprep.subr.bf16.mxu0 0
    %4176 = vmatpush1.bf16.msra.mxu0 %v3362
    %4177 = vmatprep.subr.bf16.mxu0 0
    %4178 = vmatpush1.bf16.msra.mxu0 %v3363
    %4179 = vmatprep.subr.bf16.mxu0 0
    %4180 = vmatpush1.bf16.msra.mxu0 %v3364
    %4181 = vmatprep.subr.bf16.mxu0 0
    %4182 = vmatpush1.bf16.msra.mxu0 %v3365
    %4183 = vmatprep.subr.bf16.mxu0 0
    %4184 = vmatpush1.bf16.msra.mxu0 %v3366
    %4185 = vmatprep.subr.bf16.mxu0 0
    %4186 = vmatpush1.bf16.msra.mxu0 %v3367
    %4187 = vmatprep.subr.bf16.mxu0 0
    %4188 = vmatpush1.bf16.msra.mxu0 %v3368
    %4189 = vmatprep.subr.bf16.mxu0 0
    %4190 = vmatpush1.bf16.msra.mxu0 %v3369
    %4191 = vmatprep.subr.bf16.mxu0 0
    %4192 = vmatpush1.bf16.msra.mxu0 %v3370
    %4193 = vmatprep.subr.bf16.mxu0 0
    %4194 = vmatpush1.bf16.msra.mxu0 %v3371
    %4195 = vmatprep.subr.bf16.mxu0 0
    %4196 = vmatpush1.bf16.msra.mxu0 %v3372
    %4197 = vmatprep.subr.bf16.mxu0 0
    %4198 = vmatpush1.bf16.msra.mxu0 %v3373
    %4199 = vmatprep.subr.bf16.mxu0 0
    %4200 = vmatpush1.bf16.msra.mxu0 %v3374
    %4201 = vmatprep.subr.bf16.mxu0 0
    %4202 = vmatpush1.bf16.msra.mxu0 %v3375
    %4203 = vmatprep.subr.bf16.mxu0 0
    %4204 = vmatpush1.bf16.msra.mxu0 %v3376
    %4205 = vmatprep.mubr.bf16.mxu0 %v1619
    %4206 = vmatmul.mubr.bf16.gmra.mrb[0].mxu0 %v1618
    %v4207 = vpop.f32.mrb[0].mxu0
    %v4208 = vadd.f32 %v4167, %v4207
    %v4209 = vpop.f32.mrb[0].mxu0
    %v4210 = vpop.f32.mrb[0].mxu0
    %v4211 = vadd.f32 %v4170, %v4210
    %v4212 = vpop.f32.mrb[0].mxu0
    %4213 = vdwg.mxu0
    %4214 = vmatprep.subr.bf16.mxu0 0
    %4215 = vmatpush1.bf16.msra.mxu0 %v3377
    %4216 = vmatprep.subr.bf16.mxu0 0
    %4217 = vmatpush1.bf16.msra.mxu0 %v3378
    %4218 = vmatprep.subr.bf16.mxu0 0
    %4219 = vmatpush1.bf16.msra.mxu0 %v3379
    %4220 = vmatprep.subr.bf16.mxu0 0
    %4221 = vmatpush1.bf16.msra.mxu0 %v3380
    %4222 = vmatprep.subr.bf16.mxu0 0
    %4223 = vmatpush1.bf16.msra.mxu0 %v3381
    %4224 = vmatprep.subr.bf16.mxu0 0
    %4225 = vmatpush1.bf16.msra.mxu0 %v3382
    %4226 = vmatprep.subr.bf16.mxu0 0
    %4227 = vmatpush1.bf16.msra.mxu0 %v3383
    %4228 = vmatprep.subr.bf16.mxu0 0
    %4229 = vmatpush1.bf16.msra.mxu0 %v3384
    %4230 = vmatprep.subr.bf16.mxu0 0
    %4231 = vmatpush1.bf16.msra.mxu0 %v3385
    %4232 = vmatprep.subr.bf16.mxu0 0
    %4233 = vmatpush1.bf16.msra.mxu0 %v3386
    %4234 = vmatprep.subr.bf16.mxu0 0
    %4235 = vmatpush1.bf16.msra.mxu0 %v3387
    %4236 = vmatprep.subr.bf16.mxu0 0
    %4237 = vmatpush1.bf16.msra.mxu0 %v3388
    %4238 = vmatprep.subr.bf16.mxu0 0
    %4239 = vmatpush1.bf16.msra.mxu0 %v3389
    %4240 = vmatprep.subr.bf16.mxu0 0
    %4241 = vmatpush1.bf16.msra.mxu0 %v3390
    %4242 = vmatprep.subr.bf16.mxu0 0
    %4243 = vmatpush1.bf16.msra.mxu0 %v3391
    %4244 = vmatprep.subr.bf16.mxu0 0
    %4245 = vmatpush1.bf16.msra.mxu0 %v3392
    %4246 = vmatprep.mubr.bf16.mxu0 %v1621
    %4247 = vmatmul.mubr.bf16.gmra.mrb[0].mxu0 %v1620
    %v4248 = vpop.f32.mrb[0].mxu0
    %v4249 = vadd.f32 %v4208, %v4248
    %v4250 = vpop.f32.mrb[0].mxu0
    %v4251 = vpop.f32.mrb[0].mxu0
    %v4252 = vadd.f32 %v4211, %v4251
    %v4253 = vpop.f32.mrb[0].mxu0
    %4254 = vdwg.mxu0
    %4255 = vmatprep.subr.bf16.mxu0 0
    %4256 = vmatpush1.bf16.msra.mxu0 %v3393
    %4257 = vmatprep.subr.bf16.mxu0 0
    %4258 = vmatpush1.bf16.msra.mxu0 %v3394
    %4259 = vmatprep.subr.bf16.mxu0 0
    %4260 = vmatpush1.bf16.msra.mxu0 %v3395
    %4261 = vmatprep.subr.bf16.mxu0 0
    %4262 = vmatpush1.bf16.msra.mxu0 %v3396
    %4263 = vmatprep.subr.bf16.mxu0 0
    %4264 = vmatpush1.bf16.msra.mxu0 %v3397
    %4265 = vmatprep.subr.bf16.mxu0 0
    %4266 = vmatpush1.bf16.msra.mxu0 %v3398
    %4267 = vmatprep.subr.bf16.mxu0 0
    %4268 = vmatpush1.bf16.msra.mxu0 %v3399
    %4269 = vmatprep.subr.bf16.mxu0 0
    %4270 = vmatpush1.bf16.msra.mxu0 %v3400
    %4271 = vmatprep.subr.bf16.mxu0 0
    %4272 = vmatpush1.bf16.msra.mxu0 %v3401
    %4273 = vmatprep.subr.bf16.mxu0 0
    %4274 = vmatpush1.bf16.msra.mxu0 %v3402
    %4275 = vmatprep.subr.bf16.mxu0 0
    %4276 = vmatpush1.bf16.msra.mxu0 %v3403
    %4277 = vmatprep.subr.bf16.mxu0 0
    %4278 = vmatpush1.bf16.msra.mxu0 %v3404
    %4279 = vmatprep.subr.bf16.mxu0 0
    %4280 = vmatpush1.bf16.msra.mxu0 %v3405
    %4281 = vmatprep.subr.bf16.mxu0 0
    %4282 = vmatpush1.bf16.msra.mxu0 %v3406
    %4283 = vmatprep.subr.bf16.mxu0 0
    %4284 = vmatpush1.bf16.msra.mxu0 %v3407
    %4285 = vmatprep.subr.bf16.mxu0 0
    %4286 = vmatpush1.bf16.msra.mxu0 %v3408
    %4287 = vmatprep.mubr.bf16.mxu0 %v1623
    %4288 = vmatmul.mubr.bf16.gmra.mrb[0].mxu0 %v1622
    %v4289 = vpop.f32.mrb[0].mxu0
    %v4290 = vadd.f32 %v4249, %v4289
    %v4291 = vpop.f32.mrb[0].mxu0
    %v4292 = vpop.f32.mrb[0].mxu0
    %v4293 = vadd.f32 %v4252, %v4292
    %v4294 = vpop.f32.mrb[0].mxu0
    %4295 = vdwg.mxu0
    %4296 = vmatprep.subr.bf16.mxu0 0
    %4297 = vmatpush1.bf16.msra.mxu0 %v3409
    %4298 = vmatprep.subr.bf16.mxu0 0
    %4299 = vmatpush1.bf16.msra.mxu0 %v3410
    %4300 = vmatprep.subr.bf16.mxu0 0
    %4301 = vmatpush1.bf16.msra.mxu0 %v3411
    %4302 = vmatprep.subr.bf16.mxu0 0
    %4303 = vmatpush1.bf16.msra.mxu0 %v3412
    %4304 = vmatprep.subr.bf16.mxu0 0
    %4305 = vmatpush1.bf16.msra.mxu0 %v3413
    %4306 = vmatprep.subr.bf16.mxu0 0
    %4307 = vmatpush1.bf16.msra.mxu0 %v3414
    %4308 = vmatprep.subr.bf16.mxu0 0
    %4309 = vmatpush1.bf16.msra.mxu0 %v3415
    %4310 = vmatprep.subr.bf16.mxu0 0
    %4311 = vmatpush1.bf16.msra.mxu0 %v3416
    %4312 = vmatprep.subr.bf16.mxu0 0
    %4313 = vmatpush1.bf16.msra.mxu0 %v3417
    %4314 = vmatprep.subr.bf16.mxu0 0
    %4315 = vmatpush1.bf16.msra.mxu0 %v3418
    %4316 = vmatprep.subr.bf16.mxu0 0
    %4317 = vmatpush1.bf16.msra.mxu0 %v3419
    %4318 = vmatprep.subr.bf16.mxu0 0
    %4319 = vmatpush1.bf16.msra.mxu0 %v3420
    %4320 = vmatprep.subr.bf16.mxu0 0
    %4321 = vmatpush1.bf16.msra.mxu0 %v3421
    %4322 = vmatprep.subr.bf16.mxu0 0
    %4323 = vmatpush1.bf16.msra.mxu0 %v3422
    %4324 = vmatprep.subr.bf16.mxu0 0
    %4325 = vmatpush1.bf16.msra.mxu0 %v3423
    %4326 = vmatprep.subr.bf16.mxu0 0
    %4327 = vmatpush1.bf16.msra.mxu0 %v3424
    %4328 = vmatprep.mubr.bf16.mxu0 %v1625
    %4329 = vmatmul.mubr.bf16.gmra.mrb[0].mxu0 %v1624
    %v4330 = vpop.f32.mrb[0].mxu0
    %v4331 = vadd.f32 %v4290, %v4330
    %v4332 = vpop.f32.mrb[0].mxu0
    %v4333 = vpop.f32.mrb[0].mxu0
    %v4334 = vadd.f32 %v4293, %v4333
    %v4335 = vpop.f32.mrb[0].mxu0
    %4336 = vdwg.mxu0
    %v4337 = vmax.f32 %v4331, 0.0
    %v4338 = vmax.f32 %v4334, 0.0
    %v4339 = vpack.c.bf16 %v4338, %v4337
    %v4341 = vunpack.c.l.b16 %v4339
    %v4342 = vunpack.c.h.b16 %v4339
    %v4343 = vpack.c.b16 %v4341, %v4341
    %v4344 = vpack.c.b16 %v4342, %v4342
    %vm4347 = vcmask 257024
    %4348 = vst.msk [vmem:[#allocation2] sm:$0xf] %vm4347, %v4343
    %4349 = vst.msk [vmem:[#allocation2 + $0x4] sm:$0xf] %vm4347, %v4344
    // Predicated region
    $region22: #{tpu_custom_call.1} parent=1 // pred_check
      _
    $region23: #{tpu_custom_call.1} parent=1 // pred_check_branch
      %4351 = sbr.rel (0) target = $region25
    $region24: #{tpu_custom_call.1} parent=1 // pred_region
      %s4353 = ssub.s32 128, 128
      %4354 = vsyncadd [#allocation3], %s4353
      %s4355 = sshll.u32 [#allocation2], 4
      %s4356 = int_to_ptr.vmem [resolvable:$true] %s4355
      %4361 = dma.vmem_to_hbm [thread:$0]  %s4356, 128, %s5, [#allocation3], 64, 64, 4
    $region25: #{tpu_custom_call.1} parent=1 // pred_fallthru
      _
    // Predicated region
    $region26: #{tpu_custom_call.1} parent=1 // pred_check
      _
    $region27: #{tpu_custom_call.1} parent=1 // pred_check_branch
      %4363 = sbr.rel (0) target = $region29
    $region28: #{tpu_custom_call.1} parent=1 // pred_region
      %4364 = dma.done [#allocation3], 128
    $region29: #{tpu_custom_call.1} parent=1 // pred_fallthru
      _
    %4365 = vsyncpa [#allocation3], 1

</llo_original>
